<compile_context>
chip_gen: v6e
topology: v6e:2x2x1
jax: 0.10.0
libtpu: 0.0.40
codegen_flags: <defaults>
</compile_context>

<pallas_src>
import numpy as np
import jax
import jax.numpy as jnp
from jax.experimental import pallas as pl
from jax.experimental.pallas import tpu as pltpu


def _num_grid_groups(n):
    """2 grid steps on dual-TensorCore chips (v7x/v4/v5p) when the batch splits
    evenly; otherwise 1 (v5e/v6e are single-core: one fully lane-folded step)."""
    try:
        kind = jax.devices()[0].device_kind.lower()
    except Exception:
        kind = ""
    dual = any(s in kind for s in ("v7", "v4", "v5p"))
    return 2 if (dual and n >= 2 and n % 2 == 0) else 1


def attention_residual_stack(x_nchw, params):
    """Forward pass of AttentionResidualStack (use_attn=False).  NCHW in/out."""
    N, C, H, W = x_nchw.shape
    HW = H * W
    L = params["w1"].shape[0]
    Cr = params["w1"].shape[2]

    G = _num_grid_groups(N)                     # grid steps
    NB = N // G                                 # batch items folded per step
    NBHW = NB * HW                              # lane width per step
    PADL = ((W + 1 + 127) // 128) * 128         # lane border pad (>= W+1, mult of 128)

    # ---------------- wrapper-side packing (layout + constant folding) --------
    # activations: channels on sublanes, folded batch*pixels on lanes
    x = (x_nchw.reshape(N, C, HW).astype(jnp.float32)
         .reshape(G, NB, C, HW).transpose(0, 2, 1, 3).reshape(G, C, NBHW))

    # per-tap combined border masks over the folded lane axis (tap 4 is all-ones)
    q = np.arange(NBHW)
    row = (q % HW) // W
    col = q % W
    masks_np = np.empty((9, NBHW), np.float32)
    for k in range(9):
        dy, dx = k // 3 - 1, k % 3 - 1
        masks_np[k] = ((row + dy >= 0) & (row + dy < H) &
                       (col + dx >= 0) & (col + dx < W)).astype(np.float32)
    masks = jnp.asarray(masks_np)

    # BN affine params: [scale1 | shift1 | shift2] per layer, plus final BN
    bnp = jnp.concatenate(
        [params["scale1"], params["shift1"], params["shift2"]], axis=1)[..., None]
    bnf = jnp.concatenate([params["bn_scale"], params["bn_shift"]])[:, None]

    # 3x3 conv weights: per-tap (Cr, C) layout, BN2 scale folded in, bf16 for MXU
    # w3k[l*9 + ky*3 + kx, co, ci] = w3_hwio[l, ky, kx, ci, co] * scale2[l, co]
    w3k = jnp.transpose(params["w3_hwio"], (0, 1, 2, 4, 3)).reshape(L, 9, Cr, C)
    w3k = (w3k * params["scale2"][:, None, :, None]).reshape(L * 9, Cr, C)
    w3k = w3k.astype(jnp.bfloat16)
    w1 = params["w1"].astype(jnp.bfloat16)                       # (L, C, Cr)

    # ---------------- fused kernel --------------------------------------------
    def kernel(x_ref, mask_ref, bnp_ref, w3_ref, w1_ref, bnf_ref, o_ref, tpad):
        # zero only the two lane-border regions; interior is rewritten per layer
        zpad = jnp.zeros((C, PADL), jnp.float32)
        tpad[:, pl.ds(0, PADL)] = zpad
        tpad[:, pl.ds(PADL + NBHW, PADL)] = zpad

        # residual stream lives in the output VMEM block
        o_ref[0] = x_ref[0]

        for l in range(L):
            bn_l = bnp_ref[l]                                    # (2C+Cr, 1) f32
            s1, b1 = bn_l[:C], bn_l[C:2 * C]
            b2 = bn_l[2 * C:]

            # BN1 -> ReLU, written once into the lane-padded buffer (f32)
            t = jnp.maximum(o_ref[0] * s1 + b1, 0.0)
            tpad[:, pl.ds(PADL, NBHW)] = t

            # 3x3 "SAME" conv as 9 accumulating bf16 MXU matmuls; no patch buffer
            conv = None
            for k in range(9):
                ky, kx = divmod(k, 3)
                off = (ky - 1) * W + (kx - 1)
                win = tpad[:, pl.ds(PADL + off, NBHW)]           # (C, NBHW) f32
                if k != 4:                                       # center tap: mask==1
                    win = win * mask_ref[pl.ds(k, 1), :]
                part = jnp.dot(w3_ref[l * 9 + k], win.astype(jnp.bfloat16),
                               preferred_element_type=jnp.float32)
                conv = part if conv is None else conv + part     # (Cr, NBHW) f32

            # BN2 (scale pre-folded into w3) -> ReLU -> 1x1 conv -> residual add
            h2 = jnp.maximum(conv + b2, 0.0)
            o_ref[0] = o_ref[0] + jnp.dot(w1_ref[l], h2.astype(jnp.bfloat16),
                                          preferred_element_type=jnp.float32)

        # final ReLU(BN(h)); lane-dense store
        bnf_v = bnf_ref[...]
        o_ref[0] = jnp.maximum(o_ref[0] * bnf_v[:C] + bnf_v[C:], 0.0)

    out = pl.pallas_call(
        kernel,
        out_shape=jax.ShapeDtypeStruct((G, C, NBHW), jnp.float32),
        grid_spec=pltpu.PrefetchScalarGridSpec(
            num_scalar_prefetch=0,
            grid=(G,),
            in_specs=[
                pl.BlockSpec((1, C, NBHW), lambda g: (g, 0, 0)),        # x slab
                pl.BlockSpec((9, NBHW), lambda g: (0, 0)),              # tap masks
                pl.BlockSpec((L, 2 * C + Cr, 1), lambda g: (0, 0, 0)),  # BN params
                pl.BlockSpec((L * 9, Cr, C), lambda g: (0, 0, 0)),      # w3 (bf16)
                pl.BlockSpec((L, C, Cr), lambda g: (0, 0, 0)),          # w1 (bf16)
                pl.BlockSpec((2 * C, 1), lambda g: (0, 0)),             # final BN
            ],
            out_specs=pl.BlockSpec((1, C, NBHW), lambda g: (g, 0, 0)),
            scratch_shapes=[
                pltpu.VMEM((C, PADL + NBHW + PADL), jnp.float32),       # padded t
            ],
        ),
        compiler_params=pltpu.CompilerParams(dimension_semantics=("parallel",)),
    )(x, masks, bnp, w3k, w1, bnf)

    return (out.reshape(G, C, NB, HW).transpose(0, 2, 1, 3)
               .reshape(N, C, H, W))


# --------------------------------------------------------------------------
# Deterministic synthetic parameters (inference-folded BN + conv weights)
# --------------------------------------------------------------------------
def _bn_affine(key, c):
    kg, kb, km, kv = jax.random.split(key, 4)
    gamma = 1.0 + 0.1 * jax.random.normal(kg, (c,), jnp.float32)
    beta = 0.1 * jax.random.normal(kb, (c,), jnp.float32)
    mean = 0.1 * jax.random.normal(km, (c,), jnp.float32)
    var = 1.0 + 0.1 * jax.random.uniform(kv, (c,), jnp.float32)
    scale = gamma * jax.lax.rsqrt(var + 1e-5)
    shift = beta - mean * scale
    return scale, shift                                          # (c,), (c,)


def init_params(key, num_hiddens, num_residual_layers, num_residual_hiddens):
    C, Cr, L = num_hiddens, num_residual_hiddens, num_residual_layers
    s1s, b1s, w3s, s2s, b2s, w1s = [], [], [], [], [], []
    for _ in range(L):
        key, k1, k2, k3, k4 = jax.random.split(key, 5)
        s1, b1 = _bn_affine(k1, C)
        s2, b2 = _bn_affine(k2, Cr)
        # torch Conv2d 3x3 weight (Cout,Cin,3,3) held here in HWIO (3,3,C,Cr)
        w3 = 0.1 * jax.random.normal(k3, (3, 3, C, Cr), jnp.float32)
        # torch Conv2d 1x1 weight (Cout,Cin,1,1) held here as (C, Cr)
        w1 = 0.1 * jax.random.normal(k4, (C, Cr), jnp.float32)
        s1s.append(s1); b1s.append(b1); w3s.append(w3)
        s2s.append(s2); b2s.append(b2); w1s.append(w1)
    key, kf = jax.random.split(key)
    bns, bnb = _bn_affine(kf, C)
    return dict(
        scale1=jnp.stack(s1s), shift1=jnp.stack(b1s),            # (L, C)
        scale2=jnp.stack(s2s), shift2=jnp.stack(b2s),            # (L, Cr)
        w3_hwio=jnp.stack(w3s),                                  # (L, 3, 3, C, Cr)
        w1=jnp.stack(w1s),                                       # (L, C, Cr)
        bn_scale=bns, bn_shift=bnb,                              # (C,)
    )


# --------------------------------------------------------------------------
# Pure-JAX f32 reference (for correctness check)
# --------------------------------------------------------------------------
def _reference(x_nchw, params):
    x = jnp.transpose(x_nchw, (0, 2, 3, 1)).astype(jnp.float32)  # NHWC
    L = params["w1"].shape[0]
    h = x
    for l in range(L):
        t = jnp.maximum(h * params["scale1"][l] + params["shift1"][l], 0.0)
        t = jax.lax.conv_general_dilated(
            t, params["w3_hwio"][l], (1, 1), "SAME",
            dimension_numbers=("NHWC", "HWIO", "NHWC"),
            precision=jax.lax.Precision.HIGHEST)
        t = jnp.maximum(t * params["scale2"][l] + params["shift2"][l], 0.0)
        t = jnp.einsum("nhwc,oc->nhwo", t, params["w1"][l],
                       precision=jax.lax.Precision.HIGHEST)
        h = h + t
    out = jnp.maximum(h * params["bn_scale"] + params["bn_shift"], 0.0)
    return jnp.transpose(out, (0, 3, 1, 2))                      # NCHW


# --------------------------------------------------------------------------
if __name__ == "__main__":
    N, C, H, W = 2, 32, 16, 16            # batch, num_hiddens, spatial
    num_residual_layers = 2
    num_residual_hiddens = 16

    key = jax.random.PRNGKey(0)
    kx_, kp = jax.random.split(key)
    x = jax.random.normal(kx_, (N, C, H, W), jnp.float32)        # NCHW, like PyTorch
    params = init_params(kp, C, num_residual_layers, num_residual_hiddens)

    out = jax.block_until_ready(attention_residual_stack(x, params))
    ref = jax.block_until_ready(_reference(x, params))

    assert out.shape == (N, C, H, W)
    # bf16 MXU operands (f32 accumulation) -> looser tolerance than pure f32
    np.testing.assert_allclose(np.asarray(out), np.asarray(ref),
                               rtol=3e-2, atol=3e-2)
    print("KERNEL_OK")
</pallas_src>

<mosaic_0001>
module attributes {stable_mosaic.version = 11 : i64} {
  func.func @kernel(%arg0: i32, %arg1: memref<1x32x512xf32, #tpu.memory_space<vmem>>, %arg2: memref<9x512xf32, #tpu.memory_space<vmem>>, %arg3: memref<2x80x1xf32, #tpu.memory_space<vmem>>, %arg4: memref<18x16x32xbf16, #tpu.memory_space<vmem>>, %arg5: memref<2x32x16xbf16, #tpu.memory_space<vmem>>, %arg6: memref<64x1xf32, #tpu.memory_space<vmem>>, %arg7: memref<1x32x512xf32, #tpu.memory_space<vmem>>, %arg8: memref<32x768xf32, #tpu.memory_space<vmem>>) attributes {dimension_semantics = [#tpu.dimension_semantics<parallel>], iteration_bounds = array<i64: 1>, scalar_prefetch = 0 : i64, scratch_operands = 1 : i64, tpu.core_type = #tpu.core_type<tc>, window_params = [{transform_indices = @transform_0, window_bounds = array<i64: 1, 32, 512>}, {pipeline_mode = #tpu.pipeline_mode<synchronous>, transform_indices = @transform_1, window_bounds = array<i64: 9, 512>}, {pipeline_mode = #tpu.pipeline_mode<synchronous>, transform_indices = @transform_2, window_bounds = array<i64: 2, 80, 1>}, {pipeline_mode = #tpu.pipeline_mode<synchronous>, transform_indices = @transform_3, window_bounds = array<i64: 18, 16, 32>}, {pipeline_mode = #tpu.pipeline_mode<synchronous>, transform_indices = @transform_4, window_bounds = array<i64: 2, 32, 16>}, {pipeline_mode = #tpu.pipeline_mode<synchronous>, transform_indices = @transform_5, window_bounds = array<i64: 64, 1>}, {transform_indices = @transform_6, window_bounds = array<i64: 1, 32, 512>}]} {
    %cst = arith.constant 0.000000e+00 : f32
    %0 = vector.broadcast %cst : f32 to vector<32x128xf32>
    %c0 = arith.constant 0 : index
    %c0_0 = arith.constant 0 : index
    %1 = vector.load %arg8[%c0, %c0_0] : memref<32x768xf32, #tpu.memory_space<vmem>>, vector<32x128xf32>
    tpu.vector_store %arg8[%c0, %c0_0], %0 {strides = array<i32>} : memref<32x768xf32, #tpu.memory_space<vmem>>, vector<32x128xf32>,
    %c0_1 = arith.constant 0 : index
    %c640 = arith.constant 640 : index
    %2 = vector.load %arg8[%c0_1, %c640] : memref<32x768xf32, #tpu.memory_space<vmem>>, vector<32x128xf32>
    tpu.vector_store %arg8[%c0_1, %c640], %0 {strides = array<i32>} : memref<32x768xf32, #tpu.memory_space<vmem>>, vector<32x128xf32>,
    %c0_2 = arith.constant 0 : index
    %c0_3 = arith.constant 0 : index
    %c0_4 = arith.constant 0 : index
    %3 = vector.load %arg1[%c0_2, %c0_3, %c0_4] : memref<1x32x512xf32, #tpu.memory_space<vmem>>, vector<1x32x512xf32>
    %4 = vector.shape_cast %3 : vector<1x32x512xf32> to vector<32x512xf32>
    %c0_5 = arith.constant 0 : index
    %c0_6 = arith.constant 0 : index
    %c0_7 = arith.constant 0 : index
    %5 = vector.load %arg7[%c0_5, %c0_6, %c0_7] : memref<1x32x512xf32, #tpu.memory_space<vmem>>, vector<1x32x512xf32>
    %6 = vector.shape_cast %5 : vector<1x32x512xf32> to vector<32x512xf32>
    %7 = vector.shape_cast %4 : vector<32x512xf32> to vector<1x32x512xf32>
    tpu.vector_store %arg7[%c0_5, %c0_6, %c0_7], %7 {strides = array<i32>} : memref<1x32x512xf32, #tpu.memory_space<vmem>>, vector<1x32x512xf32>,
    %c0_8 = arith.constant 0 : index
    %c0_9 = arith.constant 0 : index
    %c0_10 = arith.constant 0 : index
    %8 = vector.load %arg3[%c0_8, %c0_9, %c0_10] : memref<2x80x1xf32, #tpu.memory_space<vmem>>, vector<1x80x1xf32>
    %9 = vector.shape_cast %8 : vector<1x80x1xf32> to vector<80x1xf32>
    %10 = vector.extract_strided_slice %9 {offsets = [0, 0], sizes = [32, 1], strides = [1, 1]} : vector<80x1xf32> to vector<32x1xf32>
    %11 = vector.extract_strided_slice %9 {offsets = [32, 0], sizes = [32, 1], strides = [1, 1]} : vector<80x1xf32> to vector<32x1xf32>
    %12 = vector.extract_strided_slice %9 {offsets = [64, 0], sizes = [16, 1], strides = [1, 1]} : vector<80x1xf32> to vector<16x1xf32>
    %c0_11 = arith.constant 0 : index
    %c0_12 = arith.constant 0 : index
    %c0_13 = arith.constant 0 : index
    %13 = vector.load %arg7[%c0_11, %c0_12, %c0_13] : memref<1x32x512xf32, #tpu.memory_space<vmem>>, vector<1x32x512xf32>
    %14 = vector.shape_cast %13 : vector<1x32x512xf32> to vector<32x512xf32>
    %15 = vector.broadcast %10 : vector<32x1xf32> to vector<32x512xf32>
    %16 = arith.mulf %14, %15 : vector<32x512xf32>
    %17 = vector.broadcast %11 : vector<32x1xf32> to vector<32x512xf32>
    %18 = arith.addf %16, %17 : vector<32x512xf32>
    %cst_14 = arith.constant 0.000000e+00 : f32
    %19 = vector.broadcast %cst_14 : f32 to vector<32x512xf32>
    %20 = arith.maximumf %18, %19 : vector<32x512xf32>
    %c0_15 = arith.constant 0 : index
    %c128 = arith.constant 128 : index
    %21 = vector.load %arg8[%c0_15, %c128] : memref<32x768xf32, #tpu.memory_space<vmem>>, vector<32x512xf32>
    tpu.vector_store %arg8[%c0_15, %c128], %20 {strides = array<i32>} : memref<32x768xf32, #tpu.memory_space<vmem>>, vector<32x512xf32>,
    %c0_16 = arith.constant 0 : index
    %c111 = arith.constant 111 : index
    %22 = vector.load %arg8[%c0_16, %c111] : memref<32x768xf32, #tpu.memory_space<vmem>>, vector<32x512xf32>
    %c0_17 = arith.constant 0 : index
    %c0_18 = arith.constant 0 : index
    %23 = vector.load %arg2[%c0_17, %c0_18] : memref<9x512xf32, #tpu.memory_space<vmem>>, vector<1x512xf32>
    %24 = vector.broadcast %23 : vector<1x512xf32> to vector<32x512xf32>
    %25 = arith.mulf %22, %24 : vector<32x512xf32>
    %c0_19 = arith.constant 0 : index
    %c0_20 = arith.constant 0 : index
    %c0_21 = arith.constant 0 : index
    %26 = vector.load %arg4[%c0_19, %c0_20, %c0_21] : memref<18x16x32xbf16, #tpu.memory_space<vmem>>, vector<1x16x32xbf16>
    %27 = vector.shape_cast %26 : vector<1x16x32xbf16> to vector<16x32xbf16>
    %28 = arith.truncf %25 : vector<32x512xf32> to vector<32x512xbf16>
    %cst_22 = arith.constant dense<0.000000e+00> : vector<16x512xf32>
    %29 = tpu.matmul %27, %28, %cst_22 {dimension_numbers = #tpu.dot_dimension_numbers<[1], [0], [0], [1], [0, 0, 1, 1], [], []>} : vector<16x32xbf16>, vector<32x512xbf16>, vector<16x512xf32> -> vector<16x512xf32>
    %c0_23 = arith.constant 0 : index
    %c112 = arith.constant 112 : index
    %30 = vector.load %arg8[%c0_23, %c112] : memref<32x768xf32, #tpu.memory_space<vmem>>, vector<32x512xf32>
    %c1 = arith.constant 1 : index
    %c0_24 = arith.constant 0 : index
    %31 = vector.load %arg2[%c1, %c0_24] : memref<9x512xf32, #tpu.memory_space<vmem>>, vector<1x512xf32>
    %32 = vector.broadcast %31 : vector<1x512xf32> to vector<32x512xf32>
    %33 = arith.mulf %30, %32 : vector<32x512xf32>
    %c1_25 = arith.constant 1 : index
    %c0_26 = arith.constant 0 : index
    %c0_27 = arith.constant 0 : index
    %34 = vector.load %arg4[%c1_25, %c0_26, %c0_27] : memref<18x16x32xbf16, #tpu.memory_space<vmem>>, vector<1x16x32xbf16>
    %35 = vector.shape_cast %34 : vector<1x16x32xbf16> to vector<16x32xbf16>
    %36 = arith.truncf %33 : vector<32x512xf32> to vector<32x512xbf16>
    %cst_28 = arith.constant dense<0.000000e+00> : vector<16x512xf32>
    %37 = tpu.matmul %35, %36, %cst_28 {dimension_numbers = #tpu.dot_dimension_numbers<[1], [0], [0], [1], [0, 0, 1, 1], [], []>} : vector<16x32xbf16>, vector<32x512xbf16>, vector<16x512xf32> -> vector<16x512xf32>
    %38 = arith.addf %29, %37 : vector<16x512xf32>
    %c0_29 = arith.constant 0 : index
    %c113 = arith.constant 113 : index
    %39 = vector.load %arg8[%c0_29, %c113] : memref<32x768xf32, #tpu.memory_space<vmem>>, vector<32x512xf32>
    %c2 = arith.constant 2 : index
    %c0_30 = arith.constant 0 : index
    %40 = vector.load %arg2[%c2, %c0_30] : memref<9x512xf32, #tpu.memory_space<vmem>>, vector<1x512xf32>
    %41 = vector.broadcast %40 : vector<1x512xf32> to vector<32x512xf32>
    %42 = arith.mulf %39, %41 : vector<32x512xf32>
    %c2_31 = arith.constant 2 : index
    %c0_32 = arith.constant 0 : index
    %c0_33 = arith.constant 0 : index
    %43 = vector.load %arg4[%c2_31, %c0_32, %c0_33] : memref<18x16x32xbf16, #tpu.memory_space<vmem>>, vector<1x16x32xbf16>
    %44 = vector.shape_cast %43 : vector<1x16x32xbf16> to vector<16x32xbf16>
    %45 = arith.truncf %42 : vector<32x512xf32> to vector<32x512xbf16>
    %cst_34 = arith.constant dense<0.000000e+00> : vector<16x512xf32>
    %46 = tpu.matmul %44, %45, %cst_34 {dimension_numbers = #tpu.dot_dimension_numbers<[1], [0], [0], [1], [0, 0, 1, 1], [], []>} : vector<16x32xbf16>, vector<32x512xbf16>, vector<16x512xf32> -> vector<16x512xf32>
    %47 = arith.addf %38, %46 : vector<16x512xf32>
    %c0_35 = arith.constant 0 : index
    %c127 = arith.constant 127 : index
    %48 = vector.load %arg8[%c0_35, %c127] : memref<32x768xf32, #tpu.memory_space<vmem>>, vector<32x512xf32>
    %c3 = arith.constant 3 : index
    %c0_36 = arith.constant 0 : index
    %49 = vector.load %arg2[%c3, %c0_36] : memref<9x512xf32, #tpu.memory_space<vmem>>, vector<1x512xf32>
    %50 = vector.broadcast %49 : vector<1x512xf32> to vector<32x512xf32>
    %51 = arith.mulf %48, %50 : vector<32x512xf32>
    %c3_37 = arith.constant 3 : index
    %c0_38 = arith.constant 0 : index
    %c0_39 = arith.constant 0 : index
    %52 = vector.load %arg4[%c3_37, %c0_38, %c0_39] : memref<18x16x32xbf16, #tpu.memory_space<vmem>>, vector<1x16x32xbf16>
    %53 = vector.shape_cast %52 : vector<1x16x32xbf16> to vector<16x32xbf16>
    %54 = arith.truncf %51 : vector<32x512xf32> to vector<32x512xbf16>
    %cst_40 = arith.constant dense<0.000000e+00> : vector<16x512xf32>
    %55 = tpu.matmul %53, %54, %cst_40 {dimension_numbers = #tpu.dot_dimension_numbers<[1], [0], [0], [1], [0, 0, 1, 1], [], []>} : vector<16x32xbf16>, vector<32x512xbf16>, vector<16x512xf32> -> vector<16x512xf32>
    %56 = arith.addf %47, %55 : vector<16x512xf32>
    %c0_41 = arith.constant 0 : index
    %c128_42 = arith.constant 128 : index
    %57 = vector.load %arg8[%c0_41, %c128_42] : memref<32x768xf32, #tpu.memory_space<vmem>>, vector<32x512xf32>
    %c4 = arith.constant 4 : index
    %c0_43 = arith.constant 0 : index
    %c0_44 = arith.constant 0 : index
    %58 = vector.load %arg4[%c4, %c0_43, %c0_44] : memref<18x16x32xbf16, #tpu.memory_space<vmem>>, vector<1x16x32xbf16>
    %59 = vector.shape_cast %58 : vector<1x16x32xbf16> to vector<16x32xbf16>
    %60 = arith.truncf %57 : vector<32x512xf32> to vector<32x512xbf16>
    %cst_45 = arith.constant dense<0.000000e+00> : vector<16x512xf32>
    %61 = tpu.matmul %59, %60, %cst_45 {dimension_numbers = #tpu.dot_dimension_numbers<[1], [0], [0], [1], [0, 0, 1, 1], [], []>} : vector<16x32xbf16>, vector<32x512xbf16>, vector<16x512xf32> -> vector<16x512xf32>
    %62 = arith.addf %56, %61 : vector<16x512xf32>
    %c0_46 = arith.constant 0 : index
    %c129 = arith.constant 129 : index
    %63 = vector.load %arg8[%c0_46, %c129] : memref<32x768xf32, #tpu.memory_space<vmem>>, vector<32x512xf32>
    %c5 = arith.constant 5 : index
    %c0_47 = arith.constant 0 : index
    %64 = vector.load %arg2[%c5, %c0_47] : memref<9x512xf32, #tpu.memory_space<vmem>>, vector<1x512xf32>
    %65 = vector.broadcast %64 : vector<1x512xf32> to vector<32x512xf32>
    %66 = arith.mulf %63, %65 : vector<32x512xf32>
    %c5_48 = arith.constant 5 : index
    %c0_49 = arith.constant 0 : index
    %c0_50 = arith.constant 0 : index
    %67 = vector.load %arg4[%c5_48, %c0_49, %c0_50] : memref<18x16x32xbf16, #tpu.memory_space<vmem>>, vector<1x16x32xbf16>
    %68 = vector.shape_cast %67 : vector<1x16x32xbf16> to vector<16x32xbf16>
    %69 = arith.truncf %66 : vector<32x512xf32> to vector<32x512xbf16>
    %cst_51 = arith.constant dense<0.000000e+00> : vector<16x512xf32>
    %70 = tpu.matmul %68, %69, %cst_51 {dimension_numbers = #tpu.dot_dimension_numbers<[1], [0], [0], [1], [0, 0, 1, 1], [], []>} : vector<16x32xbf16>, vector<32x512xbf16>, vector<16x512xf32> -> vector<16x512xf32>
    %71 = arith.addf %62, %70 : vector<16x512xf32>
    %c0_52 = arith.constant 0 : index
    %c143 = arith.constant 143 : index
    %72 = vector.load %arg8[%c0_52, %c143] : memref<32x768xf32, #tpu.memory_space<vmem>>, vector<32x512xf32>
    %c6 = arith.constant 6 : index
    %c0_53 = arith.constant 0 : index
    %73 = vector.load %arg2[%c6, %c0_53] : memref<9x512xf32, #tpu.memory_space<vmem>>, vector<1x512xf32>
    %74 = vector.broadcast %73 : vector<1x512xf32> to vector<32x512xf32>
    %75 = arith.mulf %72, %74 : vector<32x512xf32>
    %c6_54 = arith.constant 6 : index
    %c0_55 = arith.constant 0 : index
    %c0_56 = arith.constant 0 : index
    %76 = vector.load %arg4[%c6_54, %c0_55, %c0_56] : memref<18x16x32xbf16, #tpu.memory_space<vmem>>, vector<1x16x32xbf16>
    %77 = vector.shape_cast %76 : vector<1x16x32xbf16> to vector<16x32xbf16>
    %78 = arith.truncf %75 : vector<32x512xf32> to vector<32x512xbf16>
    %cst_57 = arith.constant dense<0.000000e+00> : vector<16x512xf32>
    %79 = tpu.matmul %77, %78, %cst_57 {dimension_numbers = #tpu.dot_dimension_numbers<[1], [0], [0], [1], [0, 0, 1, 1], [], []>} : vector<16x32xbf16>, vector<32x512xbf16>, vector<16x512xf32> -> vector<16x512xf32>
    %80 = arith.addf %71, %79 : vector<16x512xf32>
    %c0_58 = arith.constant 0 : index
    %c144 = arith.constant 144 : index
    %81 = vector.load %arg8[%c0_58, %c144] : memref<32x768xf32, #tpu.memory_space<vmem>>, vector<32x512xf32>
    %c7 = arith.constant 7 : index
    %c0_59 = arith.constant 0 : index
    %82 = vector.load %arg2[%c7, %c0_59] : memref<9x512xf32, #tpu.memory_space<vmem>>, vector<1x512xf32>
    %83 = vector.broadcast %82 : vector<1x512xf32> to vector<32x512xf32>
    %84 = arith.mulf %81, %83 : vector<32x512xf32>
    %c7_60 = arith.constant 7 : index
    %c0_61 = arith.constant 0 : index
    %c0_62 = arith.constant 0 : index
    %85 = vector.load %arg4[%c7_60, %c0_61, %c0_62] : memref<18x16x32xbf16, #tpu.memory_space<vmem>>, vector<1x16x32xbf16>
    %86 = vector.shape_cast %85 : vector<1x16x32xbf16> to vector<16x32xbf16>
    %87 = arith.truncf %84 : vector<32x512xf32> to vector<32x512xbf16>
    %cst_63 = arith.constant dense<0.000000e+00> : vector<16x512xf32>
    %88 = tpu.matmul %86, %87, %cst_63 {dimension_numbers = #tpu.dot_dimension_numbers<[1], [0], [0], [1], [0, 0, 1, 1], [], []>} : vector<16x32xbf16>, vector<32x512xbf16>, vector<16x512xf32> -> vector<16x512xf32>
    %89 = arith.addf %80, %88 : vector<16x512xf32>
    %c0_64 = arith.constant 0 : index
    %c145 = arith.constant 145 : index
    %90 = vector.load %arg8[%c0_64, %c145] : memref<32x768xf32, #tpu.memory_space<vmem>>, vector<32x512xf32>
    %c8 = arith.constant 8 : index
    %c0_65 = arith.constant 0 : index
    %91 = vector.load %arg2[%c8, %c0_65] : memref<9x512xf32, #tpu.memory_space<vmem>>, vector<1x512xf32>
    %92 = vector.broadcast %91 : vector<1x512xf32> to vector<32x512xf32>
    %93 = arith.mulf %90, %92 : vector<32x512xf32>
    %c8_66 = arith.constant 8 : index
    %c0_67 = arith.constant 0 : index
    %c0_68 = arith.constant 0 : index
    %94 = vector.load %arg4[%c8_66, %c0_67, %c0_68] : memref<18x16x32xbf16, #tpu.memory_space<vmem>>, vector<1x16x32xbf16>
    %95 = vector.shape_cast %94 : vector<1x16x32xbf16> to vector<16x32xbf16>
    %96 = arith.truncf %93 : vector<32x512xf32> to vector<32x512xbf16>
    %cst_69 = arith.constant dense<0.000000e+00> : vector<16x512xf32>
    %97 = tpu.matmul %95, %96, %cst_69 {dimension_numbers = #tpu.dot_dimension_numbers<[1], [0], [0], [1], [0, 0, 1, 1], [], []>} : vector<16x32xbf16>, vector<32x512xbf16>, vector<16x512xf32> -> vector<16x512xf32>
    %98 = arith.addf %89, %97 : vector<16x512xf32>
    %99 = vector.broadcast %12 : vector<16x1xf32> to vector<16x512xf32>
    %100 = arith.addf %98, %99 : vector<16x512xf32>
    %cst_70 = arith.constant 0.000000e+00 : f32
    %101 = vector.broadcast %cst_70 : f32 to vector<16x512xf32>
    %102 = arith.maximumf %100, %101 : vector<16x512xf32>
    %c0_71 = arith.constant 0 : index
    %c0_72 = arith.constant 0 : index
    %c0_73 = arith.constant 0 : index
    %103 = vector.load %arg7[%c0_71, %c0_72, %c0_73] : memref<1x32x512xf32, #tpu.memory_space<vmem>>, vector<1x32x512xf32>
    %104 = vector.shape_cast %103 : vector<1x32x512xf32> to vector<32x512xf32>
    %c0_74 = arith.constant 0 : index
    %c0_75 = arith.constant 0 : index
    %c0_76 = arith.constant 0 : index
    %105 = vector.load %arg5[%c0_74, %c0_75, %c0_76] : memref<2x32x16xbf16, #tpu.memory_space<vmem>>, vector<1x32x16xbf16>
    %106 = vector.shape_cast %105 : vector<1x32x16xbf16> to vector<32x16xbf16>
    %107 = arith.truncf %102 : vector<16x512xf32> to vector<16x512xbf16>
    %cst_77 = arith.constant dense<0.000000e+00> : vector<32x512xf32>
    %108 = tpu.matmul %106, %107, %cst_77 {dimension_numbers = #tpu.dot_dimension_numbers<[1], [0], [0], [1], [0, 0, 1, 1], [], []>} : vector<32x16xbf16>, vector<16x512xbf16>, vector<32x512xf32> -> vector<32x512xf32>
    %109 = arith.addf %104, %108 : vector<32x512xf32>
    %c0_78 = arith.constant 0 : index
    %c0_79 = arith.constant 0 : index
    %c0_80 = arith.constant 0 : index
    %110 = vector.load %arg7[%c0_78, %c0_79, %c0_80] : memref<1x32x512xf32, #tpu.memory_space<vmem>>, vector<1x32x512xf32>
    %111 = vector.shape_cast %110 : vector<1x32x512xf32> to vector<32x512xf32>
    %112 = vector.shape_cast %109 : vector<32x512xf32> to vector<1x32x512xf32>
    tpu.vector_store %arg7[%c0_78, %c0_79, %c0_80], %112 {strides = array<i32>} : memref<1x32x512xf32, #tpu.memory_space<vmem>>, vector<1x32x512xf32>,
    %c1_81 = arith.constant 1 : index
    %c0_82 = arith.constant 0 : index
    %c0_83 = arith.constant 0 : index
    %113 = vector.load %arg3[%c1_81, %c0_82, %c0_83] : memref<2x80x1xf32, #tpu.memory_space<vmem>>, vector<1x80x1xf32>
    %114 = vector.shape_cast %113 : vector<1x80x1xf32> to vector<80x1xf32>
    %115 = vector.extract_strided_slice %114 {offsets = [0, 0], sizes = [32, 1], strides = [1, 1]} : vector<80x1xf32> to vector<32x1xf32>
    %116 = vector.extract_strided_slice %114 {offsets = [32, 0], sizes = [32, 1], strides = [1, 1]} : vector<80x1xf32> to vector<32x1xf32>
    %117 = vector.extract_strided_slice %114 {offsets = [64, 0], sizes = [16, 1], strides = [1, 1]} : vector<80x1xf32> to vector<16x1xf32>
    %c0_84 = arith.constant 0 : index
    %c0_85 = arith.constant 0 : index
    %c0_86 = arith.constant 0 : index
    %118 = vector.load %arg7[%c0_84, %c0_85, %c0_86] : memref<1x32x512xf32, #tpu.memory_space<vmem>>, vector<1x32x512xf32>
    %119 = vector.shape_cast %118 : vector<1x32x512xf32> to vector<32x512xf32>
    %120 = vector.broadcast %115 : vector<32x1xf32> to vector<32x512xf32>
    %121 = arith.mulf %119, %120 : vector<32x512xf32>
    %122 = vector.broadcast %116 : vector<32x1xf32> to vector<32x512xf32>
    %123 = arith.addf %121, %122 : vector<32x512xf32>
    %cst_87 = arith.constant 0.000000e+00 : f32
    %124 = vector.broadcast %cst_87 : f32 to vector<32x512xf32>
    %125 = arith.maximumf %123, %124 : vector<32x512xf32>
    %c0_88 = arith.constant 0 : index
    %c128_89 = arith.constant 128 : index
    %126 = vector.load %arg8[%c0_88, %c128_89] : memref<32x768xf32, #tpu.memory_space<vmem>>, vector<32x512xf32>
    tpu.vector_store %arg8[%c0_88, %c128_89], %125 {strides = array<i32>} : memref<32x768xf32, #tpu.memory_space<vmem>>, vector<32x512xf32>,
    %c0_90 = arith.constant 0 : index
    %c111_91 = arith.constant 111 : index
    %127 = vector.load %arg8[%c0_90, %c111_91] : memref<32x768xf32, #tpu.memory_space<vmem>>, vector<32x512xf32>
    %c0_92 = arith.constant 0 : index
    %c0_93 = arith.constant 0 : index
    %128 = vector.load %arg2[%c0_92, %c0_93] : memref<9x512xf32, #tpu.memory_space<vmem>>, vector<1x512xf32>
    %129 = vector.broadcast %128 : vector<1x512xf32> to vector<32x512xf32>
    %130 = arith.mulf %127, %129 : vector<32x512xf32>
    %c9 = arith.constant 9 : index
    %c0_94 = arith.constant 0 : index
    %c0_95 = arith.constant 0 : index
    %131 = vector.load %arg4[%c9, %c0_94, %c0_95] : memref<18x16x32xbf16, #tpu.memory_space<vmem>>, vector<1x16x32xbf16>
    %132 = vector.shape_cast %131 : vector<1x16x32xbf16> to vector<16x32xbf16>
    %133 = arith.truncf %130 : vector<32x512xf32> to vector<32x512xbf16>
    %cst_96 = arith.constant dense<0.000000e+00> : vector<16x512xf32>
    %134 = tpu.matmul %132, %133, %cst_96 {dimension_numbers = #tpu.dot_dimension_numbers<[1], [0], [0], [1], [0, 0, 1, 1], [], []>} : vector<16x32xbf16>, vector<32x512xbf16>, vector<16x512xf32> -> vector<16x512xf32>
    %c0_97 = arith.constant 0 : index
    %c112_98 = arith.constant 112 : index
    %135 = vector.load %arg8[%c0_97, %c112_98] : memref<32x768xf32, #tpu.memory_space<vmem>>, vector<32x512xf32>
    %c1_99 = arith.constant 1 : index
    %c0_100 = arith.constant 0 : index
    %136 = vector.load %arg2[%c1_99, %c0_100] : memref<9x512xf32, #tpu.memory_space<vmem>>, vector<1x512xf32>
    %137 = vector.broadcast %136 : vector<1x512xf32> to vector<32x512xf32>
    %138 = arith.mulf %135, %137 : vector<32x512xf32>
    %c10 = arith.constant 10 : index
    %c0_101 = arith.constant 0 : index
    %c0_102 = arith.constant 0 : index
    %139 = vector.load %arg4[%c10, %c0_101, %c0_102] : memref<18x16x32xbf16, #tpu.memory_space<vmem>>, vector<1x16x32xbf16>
    %140 = vector.shape_cast %139 : vector<1x16x32xbf16> to vector<16x32xbf16>
    %141 = arith.truncf %138 : vector<32x512xf32> to vector<32x512xbf16>
    %cst_103 = arith.constant dense<0.000000e+00> : vector<16x512xf32>
    %142 = tpu.matmul %140, %141, %cst_103 {dimension_numbers = #tpu.dot_dimension_numbers<[1], [0], [0], [1], [0, 0, 1, 1], [], []>} : vector<16x32xbf16>, vector<32x512xbf16>, vector<16x512xf32> -> vector<16x512xf32>
    %143 = arith.addf %134, %142 : vector<16x512xf32>
    %c0_104 = arith.constant 0 : index
    %c113_105 = arith.constant 113 : index
    %144 = vector.load %arg8[%c0_104, %c113_105] : memref<32x768xf32, #tpu.memory_space<vmem>>, vector<32x512xf32>
    %c2_106 = arith.constant 2 : index
    %c0_107 = arith.constant 0 : index
    %145 = vector.load %arg2[%c2_106, %c0_107] : memref<9x512xf32, #tpu.memory_space<vmem>>, vector<1x512xf32>
    %146 = vector.broadcast %145 : vector<1x512xf32> to vector<32x512xf32>
    %147 = arith.mulf %144, %146 : vector<32x512xf32>
    %c11 = arith.constant 11 : index
    %c0_108 = arith.constant 0 : index
    %c0_109 = arith.constant 0 : index
    %148 = vector.load %arg4[%c11, %c0_108, %c0_109] : memref<18x16x32xbf16, #tpu.memory_space<vmem>>, vector<1x16x32xbf16>
    %149 = vector.shape_cast %148 : vector<1x16x32xbf16> to vector<16x32xbf16>
    %150 = arith.truncf %147 : vector<32x512xf32> to vector<32x512xbf16>
    %cst_110 = arith.constant dense<0.000000e+00> : vector<16x512xf32>
    %151 = tpu.matmul %149, %150, %cst_110 {dimension_numbers = #tpu.dot_dimension_numbers<[1], [0], [0], [1], [0, 0, 1, 1], [], []>} : vector<16x32xbf16>, vector<32x512xbf16>, vector<16x512xf32> -> vector<16x512xf32>
    %152 = arith.addf %143, %151 : vector<16x512xf32>
    %c0_111 = arith.constant 0 : index
    %c127_112 = arith.constant 127 : index
    %153 = vector.load %arg8[%c0_111, %c127_112] : memref<32x768xf32, #tpu.memory_space<vmem>>, vector<32x512xf32>
    %c3_113 = arith.constant 3 : index
    %c0_114 = arith.constant 0 : index
    %154 = vector.load %arg2[%c3_113, %c0_114] : memref<9x512xf32, #tpu.memory_space<vmem>>, vector<1x512xf32>
    %155 = vector.broadcast %154 : vector<1x512xf32> to vector<32x512xf32>
    %156 = arith.mulf %153, %155 : vector<32x512xf32>
    %c12 = arith.constant 12 : index
    %c0_115 = arith.constant 0 : index
    %c0_116 = arith.constant 0 : index
    %157 = vector.load %arg4[%c12, %c0_115, %c0_116] : memref<18x16x32xbf16, #tpu.memory_space<vmem>>, vector<1x16x32xbf16>
    %158 = vector.shape_cast %157 : vector<1x16x32xbf16> to vector<16x32xbf16>
    %159 = arith.truncf %156 : vector<32x512xf32> to vector<32x512xbf16>
    %cst_117 = arith.constant dense<0.000000e+00> : vector<16x512xf32>
    %160 = tpu.matmul %158, %159, %cst_117 {dimension_numbers = #tpu.dot_dimension_numbers<[1], [0], [0], [1], [0, 0, 1, 1], [], []>} : vector<16x32xbf16>, vector<32x512xbf16>, vector<16x512xf32> -> vector<16x512xf32>
    %161 = arith.addf %152, %160 : vector<16x512xf32>
    %c0_118 = arith.constant 0 : index
    %c128_119 = arith.constant 128 : index
    %162 = vector.load %arg8[%c0_118, %c128_119] : memref<32x768xf32, #tpu.memory_space<vmem>>, vector<32x512xf32>
    %c13 = arith.constant 13 : index
    %c0_120 = arith.constant 0 : index
    %c0_121 = arith.constant 0 : index
    %163 = vector.load %arg4[%c13, %c0_120, %c0_121] : memref<18x16x32xbf16, #tpu.memory_space<vmem>>, vector<1x16x32xbf16>
    %164 = vector.shape_cast %163 : vector<1x16x32xbf16> to vector<16x32xbf16>
    %165 = arith.truncf %162 : vector<32x512xf32> to vector<32x512xbf16>
    %cst_122 = arith.constant dense<0.000000e+00> : vector<16x512xf32>
    %166 = tpu.matmul %164, %165, %cst_122 {dimension_numbers = #tpu.dot_dimension_numbers<[1], [0], [0], [1], [0, 0, 1, 1], [], []>} : vector<16x32xbf16>, vector<32x512xbf16>, vector<16x512xf32> -> vector<16x512xf32>
    %167 = arith.addf %161, %166 : vector<16x512xf32>
    %c0_123 = arith.constant 0 : index
    %c129_124 = arith.constant 129 : index
    %168 = vector.load %arg8[%c0_123, %c129_124] : memref<32x768xf32, #tpu.memory_space<vmem>>, vector<32x512xf32>
    %c5_125 = arith.constant 5 : index
    %c0_126 = arith.constant 0 : index
    %169 = vector.load %arg2[%c5_125, %c0_126] : memref<9x512xf32, #tpu.memory_space<vmem>>, vector<1x512xf32>
    %170 = vector.broadcast %169 : vector<1x512xf32> to vector<32x512xf32>
    %171 = arith.mulf %168, %170 : vector<32x512xf32>
    %c14 = arith.constant 14 : index
    %c0_127 = arith.constant 0 : index
    %c0_128 = arith.constant 0 : index
    %172 = vector.load %arg4[%c14, %c0_127, %c0_128] : memref<18x16x32xbf16, #tpu.memory_space<vmem>>, vector<1x16x32xbf16>
    %173 = vector.shape_cast %172 : vector<1x16x32xbf16> to vector<16x32xbf16>
    %174 = arith.truncf %171 : vector<32x512xf32> to vector<32x512xbf16>
    %cst_129 = arith.constant dense<0.000000e+00> : vector<16x512xf32>
    %175 = tpu.matmul %173, %174, %cst_129 {dimension_numbers = #tpu.dot_dimension_numbers<[1], [0], [0], [1], [0, 0, 1, 1], [], []>} : vector<16x32xbf16>, vector<32x512xbf16>, vector<16x512xf32> -> vector<16x512xf32>
    %176 = arith.addf %167, %175 : vector<16x512xf32>
    %c0_130 = arith.constant 0 : index
    %c143_131 = arith.constant 143 : index
    %177 = vector.load %arg8[%c0_130, %c143_131] : memref<32x768xf32, #tpu.memory_space<vmem>>, vector<32x512xf32>
    %c6_132 = arith.constant 6 : index
    %c0_133 = arith.constant 0 : index
    %178 = vector.load %arg2[%c6_132, %c0_133] : memref<9x512xf32, #tpu.memory_space<vmem>>, vector<1x512xf32>
    %179 = vector.broadcast %178 : vector<1x512xf32> to vector<32x512xf32>
    %180 = arith.mulf %177, %179 : vector<32x512xf32>
    %c15 = arith.constant 15 : index
    %c0_134 = arith.constant 0 : index
    %c0_135 = arith.constant 0 : index
    %181 = vector.load %arg4[%c15, %c0_134, %c0_135] : memref<18x16x32xbf16, #tpu.memory_space<vmem>>, vector<1x16x32xbf16>
    %182 = vector.shape_cast %181 : vector<1x16x32xbf16> to vector<16x32xbf16>
    %183 = arith.truncf %180 : vector<32x512xf32> to vector<32x512xbf16>
    %cst_136 = arith.constant dense<0.000000e+00> : vector<16x512xf32>
    %184 = tpu.matmul %182, %183, %cst_136 {dimension_numbers = #tpu.dot_dimension_numbers<[1], [0], [0], [1], [0, 0, 1, 1], [], []>} : vector<16x32xbf16>, vector<32x512xbf16>, vector<16x512xf32> -> vector<16x512xf32>
    %185 = arith.addf %176, %184 : vector<16x512xf32>
    %c0_137 = arith.constant 0 : index
    %c144_138 = arith.constant 144 : index
    %186 = vector.load %arg8[%c0_137, %c144_138] : memref<32x768xf32, #tpu.memory_space<vmem>>, vector<32x512xf32>
    %c7_139 = arith.constant 7 : index
    %c0_140 = arith.constant 0 : index
    %187 = vector.load %arg2[%c7_139, %c0_140] : memref<9x512xf32, #tpu.memory_space<vmem>>, vector<1x512xf32>
    %188 = vector.broadcast %187 : vector<1x512xf32> to vector<32x512xf32>
    %189 = arith.mulf %186, %188 : vector<32x512xf32>
    %c16 = arith.constant 16 : index
    %c0_141 = arith.constant 0 : index
    %c0_142 = arith.constant 0 : index
    %190 = vector.load %arg4[%c16, %c0_141, %c0_142] : memref<18x16x32xbf16, #tpu.memory_space<vmem>>, vector<1x16x32xbf16>
    %191 = vector.shape_cast %190 : vector<1x16x32xbf16> to vector<16x32xbf16>
    %192 = arith.truncf %189 : vector<32x512xf32> to vector<32x512xbf16>
    %cst_143 = arith.constant dense<0.000000e+00> : vector<16x512xf32>
    %193 = tpu.matmul %191, %192, %cst_143 {dimension_numbers = #tpu.dot_dimension_numbers<[1], [0], [0], [1], [0, 0, 1, 1], [], []>} : vector<16x32xbf16>, vector<32x512xbf16>, vector<16x512xf32> -> vector<16x512xf32>
    %194 = arith.addf %185, %193 : vector<16x512xf32>
    %c0_144 = arith.constant 0 : index
    %c145_145 = arith.constant 145 : index
    %195 = vector.load %arg8[%c0_144, %c145_145] : memref<32x768xf32, #tpu.memory_space<vmem>>, vector<32x512xf32>
    %c8_146 = arith.constant 8 : index
    %c0_147 = arith.constant 0 : index
    %196 = vector.load %arg2[%c8_146, %c0_147] : memref<9x512xf32, #tpu.memory_space<vmem>>, vector<1x512xf32>
    %197 = vector.broadcast %196 : vector<1x512xf32> to vector<32x512xf32>
    %198 = arith.mulf %195, %197 : vector<32x512xf32>
    %c17 = arith.constant 17 : index
    %c0_148 = arith.constant 0 : index
    %c0_149 = arith.constant 0 : index
    %199 = vector.load %arg4[%c17, %c0_148, %c0_149] : memref<18x16x32xbf16, #tpu.memory_space<vmem>>, vector<1x16x32xbf16>
    %200 = vector.shape_cast %199 : vector<1x16x32xbf16> to vector<16x32xbf16>
    %201 = arith.truncf %198 : vector<32x512xf32> to vector<32x512xbf16>
    %cst_150 = arith.constant dense<0.000000e+00> : vector<16x512xf32>
    %202 = tpu.matmul %200, %201, %cst_150 {dimension_numbers = #tpu.dot_dimension_numbers<[1], [0], [0], [1], [0, 0, 1, 1], [], []>} : vector<16x32xbf16>, vector<32x512xbf16>, vector<16x512xf32> -> vector<16x512xf32>
    %203 = arith.addf %194, %202 : vector<16x512xf32>
    %204 = vector.broadcast %117 : vector<16x1xf32> to vector<16x512xf32>
    %205 = arith.addf %203, %204 : vector<16x512xf32>
    %cst_151 = arith.constant 0.000000e+00 : f32
    %206 = vector.broadcast %cst_151 : f32 to vector<16x512xf32>
    %207 = arith.maximumf %205, %206 : vector<16x512xf32>
    %c0_152 = arith.constant 0 : index
    %c0_153 = arith.constant 0 : index
    %c0_154 = arith.constant 0 : index
    %208 = vector.load %arg7[%c0_152, %c0_153, %c0_154] : memref<1x32x512xf32, #tpu.memory_space<vmem>>, vector<1x32x512xf32>
    %209 = vector.shape_cast %208 : vector<1x32x512xf32> to vector<32x512xf32>
    %c1_155 = arith.constant 1 : index
    %c0_156 = arith.constant 0 : index
    %c0_157 = arith.constant 0 : index
    %210 = vector.load %arg5[%c1_155, %c0_156, %c0_157] : memref<2x32x16xbf16, #tpu.memory_space<vmem>>, vector<1x32x16xbf16>
    %211 = vector.shape_cast %210 : vector<1x32x16xbf16> to vector<32x16xbf16>
    %212 = arith.truncf %207 : vector<16x512xf32> to vector<16x512xbf16>
    %cst_158 = arith.constant dense<0.000000e+00> : vector<32x512xf32>
    %213 = tpu.matmul %211, %212, %cst_158 {dimension_numbers = #tpu.dot_dimension_numbers<[1], [0], [0], [1], [0, 0, 1, 1], [], []>} : vector<32x16xbf16>, vector<16x512xbf16>, vector<32x512xf32> -> vector<32x512xf32>
    %214 = arith.addf %209, %213 : vector<32x512xf32>
    %c0_159 = arith.constant 0 : index
    %c0_160 = arith.constant 0 : index
    %c0_161 = arith.constant 0 : index
    %215 = vector.load %arg7[%c0_159, %c0_160, %c0_161] : memref<1x32x512xf32, #tpu.memory_space<vmem>>, vector<1x32x512xf32>
    %216 = vector.shape_cast %215 : vector<1x32x512xf32> to vector<32x512xf32>
    %217 = vector.shape_cast %214 : vector<32x512xf32> to vector<1x32x512xf32>
    tpu.vector_store %arg7[%c0_159, %c0_160, %c0_161], %217 {strides = array<i32>} : memref<1x32x512xf32, #tpu.memory_space<vmem>>, vector<1x32x512xf32>,
    %c0_162 = arith.constant 0 : index
    %c0_163 = arith.constant 0 : index
    %218 = vector.load %arg6[%c0_162, %c0_163] : memref<64x1xf32, #tpu.memory_space<vmem>>, vector<64x1xf32>
    %c0_164 = arith.constant 0 : index
    %c0_165 = arith.constant 0 : index
    %c0_166 = arith.constant 0 : index
    %219 = vector.load %arg7[%c0_164, %c0_165, %c0_166] : memref<1x32x512xf32, #tpu.memory_space<vmem>>, vector<1x32x512xf32>
    %220 = vector.shape_cast %219 : vector<1x32x512xf32> to vector<32x512xf32>
    %221 = vector.extract_strided_slice %218 {offsets = [0, 0], sizes = [32, 1], strides = [1, 1]} : vector<64x1xf32> to vector<32x1xf32>
    %222 = vector.broadcast %221 : vector<32x1xf32> to vector<32x512xf32>
    %223 = arith.mulf %220, %222 : vector<32x512xf32>
    %224 = vector.extract_strided_slice %218 {offsets = [32, 0], sizes = [32, 1], strides = [1, 1]} : vector<64x1xf32> to vector<32x1xf32>
    %225 = vector.broadcast %224 : vector<32x1xf32> to vector<32x512xf32>
    %226 = arith.addf %223, %225 : vector<32x512xf32>
    %cst_167 = arith.constant 0.000000e+00 : f32
    %227 = vector.broadcast %cst_167 : f32 to vector<32x512xf32>
    %228 = arith.maximumf %226, %227 : vector<32x512xf32>
    %c0_168 = arith.constant 0 : index
    %c0_169 = arith.constant 0 : index
    %c0_170 = arith.constant 0 : index
    %229 = vector.load %arg7[%c0_168, %c0_169, %c0_170] : memref<1x32x512xf32, #tpu.memory_space<vmem>>, vector<1x32x512xf32>
    %230 = vector.shape_cast %229 : vector<1x32x512xf32> to vector<32x512xf32>
    %231 = vector.shape_cast %228 : vector<32x512xf32> to vector<1x32x512xf32>
    tpu.vector_store %arg7[%c0_168, %c0_169, %c0_170], %231 {strides = array<i32>} : memref<1x32x512xf32, #tpu.memory_space<vmem>>, vector<1x32x512xf32>,
    return
  }
  func.func @transform_0(%arg0: i32) -> (i32, i32, i32) {
    %c0_i32 = arith.constant 0 : i32
    %c0_i32_0 = arith.constant 0 : i32
    %c0_i32_1 = arith.constant 0 : i32
    return %arg0, %c0_i32, %c0_i32_0 : i32, i32, i32
  }
  func.func @transform_1(%arg0: i32) -> (i32, i32) {
    %c0_i32 = arith.constant 0 : i32
    %c0_i32_0 = arith.constant 0 : i32
    %c0_i32_1 = arith.constant 0 : i32
    return %c0_i32, %c0_i32_0 : i32, i32
  }
  func.func @transform_2(%arg0: i32) -> (i32, i32, i32) {
    %c0_i32 = arith.constant 0 : i32
    %c0_i32_0 = arith.constant 0 : i32
    %c0_i32_1 = arith.constant 0 : i32
    %c0_i32_2 = arith.constant 0 : i32
    return %c0_i32, %c0_i32_0, %c0_i32_1 : i32, i32, i32
  }
  func.func @transform_3(%arg0: i32) -> (i32, i32, i32) {
    %c0_i32 = arith.constant 0 : i32
    %c0_i32_0 = arith.constant 0 : i32
    %c0_i32_1 = arith.constant 0 : i32
    %c0_i32_2 = arith.constant 0 : i32
    return %c0_i32, %c0_i32_0, %c0_i32_1 : i32, i32, i32
  }
  func.func @transform_4(%arg0: i32) -> (i32, i32, i32) {
    %c0_i32 = arith.constant 0 : i32
    %c0_i32_0 = arith.constant 0 : i32
    %c0_i32_1 = arith.constant 0 : i32
    %c0_i32_2 = arith.constant 0 : i32
    return %c0_i32, %c0_i32_0, %c0_i32_1 : i32, i32, i32
  }
  func.func @transform_5(%arg0: i32) -> (i32, i32) {
    %c0_i32 = arith.constant 0 : i32
    %c0_i32_0 = arith.constant 0 : i32
    %c0_i32_1 = arith.constant 0 : i32
    return %c0_i32, %c0_i32_0 : i32, i32
  }
  func.func @transform_6(%arg0: i32) -> (i32, i32, i32) {
    %c0_i32 = arith.constant 0 : i32
    %c0_i32_0 = arith.constant 0 : i32
    %c0_i32_1 = arith.constant 0 : i32
    return %arg0, %c0_i32, %c0_i32_0 : i32, i32, i32
  }
}

</mosaic_0001>

<llo_original>
// kernel: tpu_custom_call.1
$region0: #{tpu_custom_call.1}
  #allocation0 [shape = 'u32[]', space=smem, size = 0x4, offset = 0x4, fixed_abs, tag = 'smem constant byte address 0x4 - core index']
  #allocation1 [shape = 'u32[144,128]{1,0:T(1,128)}', space=vmem, size = 0x12000, scoped, tag = 'internal scratch']
  #allocation2 [shape = 'f32[32,768]{1,0:T(8,128)}', space=vmem, size = 0x18000, scoped, tag = 'scratch operand']
  %s0 = inlined_call_operand.vmem [shape: f32[1,32,512], index: 0, kind: input, shape index: {}]
  %s1 = inlined_call_operand.hbm [shape: f32[9,512], index: 1, kind: input, shape index: {}]
  %s2 = inlined_call_operand.vmem [shape: f32[2,80,1], index: 2, kind: input, shape index: {}]
  %s3 = inlined_call_operand.vmem [shape: bf16[18,16,32], index: 3, kind: input, shape index: {}]
  %s4 = inlined_call_operand.vmem [shape: bf16[2,32,16], index: 4, kind: input, shape index: {}]
  %s5 = inlined_call_operand.vmem [shape: f32[64,1], index: 5, kind: input, shape index: {}]
  %s6 = inlined_call_operand.hbm [shape: f32[1,32,512], index: 6, kind: output, shape index: {}]
  %s7 = sld [smem:[#allocation0]]
  $region38: #{tpu_custom_call.1} parent=0
    _
  %s9 = ssub.s32 1, %s7
  %s10 = scalar_select 0, %s9, %s7
  $region1: #{tpu_custom_call.1} parent=0
    #allocation3 [shape = 'u8[32768]{0}', space=vmem, size = 0x8000, scoped, tag = 'input window, operand 1, single buffered']
    #allocation4 [shape = 's32[1]{0}', space=sflag, size = 0x4, scoped, tag = 'scoped memory for tpu_custom_call.1']
    #allocation5 [shape = 's32[1]{0}', space=sflag, size = 0x4, scoped, tag = 'scoped memory for tpu_custom_call.1']
    #allocation6 [shape = 'u8[65536]{0}', space=vmem, size = 0x10000, scoped, tag = 'output window, operand 0, single buffered']
    %11 = vsyncpa [#allocation4], 0
    %12 = vsyncpa [#allocation5], 0
    // Predicated region
    $region2: #{tpu_custom_call.1} parent=1 // pred_check
      _
    $region3: #{tpu_custom_call.1} parent=1 // pred_check_branch
      %14 = sbr.rel (0) target = $region5
    $region4: #{tpu_custom_call.1} parent=1 // pred_region
      _
    $region5: #{tpu_custom_call.1} parent=1 // pred_fallthru
      _
    // Predicated region
    $region6: #{tpu_custom_call.1} parent=1 // pred_check
      _
    $region7: #{tpu_custom_call.1} parent=1 // pred_check_branch
      %16 = sbr.rel (0) target = $region9
    $region8: #{tpu_custom_call.1} parent=1 // pred_region
      %s18 = ssub.s32 1024, 1024
      %19 = vsyncadd [#allocation4], %s18
      %s20 = sshll.u32 [#allocation3], 4
      %s21 = int_to_ptr.vmem [resolvable:$true] %s20
      %26 = dma.hbm_to_vmem [thread:$0]  %s1, 1024, %s21, [#allocation4], 512, 512, 32
    $region9: #{tpu_custom_call.1} parent=1 // pred_fallthru
      _
    // Predicated region
    $region10: #{tpu_custom_call.1} parent=1 // pred_check
      _
    $region11: #{tpu_custom_call.1} parent=1 // pred_check_branch
      %28 = sbr.rel (0) target = $region13
    $region12: #{tpu_custom_call.1} parent=1 // pred_region
      _
    $region13: #{tpu_custom_call.1} parent=1 // pred_fallthru
      _
    // Predicated region
    $region14: #{tpu_custom_call.1} parent=1 // pred_check
      _
    $region15: #{tpu_custom_call.1} parent=1 // pred_check_branch
      %30 = sbr.rel (0) target = $region17
    $region16: #{tpu_custom_call.1} parent=1 // pred_region
      _
    $region17: #{tpu_custom_call.1} parent=1 // pred_fallthru
      _
    // Predicated region
    $region18: #{tpu_custom_call.1} parent=1 // pred_check
      _
    $region19: #{tpu_custom_call.1} parent=1 // pred_check_branch
      %32 = sbr.rel (0) target = $region21
    $region20: #{tpu_custom_call.1} parent=1 // pred_region
      _
    $region21: #{tpu_custom_call.1} parent=1 // pred_fallthru
      _
    // Predicated region
    $region22: #{tpu_custom_call.1} parent=1 // pred_check
      _
    $region23: #{tpu_custom_call.1} parent=1 // pred_check_branch
      %34 = sbr.rel (0) target = $region25
    $region24: #{tpu_custom_call.1} parent=1 // pred_region
      _
    $region25: #{tpu_custom_call.1} parent=1 // pred_fallthru
      _
    // Predicated region
    $region26: #{tpu_custom_call.1} parent=1 // pred_check
      _
    $region27: #{tpu_custom_call.1} parent=1 // pred_check_branch
      %36 = sbr.rel (0) target = $region29
    $region28: #{tpu_custom_call.1} parent=1 // pred_region
      %37 = dma.done [#allocation4], 1024
    $region29: #{tpu_custom_call.1} parent=1 // pred_fallthru
      _
    %39 = vst [vmem:[#allocation2] sm:$0xff] 0.0
    %40 = vst [vmem:[#allocation2 + $0x30] sm:$0xff] 0.0
    %41 = vst [vmem:[#allocation2 + $0x60] sm:$0xff] 0.0
    %42 = vst [vmem:[#allocation2 + $0x90] sm:$0xff] 0.0
    %43 = vst [vmem:[#allocation2 + $0x28] sm:$0xff] 0.0
    %44 = vst [vmem:[#allocation2 + $0x58] sm:$0xff] 0.0
    %45 = vst [vmem:[#allocation2 + $0x88] sm:$0xff] 0.0
    %46 = vst [vmem:[#allocation2 + $0xb8] sm:$0xff] 0.0
    %v47 = vld [vmem:[%s0] sm:$0xff]
    %v48 = vld [vmem:[%s0 + $0x8] sm:$0xff]
    %v49 = vld [vmem:[%s0 + $0x10] sm:$0xff]
    %v50 = vld [vmem:[%s0 + $0x18] sm:$0xff]
    %v51 = vld [vmem:[%s0 + $0x20] sm:$0xff]
    %v52 = vld [vmem:[%s0 + $0x28] sm:$0xff]
    %v53 = vld [vmem:[%s0 + $0x30] sm:$0xff]
    %v54 = vld [vmem:[%s0 + $0x38] sm:$0xff]
    %v55 = vld [vmem:[%s0 + $0x40] sm:$0xff]
    %v56 = vld [vmem:[%s0 + $0x48] sm:$0xff]
    %v57 = vld [vmem:[%s0 + $0x50] sm:$0xff]
    %v58 = vld [vmem:[%s0 + $0x58] sm:$0xff]
    %v59 = vld [vmem:[%s0 + $0x60] sm:$0xff]
    %v60 = vld [vmem:[%s0 + $0x68] sm:$0xff]
    %v61 = vld [vmem:[%s0 + $0x70] sm:$0xff]
    %v62 = vld [vmem:[%s0 + $0x78] sm:$0xff]
    %63 = vst [vmem:[#allocation6] sm:$0xff] %v47
    %64 = vst [vmem:[#allocation6 + $0x8] sm:$0xff] %v48
    %65 = vst [vmem:[#allocation6 + $0x10] sm:$0xff] %v49
    %66 = vst [vmem:[#allocation6 + $0x18] sm:$0xff] %v50
    %67 = vst [vmem:[#allocation6 + $0x20] sm:$0xff] %v51
    %68 = vst [vmem:[#allocation6 + $0x28] sm:$0xff] %v52
    %69 = vst [vmem:[#allocation6 + $0x30] sm:$0xff] %v53
    %70 = vst [vmem:[#allocation6 + $0x38] sm:$0xff] %v54
    %71 = vst [vmem:[#allocation6 + $0x40] sm:$0xff] %v55
    %72 = vst [vmem:[#allocation6 + $0x48] sm:$0xff] %v56
    %73 = vst [vmem:[#allocation6 + $0x50] sm:$0xff] %v57
    %74 = vst [vmem:[#allocation6 + $0x58] sm:$0xff] %v58
    %75 = vst [vmem:[#allocation6 + $0x60] sm:$0xff] %v59
    %76 = vst [vmem:[#allocation6 + $0x68] sm:$0xff] %v60
    %77 = vst [vmem:[#allocation6 + $0x70] sm:$0xff] %v61
    %78 = vst [vmem:[#allocation6 + $0x78] sm:$0xff] %v62
    %v79 = vld [vmem:[%s2] sm:$0xff]
    %v80 = vld [vmem:[%s2 + $0x8] sm:$0xff]
    %v81 = vld [vmem:[%s2 + $0x10] sm:$0xff]
    %v82 = vld [vmem:[%s2 + $0x18] sm:$0xff]
    %v83 = vld [vmem:[%s2 + $0x20] sm:$0xff]
    %v84 = vld [vmem:[%s2 + $0x28] sm:$0xff]
    %v85 = vld [vmem:[%s2 + $0x30] sm:$0xff]
    %v86 = vld [vmem:[%s2 + $0x38] sm:$0xff]
    %v87 = vld [vmem:[%s2 + $0x40] sm:$0xff]
    %v88 = vld [vmem:[%s2 + $0x48] sm:$0xff]
    %v89 = vld [vmem:[#allocation6] sm:$0xff]
    %v90 = vld [vmem:[#allocation6 + $0x8] sm:$0xff]
    %v91 = vld [vmem:[#allocation6 + $0x10] sm:$0xff]
    %v92 = vld [vmem:[#allocation6 + $0x18] sm:$0xff]
    %v93 = vld [vmem:[#allocation6 + $0x20] sm:$0xff]
    %v94 = vld [vmem:[#allocation6 + $0x28] sm:$0xff]
    %v95 = vld [vmem:[#allocation6 + $0x30] sm:$0xff]
    %v96 = vld [vmem:[#allocation6 + $0x38] sm:$0xff]
    %v97 = vld [vmem:[#allocation6 + $0x40] sm:$0xff]
    %v98 = vld [vmem:[#allocation6 + $0x48] sm:$0xff]
    %v99 = vld [vmem:[#allocation6 + $0x50] sm:$0xff]
    %v100 = vld [vmem:[#allocation6 + $0x58] sm:$0xff]
    %v101 = vld [vmem:[#allocation6 + $0x60] sm:$0xff]
    %v102 = vld [vmem:[#allocation6 + $0x68] sm:$0xff]
    %v103 = vld [vmem:[#allocation6 + $0x70] sm:$0xff]
    %v104 = vld [vmem:[#allocation6 + $0x78] sm:$0xff]
    %106 = vset.pattern.permute.xlu0 0
    %107 = vperm.xlu0 %106, %v79
    %v108 = vpop.permute.xlu0 %107
    %111 = vset.pattern.permute.xlu0 0
    %112 = vperm.xlu0 %111, %v80
    %v113 = vpop.permute.xlu0 %112
    %116 = vset.pattern.permute.xlu0 0
    %117 = vperm.xlu0 %116, %v81
    %v118 = vpop.permute.xlu0 %117
    %121 = vset.pattern.permute.xlu0 0
    %122 = vperm.xlu0 %121, %v82
    %v123 = vpop.permute.xlu0 %122
    %v125 = vmul.f32 %v89, %v108
    %v126 = vmul.f32 %v90, %v108
    %v127 = vmul.f32 %v91, %v108
    %v128 = vmul.f32 %v92, %v108
    %v129 = vmul.f32 %v93, %v113
    %v130 = vmul.f32 %v94, %v113
    %v131 = vmul.f32 %v95, %v113
    %v132 = vmul.f32 %v96, %v113
    %v133 = vmul.f32 %v97, %v118
    %v134 = vmul.f32 %v98, %v118
    %v135 = vmul.f32 %v99, %v118
    %v136 = vmul.f32 %v100, %v118
    %v137 = vmul.f32 %v101, %v123
    %v138 = vmul.f32 %v102, %v123
    %v139 = vmul.f32 %v103, %v123
    %v140 = vmul.f32 %v104, %v123
    %142 = vset.pattern.permute.xlu0 0
    %143 = vperm.xlu0 %142, %v83
    %v144 = vpop.permute.xlu0 %143
    %147 = vset.pattern.permute.xlu0 0
    %148 = vperm.xlu0 %147, %v84
    %v149 = vpop.permute.xlu0 %148
    %152 = vset.pattern.permute.xlu0 0
    %153 = vperm.xlu0 %152, %v85
    %v154 = vpop.permute.xlu0 %153
    %157 = vset.pattern.permute.xlu0 0
    %158 = vperm.xlu0 %157, %v86
    %v159 = vpop.permute.xlu0 %158
    %v161 = vadd.f32 %v125, %v144
    %v162 = vadd.f32 %v126, %v144
    %v163 = vadd.f32 %v127, %v144
    %v164 = vadd.f32 %v128, %v144
    %v165 = vadd.f32 %v129, %v149
    %v166 = vadd.f32 %v130, %v149
    %v167 = vadd.f32 %v131, %v149
    %v168 = vadd.f32 %v132, %v149
    %v169 = vadd.f32 %v133, %v154
    %v170 = vadd.f32 %v134, %v154
    %v171 = vadd.f32 %v135, %v154
    %v172 = vadd.f32 %v136, %v154
    %v173 = vadd.f32 %v137, %v159
    %v174 = vadd.f32 %v138, %v159
    %v175 = vadd.f32 %v139, %v159
    %v176 = vadd.f32 %v140, %v159
    %v177 = vmax.f32 %v161, 0.0
    %v178 = vmax.f32 %v162, 0.0
    %v179 = vmax.f32 %v163, 0.0
    %v180 = vmax.f32 %v164, 0.0
    %v181 = vmax.f32 %v165, 0.0
    %v182 = vmax.f32 %v166, 0.0
    %v183 = vmax.f32 %v167, 0.0
    %v184 = vmax.f32 %v168, 0.0
    %v185 = vmax.f32 %v169, 0.0
    %v186 = vmax.f32 %v170, 0.0
    %v187 = vmax.f32 %v171, 0.0
    %v188 = vmax.f32 %v172, 0.0
    %v189 = vmax.f32 %v173, 0.0
    %v190 = vmax.f32 %v174, 0.0
    %v191 = vmax.f32 %v175, 0.0
    %v192 = vmax.f32 %v176, 0.0
    %193 = vst [vmem:[#allocation2 + $0x8] sm:$0xff] %v177
    %194 = vst [vmem:[#allocation2 + $0x10] sm:$0xff] %v178
    %195 = vst [vmem:[#allocation2 + $0x18] sm:$0xff] %v179
    %196 = vst [vmem:[#allocation2 + $0x20] sm:$0xff] %v180
    %197 = vst [vmem:[#allocation2 + $0x38] sm:$0xff] %v181
    %198 = vst [vmem:[#allocation2 + $0x40] sm:$0xff] %v182
    %199 = vst [vmem:[#allocation2 + $0x48] sm:$0xff] %v183
    %200 = vst [vmem:[#allocation2 + $0x50] sm:$0xff] %v184
    %201 = vst [vmem:[#allocation2 + $0x68] sm:$0xff] %v185
    %202 = vst [vmem:[#allocation2 + $0x70] sm:$0xff] %v186
    %203 = vst [vmem:[#allocation2 + $0x78] sm:$0xff] %v187
    %204 = vst [vmem:[#allocation2 + $0x80] sm:$0xff] %v188
    %205 = vst [vmem:[#allocation2 + $0x98] sm:$0xff] %v189
    %206 = vst [vmem:[#allocation2 + $0xa0] sm:$0xff] %v190
    %207 = vst [vmem:[#allocation2 + $0xa8] sm:$0xff] %v191
    %208 = vst [vmem:[#allocation2 + $0xb0] sm:$0xff] %v192
    %v209 = vld [vmem:[#allocation2] sm:$0xff]
    %v210 = vld [vmem:[#allocation2 + $0x8] sm:$0xff]
    %v211 = vld [vmem:[#allocation2 + $0x10] sm:$0xff]
    %v212 = vld [vmem:[#allocation2 + $0x18] sm:$0xff]
    %v213 = vld [vmem:[#allocation2 + $0x20] sm:$0xff]
    %v214 = vld [vmem:[#allocation2 + $0x30] sm:$0xff]
    %v215 = vld [vmem:[#allocation2 + $0x38] sm:$0xff]
    %v216 = vld [vmem:[#allocation2 + $0x40] sm:$0xff]
    %v217 = vld [vmem:[#allocation2 + $0x48] sm:$0xff]
    %v218 = vld [vmem:[#allocation2 + $0x50] sm:$0xff]
    %v219 = vld [vmem:[#allocation2 + $0x60] sm:$0xff]
    %v220 = vld [vmem:[#allocation2 + $0x68] sm:$0xff]
    %v221 = vld [vmem:[#allocation2 + $0x70] sm:$0xff]
    %v222 = vld [vmem:[#allocation2 + $0x78] sm:$0xff]
    %v223 = vld [vmem:[#allocation2 + $0x80] sm:$0xff]
    %v224 = vld [vmem:[#allocation2 + $0x90] sm:$0xff]
    %v225 = vld [vmem:[#allocation2 + $0x98] sm:$0xff]
    %v226 = vld [vmem:[#allocation2 + $0xa0] sm:$0xff]
    %v227 = vld [vmem:[#allocation2 + $0xa8] sm:$0xff]
    %v228 = vld [vmem:[#allocation2 + $0xb0] sm:$0xff]
    %v229 = vld [vmem:[#allocation3] ss:$8 sm:$0xf]
    %v231 = vlaneseq
    %v232 = vshrl.u32 %v231, 7
    %v233 = vsub.s32 0, %v232
    %v234 = vrot.slane %v229, %v233
    %v235 = vlaneseq
    %v236 = vshrl.u32 %v235, 7
    %v237 = vsub.s32 1, %v236
    %v238 = vrot.slane %v229, %v237
    %v239 = vlaneseq
    %v240 = vshrl.u32 %v239, 7
    %v241 = vsub.s32 2, %v240
    %v242 = vrot.slane %v229, %v241
    %v243 = vlaneseq
    %v244 = vshrl.u32 %v243, 7
    %v245 = vsub.s32 3, %v244
    %v246 = vrot.slane %v229, %v245
    %247 = vrot.lane.b32.xlu0 %v234, 111
    %v248 = vpop.permute.xlu0 %247
    %249 = vrot.lane.b32.xlu0 %v238, 111
    %v250 = vpop.permute.xlu0 %249
    %251 = vrot.lane.b32.xlu0 %v242, 111
    %v252 = vpop.permute.xlu0 %251
    %253 = vrot.lane.b32.xlu0 %v246, 111
    %v254 = vpop.permute.xlu0 %253
    %vm255 = vcmask 908288
    %v256 = vsel %vm255, %v248, %v250
    %v257 = vsel %vm255, %v250, %v252
    %v258 = vsel %vm255, %v252, %v254
    %v264 = vmul.f32 %v209, %v248
    %v265 = vmul.f32 %v210, %v256
    %v266 = vmul.f32 %v211, %v257
    %v267 = vmul.f32 %v212, %v258
    %v268 = vmul.f32 %v213, %v254
    %v269 = vmul.f32 %v214, %v248
    %v270 = vmul.f32 %v215, %v256
    %v271 = vmul.f32 %v216, %v257
    %v272 = vmul.f32 %v217, %v258
    %v273 = vmul.f32 %v218, %v254
    %v274 = vmul.f32 %v219, %v248
    %v275 = vmul.f32 %v220, %v256
    %v276 = vmul.f32 %v221, %v257
    %v277 = vmul.f32 %v222, %v258
    %v278 = vmul.f32 %v223, %v254
    %v279 = vmul.f32 %v224, %v248
    %v280 = vmul.f32 %v225, %v256
    %v281 = vmul.f32 %v226, %v257
    %v282 = vmul.f32 %v227, %v258
    %v283 = vmul.f32 %v228, %v254
    %v284 = vld [vmem:[%s3] sm:$0xf]
    %v285 = vld [vmem:[%s3 + $0x4] sm:$0xf]
    %v286 = vpack.c.bf16 %v269, %v264
    %v287 = vpack.c.bf16 %v270, %v265
    %v288 = vpack.c.bf16 %v271, %v266
    %v289 = vpack.c.bf16 %v272, %v267
    %v290 = vpack.c.bf16 %v273, %v268
    %v291 = vpack.c.bf16 %v279, %v274
    %v292 = vpack.c.bf16 %v280, %v275
    %v293 = vpack.c.bf16 %v281, %v276
    %v294 = vpack.c.bf16 %v282, %v277
    %v295 = vpack.c.bf16 %v283, %v278
    %s296 = scalar_lea.vmem [#allocation3], 1
    %v297 = vld [vmem:[%s296] ss:$8 sm:$0xf]
    %v299 = vlaneseq
    %v300 = vshrl.u32 %v299, 7
    %v301 = vsub.s32 0, %v300
    %v302 = vrot.slane %v297, %v301
    %v303 = vlaneseq
    %v304 = vshrl.u32 %v303, 7
    %v305 = vsub.s32 1, %v304
    %v306 = vrot.slane %v297, %v305
    %v307 = vlaneseq
    %v308 = vshrl.u32 %v307, 7
    %v309 = vsub.s32 2, %v308
    %v310 = vrot.slane %v297, %v309
    %v311 = vlaneseq
    %v312 = vshrl.u32 %v311, 7
    %v313 = vsub.s32 3, %v312
    %v314 = vrot.slane %v297, %v313
    %315 = vrot.lane.b32.xlu0 %v302, 112
    %v316 = vpop.permute.xlu0 %315
    %317 = vrot.lane.b32.xlu0 %v306, 112
    %v318 = vpop.permute.xlu0 %317
    %319 = vrot.lane.b32.xlu0 %v310, 112
    %v320 = vpop.permute.xlu0 %319
    %321 = vrot.lane.b32.xlu0 %v314, 112
    %v322 = vpop.permute.xlu0 %321
    %vm323 = vcmask 916480
    %v324 = vsel %vm323, %v316, %v318
    %v325 = vsel %vm323, %v318, %v320
    %v326 = vsel %vm323, %v320, %v322
    %v332 = vmul.f32 %v209, %v316
    %v333 = vmul.f32 %v210, %v324
    %v334 = vmul.f32 %v211, %v325
    %v335 = vmul.f32 %v212, %v326
    %v336 = vmul.f32 %v213, %v322
    %v337 = vmul.f32 %v214, %v316
    %v338 = vmul.f32 %v215, %v324
    %v339 = vmul.f32 %v216, %v325
    %v340 = vmul.f32 %v217, %v326
    %v341 = vmul.f32 %v218, %v322
    %v342 = vmul.f32 %v219, %v316
    %v343 = vmul.f32 %v220, %v324
    %v344 = vmul.f32 %v221, %v325
    %v345 = vmul.f32 %v222, %v326
    %v346 = vmul.f32 %v223, %v322
    %v347 = vmul.f32 %v224, %v316
    %v348 = vmul.f32 %v225, %v324
    %v349 = vmul.f32 %v226, %v325
    %v350 = vmul.f32 %v227, %v326
    %v351 = vmul.f32 %v228, %v322
    %s352 = scalar_lea.vmem %s3, 8
    %v353 = vld [vmem:[%s352] sm:$0xf]
    %v354 = vld [vmem:[%s352 + $0x4] sm:$0xf]
    %v355 = vpack.c.bf16 %v337, %v332
    %v356 = vpack.c.bf16 %v338, %v333
    %v357 = vpack.c.bf16 %v339, %v334
    %v358 = vpack.c.bf16 %v340, %v335
    %v359 = vpack.c.bf16 %v341, %v336
    %v360 = vpack.c.bf16 %v347, %v342
    %v361 = vpack.c.bf16 %v348, %v343
    %v362 = vpack.c.bf16 %v349, %v344
    %v363 = vpack.c.bf16 %v350, %v345
    %v364 = vpack.c.bf16 %v351, %v346
    %v367 = vunpack.c.l.b16 %v353
    %v368 = vunpack.c.l.b16 %v354
    %v369 = vpack.c.b16 %v368, %v367
    %380 = vrot.lane.b32.xlu0 %v355, 16
    %v381 = vpop.permute.xlu0 %380
    %382 = vrot.lane.b32.xlu0 %v356, 16
    %v383 = vpop.permute.xlu0 %382
    %384 = vrot.lane.b32.xlu0 %v357, 16
    %v385 = vpop.permute.xlu0 %384
    %386 = vrot.lane.b32.xlu0 %v358, 16
    %v387 = vpop.permute.xlu0 %386
    %388 = vrot.lane.b32.xlu0 %v359, 16
    %v389 = vpop.permute.xlu0 %388
    %390 = vrot.lane.b32.xlu0 %v360, 16
    %v391 = vpop.permute.xlu0 %390
    %392 = vrot.lane.b32.xlu0 %v361, 16
    %v393 = vpop.permute.xlu0 %392
    %394 = vrot.lane.b32.xlu0 %v362, 16
    %v395 = vpop.permute.xlu0 %394
    %396 = vrot.lane.b32.xlu0 %v363, 16
    %v397 = vpop.permute.xlu0 %396
    %398 = vrot.lane.b32.xlu0 %v364, 16
    %v399 = vpop.permute.xlu0 %398
    %vm400 = vcmask 130048
    %v401 = vsel %vm400, %v381, %v383
    %v402 = vsel %vm400, %v383, %v385
    %v403 = vsel %vm400, %v385, %v387
    %v404 = vsel %vm400, %v387, %v389
    %v405 = vsel %vm400, %v391, %v393
    %v406 = vsel %vm400, %v393, %v395
    %v407 = vsel %vm400, %v395, %v397
    %v408 = vsel %vm400, %v397, %v399
    %vm417 = vcmask 261120
    %v419 = vsel %vm417, %v369, 0
    %421 = vmatprep.subr.bf16.mxu0 0
    %422 = vmatpush1.bf16.msra.mxu0 0
    %423 = vmatprep.subr.bf16.mxu0 0
    %424 = vmatpush1.bf16.msra.mxu0 0
    %425 = vmatprep.subr.bf16.mxu0 0
    %426 = vmatpush1.bf16.msra.mxu0 0
    %427 = vmatprep.subr.bf16.mxu0 0
    %428 = vmatpush1.bf16.msra.mxu0 0
    %429 = vmatprep.subr.bf16.mxu0 0
    %430 = vmatpush1.bf16.msra.mxu0 0
    %431 = vmatprep.subr.bf16.mxu0 0
    %432 = vmatpush1.bf16.msra.mxu0 0
    %433 = vmatprep.subr.bf16.mxu0 %v406
    %434 = vmatpush1.bf16.msra.mxu0 %v405
    %435 = vmatprep.subr.bf16.mxu0 %v402
    %436 = vmatpush1.bf16.msra.mxu0 %v401
    %437 = vmatprep.subr.bf16.mxu0 0
    %438 = vmatpush2.bf16.msra.mxu0 0
    %439 = vmatprep.subr.bf16.mxu0 0
    %440 = vmatpush2.bf16.msra.mxu0 0
    %441 = vmatprep.subr.bf16.mxu0 0
    %442 = vmatpush2.bf16.msra.mxu0 0
    %443 = vmatprep.subr.bf16.mxu0 0
    %444 = vmatpush2.bf16.msra.mxu0 0
    %445 = vmatprep.subr.bf16.mxu0 0
    %446 = vmatpush2.bf16.msra.mxu0 0
    %447 = vmatprep.subr.bf16.mxu0 0
    %448 = vmatpush2.bf16.msra.mxu0 0
    %449 = vmatprep.subr.bf16.mxu0 0
    %450 = vmatpush2.bf16.msra.mxu0 0
    %451 = vmatprep.subr.bf16.mxu0 0
    %452 = vmatpush2.bf16.msra.mxu0 0
    %453 = vmatprep.mubr.bf16.mxu0 0
    %454 = vmatmul.mubr.bf16.gmra.mxu0 %v419
    %v455 = vpop.f32.mrf.mxu0
    %v456 = vadd.f32 0.0, %v455
    %v457 = vpop.f32.mrf.mxu0
    %v458 = vadd.f32 0.0, %v457
    %v459 = vpop.f32.mrf.mxu0
    %v460 = vadd.f32 0.0, %v459
    %v461 = vpop.f32.mrf.mxu0
    %v462 = vadd.f32 0.0, %v461
    %463 = vdwg.mxu0
    %464 = vmatprep.subr.bf16.mxu0 0
    %465 = vmatpush1.bf16.msra.mxu0 0
    %466 = vmatprep.subr.bf16.mxu0 0
    %467 = vmatpush1.bf16.msra.mxu0 0
    %468 = vmatprep.subr.bf16.mxu0 0
    %469 = vmatpush1.bf16.msra.mxu0 0
    %470 = vmatprep.subr.bf16.mxu0 0
    %471 = vmatpush1.bf16.msra.mxu0 0
    %472 = vmatprep.subr.bf16.mxu0 0
    %473 = vmatpush1.bf16.msra.mxu0 0
    %474 = vmatprep.subr.bf16.mxu0 0
    %475 = vmatpush1.bf16.msra.mxu0 0
    %476 = vmatprep.subr.bf16.mxu0 %v408
    %477 = vmatpush1.bf16.msra.mxu0 %v407
    %478 = vmatprep.subr.bf16.mxu0 %v404
    %479 = vmatpush1.bf16.msra.mxu0 %v403
    %480 = vmatprep.subr.bf16.mxu0 0
    %481 = vmatpush2.bf16.msra.mxu0 0
    %482 = vmatprep.subr.bf16.mxu0 0
    %483 = vmatpush2.bf16.msra.mxu0 0
    %484 = vmatprep.subr.bf16.mxu0 0
    %485 = vmatpush2.bf16.msra.mxu0 0
    %486 = vmatprep.subr.bf16.mxu0 0
    %487 = vmatpush2.bf16.msra.mxu0 0
    %488 = vmatprep.subr.bf16.mxu0 0
    %489 = vmatpush2.bf16.msra.mxu0 0
    %490 = vmatprep.subr.bf16.mxu0 0
    %491 = vmatpush2.bf16.msra.mxu0 0
    %492 = vmatprep.subr.bf16.mxu0 0
    %493 = vmatpush2.bf16.msra.mxu0 0
    %494 = vmatprep.subr.bf16.mxu0 0
    %495 = vmatpush2.bf16.msra.mxu0 0
    %496 = vmatprep.mubr.bf16.mxu0 0
    %497 = vmatmul.mubr.bf16.gmra.mxu0 %v419
    %v498 = vpop.f32.mrf.mxu0
    %v499 = vadd.f32 0.0, %v498
    %v500 = vpop.f32.mrf.mxu0
    %v501 = vadd.f32 0.0, %v500
    %v502 = vpop.f32.mrf.mxu0
    %v503 = vadd.f32 0.0, %v502
    %v504 = vpop.f32.mrf.mxu0
    %v505 = vadd.f32 0.0, %v504
    %506 = vdwg.mxu0
    %v509 = vunpack.c.l.b16 %v284
    %v510 = vunpack.c.l.b16 %v285
    %v511 = vpack.c.b16 %v510, %v509
    %522 = vrot.lane.b32.xlu0 %v286, 17
    %v523 = vpop.permute.xlu0 %522
    %524 = vrot.lane.b32.xlu0 %v287, 17
    %v525 = vpop.permute.xlu0 %524
    %526 = vrot.lane.b32.xlu0 %v288, 17
    %v527 = vpop.permute.xlu0 %526
    %528 = vrot.lane.b32.xlu0 %v289, 17
    %v529 = vpop.permute.xlu0 %528
    %530 = vrot.lane.b32.xlu0 %v290, 17
    %v531 = vpop.permute.xlu0 %530
    %532 = vrot.lane.b32.xlu0 %v291, 17
    %v533 = vpop.permute.xlu0 %532
    %534 = vrot.lane.b32.xlu0 %v292, 17
    %v535 = vpop.permute.xlu0 %534
    %536 = vrot.lane.b32.xlu0 %v293, 17
    %v537 = vpop.permute.xlu0 %536
    %538 = vrot.lane.b32.xlu0 %v294, 17
    %v539 = vpop.permute.xlu0 %538
    %540 = vrot.lane.b32.xlu0 %v295, 17
    %v541 = vpop.permute.xlu0 %540
    %vm542 = vcmask 138240
    %v543 = vsel %vm542, %v523, %v525
    %v544 = vsel %vm542, %v525, %v527
    %v545 = vsel %vm542, %v527, %v529
    %v546 = vsel %vm542, %v529, %v531
    %v547 = vsel %vm542, %v533, %v535
    %v548 = vsel %vm542, %v535, %v537
    %v549 = vsel %vm542, %v537, %v539
    %v550 = vsel %vm542, %v539, %v541
    %v560 = vsel %vm417, %v511, 0
    %562 = vmatprep.subr.bf16.mxu0 0
    %563 = vmatpush1.bf16.msra.mxu0 0
    %564 = vmatprep.subr.bf16.mxu0 0
    %565 = vmatpush1.bf16.msra.mxu0 0
    %566 = vmatprep.subr.bf16.mxu0 0
    %567 = vmatpush1.bf16.msra.mxu0 0
    %568 = vmatprep.subr.bf16.mxu0 0
    %569 = vmatpush1.bf16.msra.mxu0 0
    %570 = vmatprep.subr.bf16.mxu0 0
    %571 = vmatpush1.bf16.msra.mxu0 0
    %572 = vmatprep.subr.bf16.mxu0 0
    %573 = vmatpush1.bf16.msra.mxu0 0
    %574 = vmatprep.subr.bf16.mxu0 %v548
    %575 = vmatpush1.bf16.msra.mxu0 %v547
    %576 = vmatprep.subr.bf16.mxu0 %v544
    %577 = vmatpush1.bf16.msra.mxu0 %v543
    %578 = vmatprep.subr.bf16.mxu0 0
    %579 = vmatpush2.bf16.msra.mxu0 0
    %580 = vmatprep.subr.bf16.mxu0 0
    %581 = vmatpush2.bf16.msra.mxu0 0
    %582 = vmatprep.subr.bf16.mxu0 0
    %583 = vmatpush2.bf16.msra.mxu0 0
    %584 = vmatprep.subr.bf16.mxu0 0
    %585 = vmatpush2.bf16.msra.mxu0 0
    %586 = vmatprep.subr.bf16.mxu0 0
    %587 = vmatpush2.bf16.msra.mxu0 0
    %588 = vmatprep.subr.bf16.mxu0 0
    %589 = vmatpush2.bf16.msra.mxu0 0
    %590 = vmatprep.subr.bf16.mxu0 0
    %591 = vmatpush2.bf16.msra.mxu0 0
    %592 = vmatprep.subr.bf16.mxu0 0
    %593 = vmatpush2.bf16.msra.mxu0 0
    %594 = vmatprep.mubr.bf16.mxu0 0
    %595 = vmatmul.mubr.bf16.gmra.mxu0 %v560
    %v596 = vpop.f32.mrf.mxu0
    %v597 = vadd.f32 %v456, %v596
    %v598 = vpop.f32.mrf.mxu0
    %v599 = vadd.f32 %v458, %v598
    %v600 = vpop.f32.mrf.mxu0
    %v601 = vadd.f32 %v460, %v600
    %v602 = vpop.f32.mrf.mxu0
    %v603 = vadd.f32 %v462, %v602
    %604 = vdwg.mxu0
    %605 = vmatprep.subr.bf16.mxu0 0
    %606 = vmatpush1.bf16.msra.mxu0 0
    %607 = vmatprep.subr.bf16.mxu0 0
    %608 = vmatpush1.bf16.msra.mxu0 0
    %609 = vmatprep.subr.bf16.mxu0 0
    %610 = vmatpush1.bf16.msra.mxu0 0
    %611 = vmatprep.subr.bf16.mxu0 0
    %612 = vmatpush1.bf16.msra.mxu0 0
    %613 = vmatprep.subr.bf16.mxu0 0
    %614 = vmatpush1.bf16.msra.mxu0 0
    %615 = vmatprep.subr.bf16.mxu0 0
    %616 = vmatpush1.bf16.msra.mxu0 0
    %617 = vmatprep.subr.bf16.mxu0 %v550
    %618 = vmatpush1.bf16.msra.mxu0 %v549
    %619 = vmatprep.subr.bf16.mxu0 %v546
    %620 = vmatpush1.bf16.msra.mxu0 %v545
    %621 = vmatprep.subr.bf16.mxu0 0
    %622 = vmatpush2.bf16.msra.mxu0 0
    %623 = vmatprep.subr.bf16.mxu0 0
    %624 = vmatpush2.bf16.msra.mxu0 0
    %625 = vmatprep.subr.bf16.mxu0 0
    %626 = vmatpush2.bf16.msra.mxu0 0
    %627 = vmatprep.subr.bf16.mxu0 0
    %628 = vmatpush2.bf16.msra.mxu0 0
    %629 = vmatprep.subr.bf16.mxu0 0
    %630 = vmatpush2.bf16.msra.mxu0 0
    %631 = vmatprep.subr.bf16.mxu0 0
    %632 = vmatpush2.bf16.msra.mxu0 0
    %633 = vmatprep.subr.bf16.mxu0 0
    %634 = vmatpush2.bf16.msra.mxu0 0
    %635 = vmatprep.subr.bf16.mxu0 0
    %636 = vmatpush2.bf16.msra.mxu0 0
    %637 = vmatprep.mubr.bf16.mxu0 0
    %638 = vmatmul.mubr.bf16.gmra.mxu0 %v560
    %v639 = vpop.f32.mrf.mxu0
    %v640 = vadd.f32 %v499, %v639
    %v641 = vpop.f32.mrf.mxu0
    %v642 = vadd.f32 %v501, %v641
    %v643 = vpop.f32.mrf.mxu0
    %v644 = vadd.f32 %v503, %v643
    %v645 = vpop.f32.mrf.mxu0
    %v646 = vadd.f32 %v505, %v645
    %647 = vdwg.mxu0
    %s648 = scalar_lea.vmem [#allocation3], 2
    %v649 = vld [vmem:[%s648] ss:$8 sm:$0xf]
    %v651 = vlaneseq
    %v652 = vshrl.u32 %v651, 7
    %v653 = vsub.s32 0, %v652
    %v654 = vrot.slane %v649, %v653
    %v655 = vlaneseq
    %v656 = vshrl.u32 %v655, 7
    %v657 = vsub.s32 1, %v656
    %v658 = vrot.slane %v649, %v657
    %v659 = vlaneseq
    %v660 = vshrl.u32 %v659, 7
    %v661 = vsub.s32 2, %v660
    %v662 = vrot.slane %v649, %v661
    %v663 = vlaneseq
    %v664 = vshrl.u32 %v663, 7
    %v665 = vsub.s32 3, %v664
    %v666 = vrot.slane %v649, %v665
    %667 = vrot.lane.b32.xlu0 %v654, 113
    %v668 = vpop.permute.xlu0 %667
    %669 = vrot.lane.b32.xlu0 %v658, 113
    %v670 = vpop.permute.xlu0 %669
    %671 = vrot.lane.b32.xlu0 %v662, 113
    %v672 = vpop.permute.xlu0 %671
    %673 = vrot.lane.b32.xlu0 %v666, 113
    %v674 = vpop.permute.xlu0 %673
    %vm675 = vcmask 924672
    %v676 = vsel %vm675, %v668, %v670
    %v677 = vsel %vm675, %v670, %v672
    %v678 = vsel %vm675, %v672, %v674
    %v684 = vmul.f32 %v209, %v668
    %v685 = vmul.f32 %v210, %v676
    %v686 = vmul.f32 %v211, %v677
    %v687 = vmul.f32 %v212, %v678
    %v688 = vmul.f32 %v213, %v674
    %v689 = vmul.f32 %v214, %v668
    %v690 = vmul.f32 %v215, %v676
    %v691 = vmul.f32 %v216, %v677
    %v692 = vmul.f32 %v217, %v678
    %v693 = vmul.f32 %v218, %v674
    %v694 = vmul.f32 %v219, %v668
    %v695 = vmul.f32 %v220, %v676
    %v696 = vmul.f32 %v221, %v677
    %v697 = vmul.f32 %v222, %v678
    %v698 = vmul.f32 %v223, %v674
    %v699 = vmul.f32 %v224, %v668
    %v700 = vmul.f32 %v225, %v676
    %v701 = vmul.f32 %v226, %v677
    %v702 = vmul.f32 %v227, %v678
    %v703 = vmul.f32 %v228, %v674
    %s704 = scalar_lea.vmem %s3, 16
    %v705 = vld [vmem:[%s704] sm:$0xf]
    %v706 = vld [vmem:[%s704 + $0x4] sm:$0xf]
    %v707 = vpack.c.bf16 %v689, %v684
    %v708 = vpack.c.bf16 %v690, %v685
    %v709 = vpack.c.bf16 %v691, %v686
    %v710 = vpack.c.bf16 %v692, %v687
    %v711 = vpack.c.bf16 %v693, %v688
    %v712 = vpack.c.bf16 %v699, %v694
    %v713 = vpack.c.bf16 %v700, %v695
    %v714 = vpack.c.bf16 %v701, %v696
    %v715 = vpack.c.bf16 %v702, %v697
    %v716 = vpack.c.bf16 %v703, %v698
    %v719 = vunpack.c.l.b16 %v705
    %v720 = vunpack.c.l.b16 %v706
    %v721 = vpack.c.b16 %v720, %v719
    %732 = vrot.lane.b32.xlu0 %v707, 15
    %v733 = vpop.permute.xlu0 %732
    %734 = vrot.lane.b32.xlu0 %v708, 15
    %v735 = vpop.permute.xlu0 %734
    %736 = vrot.lane.b32.xlu0 %v709, 15
    %v737 = vpop.permute.xlu0 %736
    %738 = vrot.lane.b32.xlu0 %v710, 15
    %v739 = vpop.permute.xlu0 %738
    %740 = vrot.lane.b32.xlu0 %v711, 15
    %v741 = vpop.permute.xlu0 %740
    %742 = vrot.lane.b32.xlu0 %v712, 15
    %v743 = vpop.permute.xlu0 %742
    %744 = vrot.lane.b32.xlu0 %v713, 15
    %v745 = vpop.permute.xlu0 %744
    %746 = vrot.lane.b32.xlu0 %v714, 15
    %v747 = vpop.permute.xlu0 %746
    %748 = vrot.lane.b32.xlu0 %v715, 15
    %v749 = vpop.permute.xlu0 %748
    %750 = vrot.lane.b32.xlu0 %v716, 15
    %v751 = vpop.permute.xlu0 %750
    %vm752 = vcmask 121856
    %v753 = vsel %vm752, %v733, %v735
    %v754 = vsel %vm752, %v735, %v737
    %v755 = vsel %vm752, %v737, %v739
    %v756 = vsel %vm752, %v739, %v741
    %v757 = vsel %vm752, %v743, %v745
    %v758 = vsel %vm752, %v745, %v747
    %v759 = vsel %vm752, %v747, %v749
    %v760 = vsel %vm752, %v749, %v751
    %v770 = vsel %vm417, %v721, 0
    %772 = vmatprep.subr.bf16.mxu0 0
    %773 = vmatpush1.bf16.msra.mxu0 0
    %774 = vmatprep.subr.bf16.mxu0 0
    %775 = vmatpush1.bf16.msra.mxu0 0
    %776 = vmatprep.subr.bf16.mxu0 0
    %777 = vmatpush1.bf16.msra.mxu0 0
    %778 = vmatprep.subr.bf16.mxu0 0
    %779 = vmatpush1.bf16.msra.mxu0 0
    %780 = vmatprep.subr.bf16.mxu0 0
    %781 = vmatpush1.bf16.msra.mxu0 0
    %782 = vmatprep.subr.bf16.mxu0 0
    %783 = vmatpush1.bf16.msra.mxu0 0
    %784 = vmatprep.subr.bf16.mxu0 %v758
    %785 = vmatpush1.bf16.msra.mxu0 %v757
    %786 = vmatprep.subr.bf16.mxu0 %v754
    %787 = vmatpush1.bf16.msra.mxu0 %v753
    %788 = vmatprep.subr.bf16.mxu0 0
    %789 = vmatpush2.bf16.msra.mxu0 0
    %790 = vmatprep.subr.bf16.mxu0 0
    %791 = vmatpush2.bf16.msra.mxu0 0
    %792 = vmatprep.subr.bf16.mxu0 0
    %793 = vmatpush2.bf16.msra.mxu0 0
    %794 = vmatprep.subr.bf16.mxu0 0
    %795 = vmatpush2.bf16.msra.mxu0 0
    %796 = vmatprep.subr.bf16.mxu0 0
    %797 = vmatpush2.bf16.msra.mxu0 0
    %798 = vmatprep.subr.bf16.mxu0 0
    %799 = vmatpush2.bf16.msra.mxu0 0
    %800 = vmatprep.subr.bf16.mxu0 0
    %801 = vmatpush2.bf16.msra.mxu0 0
    %802 = vmatprep.subr.bf16.mxu0 0
    %803 = vmatpush2.bf16.msra.mxu0 0
    %804 = vmatprep.mubr.bf16.mxu0 0
    %805 = vmatmul.mubr.bf16.gmra.mxu0 %v770
    %v806 = vpop.f32.mrf.mxu0
    %v807 = vadd.f32 0.0, %v806
    %v808 = vpop.f32.mrf.mxu0
    %v809 = vadd.f32 0.0, %v808
    %v810 = vpop.f32.mrf.mxu0
    %v811 = vadd.f32 0.0, %v810
    %v812 = vpop.f32.mrf.mxu0
    %v813 = vadd.f32 0.0, %v812
    %814 = vdwg.mxu0
    %815 = vmatprep.subr.bf16.mxu0 0
    %816 = vmatpush1.bf16.msra.mxu0 0
    %817 = vmatprep.subr.bf16.mxu0 0
    %818 = vmatpush1.bf16.msra.mxu0 0
    %819 = vmatprep.subr.bf16.mxu0 0
    %820 = vmatpush1.bf16.msra.mxu0 0
    %821 = vmatprep.subr.bf16.mxu0 0
    %822 = vmatpush1.bf16.msra.mxu0 0
    %823 = vmatprep.subr.bf16.mxu0 0
    %824 = vmatpush1.bf16.msra.mxu0 0
    %825 = vmatprep.subr.bf16.mxu0 0
    %826 = vmatpush1.bf16.msra.mxu0 0
    %827 = vmatprep.subr.bf16.mxu0 %v760
    %828 = vmatpush1.bf16.msra.mxu0 %v759
    %829 = vmatprep.subr.bf16.mxu0 %v756
    %830 = vmatpush1.bf16.msra.mxu0 %v755
    %831 = vmatprep.subr.bf16.mxu0 0
    %832 = vmatpush2.bf16.msra.mxu0 0
    %833 = vmatprep.subr.bf16.mxu0 0
    %834 = vmatpush2.bf16.msra.mxu0 0
    %835 = vmatprep.subr.bf16.mxu0 0
    %836 = vmatpush2.bf16.msra.mxu0 0
    %837 = vmatprep.subr.bf16.mxu0 0
    %838 = vmatpush2.bf16.msra.mxu0 0
    %839 = vmatprep.subr.bf16.mxu0 0
    %840 = vmatpush2.bf16.msra.mxu0 0
    %841 = vmatprep.subr.bf16.mxu0 0
    %842 = vmatpush2.bf16.msra.mxu0 0
    %843 = vmatprep.subr.bf16.mxu0 0
    %844 = vmatpush2.bf16.msra.mxu0 0
    %845 = vmatprep.subr.bf16.mxu0 0
    %846 = vmatpush2.bf16.msra.mxu0 0
    %847 = vmatprep.mubr.bf16.mxu0 0
    %848 = vmatmul.mubr.bf16.gmra.mxu0 %v770
    %v849 = vpop.f32.mrf.mxu0
    %v850 = vadd.f32 0.0, %v849
    %v851 = vpop.f32.mrf.mxu0
    %v852 = vadd.f32 0.0, %v851
    %v853 = vpop.f32.mrf.mxu0
    %v854 = vadd.f32 0.0, %v853
    %v855 = vpop.f32.mrf.mxu0
    %v856 = vadd.f32 0.0, %v855
    %857 = vdwg.mxu0
    %v858 = vadd.f32 %v597, %v807
    %v859 = vadd.f32 %v599, %v809
    %v860 = vadd.f32 %v640, %v850
    %v861 = vadd.f32 %v642, %v852
    %v862 = vadd.f32 %v601, %v811
    %v863 = vadd.f32 %v603, %v813
    %v864 = vadd.f32 %v644, %v854
    %v865 = vadd.f32 %v646, %v856
    %s866 = scalar_lea.vmem [#allocation3], 3
    %v867 = vld [vmem:[%s866] ss:$8 sm:$0xf]
    %v869 = vlaneseq
    %v870 = vshrl.u32 %v869, 7
    %v871 = vsub.s32 0, %v870
    %v872 = vrot.slane %v867, %v871
    %v873 = vlaneseq
    %v874 = vshrl.u32 %v873, 7
    %v875 = vsub.s32 1, %v874
    %v876 = vrot.slane %v867, %v875
    %v877 = vlaneseq
    %v878 = vshrl.u32 %v877, 7
    %v879 = vsub.s32 2, %v878
    %v880 = vrot.slane %v867, %v879
    %v881 = vlaneseq
    %v882 = vshrl.u32 %v881, 7
    %v883 = vsub.s32 3, %v882
    %v884 = vrot.slane %v867, %v883
    %885 = vrot.lane.b32.xlu0 %v872, 127
    %v886 = vpop.permute.xlu0 %885
    %887 = vrot.lane.b32.xlu0 %v876, 127
    %v888 = vpop.permute.xlu0 %887
    %889 = vrot.lane.b32.xlu0 %v880, 127
    %v890 = vpop.permute.xlu0 %889
    %891 = vrot.lane.b32.xlu0 %v884, 127
    %v892 = vpop.permute.xlu0 %891
    %vm893 = vcmask 1039360
    %v894 = vsel %vm893, %v886, %v888
    %v895 = vsel %vm893, %v888, %v890
    %v896 = vsel %vm893, %v890, %v892
    %v902 = vmul.f32 %v209, %v886
    %v903 = vmul.f32 %v210, %v894
    %v904 = vmul.f32 %v211, %v895
    %v905 = vmul.f32 %v212, %v896
    %v906 = vmul.f32 %v213, %v892
    %v907 = vmul.f32 %v214, %v886
    %v908 = vmul.f32 %v215, %v894
    %v909 = vmul.f32 %v216, %v895
    %v910 = vmul.f32 %v217, %v896
    %v911 = vmul.f32 %v218, %v892
    %v912 = vmul.f32 %v219, %v886
    %v913 = vmul.f32 %v220, %v894
    %v914 = vmul.f32 %v221, %v895
    %v915 = vmul.f32 %v222, %v896
    %v916 = vmul.f32 %v223, %v892
    %v917 = vmul.f32 %v224, %v886
    %v918 = vmul.f32 %v225, %v894
    %v919 = vmul.f32 %v226, %v895
    %v920 = vmul.f32 %v227, %v896
    %v921 = vmul.f32 %v228, %v892
    %s922 = scalar_lea.vmem %s3, 24
    %v923 = vld [vmem:[%s922] sm:$0xf]
    %v924 = vld [vmem:[%s922 + $0x4] sm:$0xf]
    %v925 = vpack.c.bf16 %v907, %v902
    %v926 = vpack.c.bf16 %v908, %v903
    %v927 = vpack.c.bf16 %v909, %v904
    %v928 = vpack.c.bf16 %v910, %v905
    %v929 = vpack.c.bf16 %v911, %v906
    %v930 = vpack.c.bf16 %v917, %v912
    %v931 = vpack.c.bf16 %v918, %v913
    %v932 = vpack.c.bf16 %v919, %v914
    %v933 = vpack.c.bf16 %v920, %v915
    %v934 = vpack.c.bf16 %v921, %v916
    %v937 = vunpack.c.l.b16 %v923
    %v938 = vunpack.c.l.b16 %v924
    %v939 = vpack.c.b16 %v938, %v937
    %950 = vrot.lane.b32.xlu0 %v925, 1
    %v951 = vpop.permute.xlu0 %950
    %952 = vrot.lane.b32.xlu0 %v926, 1
    %v953 = vpop.permute.xlu0 %952
    %954 = vrot.lane.b32.xlu0 %v927, 1
    %v955 = vpop.permute.xlu0 %954
    %956 = vrot.lane.b32.xlu0 %v928, 1
    %v957 = vpop.permute.xlu0 %956
    %958 = vrot.lane.b32.xlu0 %v929, 1
    %v959 = vpop.permute.xlu0 %958
    %960 = vrot.lane.b32.xlu0 %v930, 1
    %v961 = vpop.permute.xlu0 %960
    %962 = vrot.lane.b32.xlu0 %v931, 1
    %v963 = vpop.permute.xlu0 %962
    %964 = vrot.lane.b32.xlu0 %v932, 1
    %v965 = vpop.permute.xlu0 %964
    %966 = vrot.lane.b32.xlu0 %v933, 1
    %v967 = vpop.permute.xlu0 %966
    %968 = vrot.lane.b32.xlu0 %v934, 1
    %v969 = vpop.permute.xlu0 %968
    %vm970 = vcmask 7168
    %v971 = vsel %vm970, %v951, %v953
    %v972 = vsel %vm970, %v953, %v955
    %v973 = vsel %vm970, %v955, %v957
    %v974 = vsel %vm970, %v957, %v959
    %v975 = vsel %vm970, %v961, %v963
    %v976 = vsel %vm970, %v963, %v965
    %v977 = vsel %vm970, %v965, %v967
    %v978 = vsel %vm970, %v967, %v969
    %v988 = vsel %vm417, %v939, 0
    %990 = vmatprep.subr.bf16.mxu0 0
    %991 = vmatpush1.bf16.msra.mxu0 0
    %992 = vmatprep.subr.bf16.mxu0 0
    %993 = vmatpush1.bf16.msra.mxu0 0
    %994 = vmatprep.subr.bf16.mxu0 0
    %995 = vmatpush1.bf16.msra.mxu0 0
    %996 = vmatprep.subr.bf16.mxu0 0
    %997 = vmatpush1.bf16.msra.mxu0 0
    %998 = vmatprep.subr.bf16.mxu0 0
    %999 = vmatpush1.bf16.msra.mxu0 0
    %1000 = vmatprep.subr.bf16.mxu0 0
    %1001 = vmatpush1.bf16.msra.mxu0 0
    %1002 = vmatprep.subr.bf16.mxu0 %v976
    %1003 = vmatpush1.bf16.msra.mxu0 %v975
    %1004 = vmatprep.subr.bf16.mxu0 %v972
    %1005 = vmatpush1.bf16.msra.mxu0 %v971
    %1006 = vmatprep.subr.bf16.mxu0 0
    %1007 = vmatpush2.bf16.msra.mxu0 0
    %1008 = vmatprep.subr.bf16.mxu0 0
    %1009 = vmatpush2.bf16.msra.mxu0 0
    %1010 = vmatprep.subr.bf16.mxu0 0
    %1011 = vmatpush2.bf16.msra.mxu0 0
    %1012 = vmatprep.subr.bf16.mxu0 0
    %1013 = vmatpush2.bf16.msra.mxu0 0
    %1014 = vmatprep.subr.bf16.mxu0 0
    %1015 = vmatpush2.bf16.msra.mxu0 0
    %1016 = vmatprep.subr.bf16.mxu0 0
    %1017 = vmatpush2.bf16.msra.mxu0 0
    %1018 = vmatprep.subr.bf16.mxu0 0
    %1019 = vmatpush2.bf16.msra.mxu0 0
    %1020 = vmatprep.subr.bf16.mxu0 0
    %1021 = vmatpush2.bf16.msra.mxu0 0
    %1022 = vmatprep.mubr.bf16.mxu0 0
    %1023 = vmatmul.mubr.bf16.gmra.mxu0 %v988
    %v1024 = vpop.f32.mrf.mxu0
    %v1025 = vadd.f32 0.0, %v1024
    %v1026 = vpop.f32.mrf.mxu0
    %v1027 = vadd.f32 0.0, %v1026
    %v1028 = vpop.f32.mrf.mxu0
    %v1029 = vadd.f32 0.0, %v1028
    %v1030 = vpop.f32.mrf.mxu0
    %v1031 = vadd.f32 0.0, %v1030
    %1032 = vdwg.mxu0
    %1033 = vmatprep.subr.bf16.mxu0 0
    %1034 = vmatpush1.bf16.msra.mxu0 0
    %1035 = vmatprep.subr.bf16.mxu0 0
    %1036 = vmatpush1.bf16.msra.mxu0 0
    %1037 = vmatprep.subr.bf16.mxu0 0
    %1038 = vmatpush1.bf16.msra.mxu0 0
    %1039 = vmatprep.subr.bf16.mxu0 0
    %1040 = vmatpush1.bf16.msra.mxu0 0
    %1041 = vmatprep.subr.bf16.mxu0 0
    %1042 = vmatpush1.bf16.msra.mxu0 0
    %1043 = vmatprep.subr.bf16.mxu0 0
    %1044 = vmatpush1.bf16.msra.mxu0 0
    %1045 = vmatprep.subr.bf16.mxu0 %v978
    %1046 = vmatpush1.bf16.msra.mxu0 %v977
    %1047 = vmatprep.subr.bf16.mxu0 %v974
    %1048 = vmatpush1.bf16.msra.mxu0 %v973
    %1049 = vmatprep.subr.bf16.mxu0 0
    %1050 = vmatpush2.bf16.msra.mxu0 0
    %1051 = vmatprep.subr.bf16.mxu0 0
    %1052 = vmatpush2.bf16.msra.mxu0 0
    %1053 = vmatprep.subr.bf16.mxu0 0
    %1054 = vmatpush2.bf16.msra.mxu0 0
    %1055 = vmatprep.subr.bf16.mxu0 0
    %1056 = vmatpush2.bf16.msra.mxu0 0
    %1057 = vmatprep.subr.bf16.mxu0 0
    %1058 = vmatpush2.bf16.msra.mxu0 0
    %1059 = vmatprep.subr.bf16.mxu0 0
    %1060 = vmatpush2.bf16.msra.mxu0 0
    %1061 = vmatprep.subr.bf16.mxu0 0
    %1062 = vmatpush2.bf16.msra.mxu0 0
    %1063 = vmatprep.subr.bf16.mxu0 0
    %1064 = vmatpush2.bf16.msra.mxu0 0
    %1065 = vmatprep.mubr.bf16.mxu0 0
    %1066 = vmatmul.mubr.bf16.gmra.mxu0 %v988
    %v1067 = vpop.f32.mrf.mxu0
    %v1068 = vadd.f32 0.0, %v1067
    %v1069 = vpop.f32.mrf.mxu0
    %v1070 = vadd.f32 0.0, %v1069
    %v1071 = vpop.f32.mrf.mxu0
    %v1072 = vadd.f32 0.0, %v1071
    %v1073 = vpop.f32.mrf.mxu0
    %v1074 = vadd.f32 0.0, %v1073
    %1075 = vdwg.mxu0
    %v1076 = vadd.f32 %v858, %v1025
    %v1077 = vadd.f32 %v859, %v1027
    %v1078 = vadd.f32 %v860, %v1068
    %v1079 = vadd.f32 %v861, %v1070
    %v1080 = vadd.f32 %v862, %v1029
    %v1081 = vadd.f32 %v863, %v1031
    %v1082 = vadd.f32 %v864, %v1072
    %v1083 = vadd.f32 %v865, %v1074
    %s1084 = scalar_lea.vmem %s3, 32
    %v1085 = vld [vmem:[%s1084] sm:$0xf]
    %v1086 = vld [vmem:[%s1084 + $0x4] sm:$0xf]
    %v1087 = vpack.c.bf16 %v215, %v210
    %v1088 = vpack.c.bf16 %v216, %v211
    %v1089 = vpack.c.bf16 %v217, %v212
    %v1090 = vpack.c.bf16 %v218, %v213
    %v1091 = vpack.c.bf16 %v225, %v220
    %v1092 = vpack.c.bf16 %v226, %v221
    %v1093 = vpack.c.bf16 %v227, %v222
    %v1094 = vpack.c.bf16 %v228, %v223
    %v1097 = vunpack.c.l.b16 %v1085
    %v1098 = vunpack.c.l.b16 %v1086
    %v1099 = vpack.c.b16 %v1098, %v1097
    %v1101 = vsel %vm417, %v1099, 0
    %1103 = vmatprep.subr.bf16.mxu0 0
    %1104 = vmatpush1.bf16.msra.mxu0 0
    %1105 = vmatprep.subr.bf16.mxu0 0
    %1106 = vmatpush1.bf16.msra.mxu0 0
    %1107 = vmatprep.subr.bf16.mxu0 0
    %1108 = vmatpush1.bf16.msra.mxu0 0
    %1109 = vmatprep.subr.bf16.mxu0 0
    %1110 = vmatpush1.bf16.msra.mxu0 0
    %1111 = vmatprep.subr.bf16.mxu0 0
    %1112 = vmatpush1.bf16.msra.mxu0 0
    %1113 = vmatprep.subr.bf16.mxu0 0
    %1114 = vmatpush1.bf16.msra.mxu0 0
    %1115 = vmatprep.subr.bf16.mxu0 %v1092
    %1116 = vmatpush1.bf16.msra.mxu0 %v1091
    %1117 = vmatprep.subr.bf16.mxu0 %v1088
    %1118 = vmatpush1.bf16.msra.mxu0 %v1087
    %1119 = vmatprep.subr.bf16.mxu0 0
    %1120 = vmatpush2.bf16.msra.mxu0 0
    %1121 = vmatprep.subr.bf16.mxu0 0
    %1122 = vmatpush2.bf16.msra.mxu0 0
    %1123 = vmatprep.subr.bf16.mxu0 0
    %1124 = vmatpush2.bf16.msra.mxu0 0
    %1125 = vmatprep.subr.bf16.mxu0 0
    %1126 = vmatpush2.bf16.msra.mxu0 0
    %1127 = vmatprep.subr.bf16.mxu0 0
    %1128 = vmatpush2.bf16.msra.mxu0 0
    %1129 = vmatprep.subr.bf16.mxu0 0
    %1130 = vmatpush2.bf16.msra.mxu0 0
    %1131 = vmatprep.subr.bf16.mxu0 0
    %1132 = vmatpush2.bf16.msra.mxu0 0
    %1133 = vmatprep.subr.bf16.mxu0 0
    %1134 = vmatpush2.bf16.msra.mxu0 0
    %1135 = vmatprep.mubr.bf16.mxu0 0
    %1136 = vmatmul.mubr.bf16.gmra.mxu0 %v1101
    %v1137 = vpop.f32.mrf.mxu0
    %v1138 = vadd.f32 0.0, %v1137
    %v1139 = vpop.f32.mrf.mxu0
    %v1140 = vadd.f32 0.0, %v1139
    %v1141 = vpop.f32.mrf.mxu0
    %v1142 = vadd.f32 0.0, %v1141
    %v1143 = vpop.f32.mrf.mxu0
    %v1144 = vadd.f32 0.0, %v1143
    %1145 = vdwg.mxu0
    %1146 = vmatprep.subr.bf16.mxu0 0
    %1147 = vmatpush1.bf16.msra.mxu0 0
    %1148 = vmatprep.subr.bf16.mxu0 0
    %1149 = vmatpush1.bf16.msra.mxu0 0
    %1150 = vmatprep.subr.bf16.mxu0 0
    %1151 = vmatpush1.bf16.msra.mxu0 0
    %1152 = vmatprep.subr.bf16.mxu0 0
    %1153 = vmatpush1.bf16.msra.mxu0 0
    %1154 = vmatprep.subr.bf16.mxu0 0
    %1155 = vmatpush1.bf16.msra.mxu0 0
    %1156 = vmatprep.subr.bf16.mxu0 0
    %1157 = vmatpush1.bf16.msra.mxu0 0
    %1158 = vmatprep.subr.bf16.mxu0 %v1094
    %1159 = vmatpush1.bf16.msra.mxu0 %v1093
    %1160 = vmatprep.subr.bf16.mxu0 %v1090
    %1161 = vmatpush1.bf16.msra.mxu0 %v1089
    %1162 = vmatprep.subr.bf16.mxu0 0
    %1163 = vmatpush2.bf16.msra.mxu0 0
    %1164 = vmatprep.subr.bf16.mxu0 0
    %1165 = vmatpush2.bf16.msra.mxu0 0
    %1166 = vmatprep.subr.bf16.mxu0 0
    %1167 = vmatpush2.bf16.msra.mxu0 0
    %1168 = vmatprep.subr.bf16.mxu0 0
    %1169 = vmatpush2.bf16.msra.mxu0 0
    %1170 = vmatprep.subr.bf16.mxu0 0
    %1171 = vmatpush2.bf16.msra.mxu0 0
    %1172 = vmatprep.subr.bf16.mxu0 0
    %1173 = vmatpush2.bf16.msra.mxu0 0
    %1174 = vmatprep.subr.bf16.mxu0 0
    %1175 = vmatpush2.bf16.msra.mxu0 0
    %1176 = vmatprep.subr.bf16.mxu0 0
    %1177 = vmatpush2.bf16.msra.mxu0 0
    %1178 = vmatprep.mubr.bf16.mxu0 0
    %1179 = vmatmul.mubr.bf16.gmra.mxu0 %v1101
    %v1180 = vpop.f32.mrf.mxu0
    %v1181 = vadd.f32 0.0, %v1180
    %v1182 = vpop.f32.mrf.mxu0
    %v1183 = vadd.f32 0.0, %v1182
    %v1184 = vpop.f32.mrf.mxu0
    %v1185 = vadd.f32 0.0, %v1184
    %v1186 = vpop.f32.mrf.mxu0
    %v1187 = vadd.f32 0.0, %v1186
    %1188 = vdwg.mxu0
    %v1189 = vadd.f32 %v1076, %v1138
    %v1190 = vadd.f32 %v1077, %v1140
    %v1191 = vadd.f32 %v1078, %v1181
    %v1192 = vadd.f32 %v1079, %v1183
    %v1193 = vadd.f32 %v1080, %v1142
    %v1194 = vadd.f32 %v1081, %v1144
    %v1195 = vadd.f32 %v1082, %v1185
    %v1196 = vadd.f32 %v1083, %v1187
    %v1197 = vld [vmem:[#allocation2 + $0x8] sm:$0xff]
    %v1198 = vld [vmem:[#allocation2 + $0x10] sm:$0xff]
    %v1199 = vld [vmem:[#allocation2 + $0x18] sm:$0xff]
    %v1200 = vld [vmem:[#allocation2 + $0x20] sm:$0xff]
    %v1201 = vld [vmem:[#allocation2 + $0x28] sm:$0xff]
    %v1202 = vld [vmem:[#allocation2 + $0x38] sm:$0xff]
    %v1203 = vld [vmem:[#allocation2 + $0x40] sm:$0xff]
    %v1204 = vld [vmem:[#allocation2 + $0x48] sm:$0xff]
    %v1205 = vld [vmem:[#allocation2 + $0x50] sm:$0xff]
    %v1206 = vld [vmem:[#allocation2 + $0x58] sm:$0xff]
    %v1207 = vld [vmem:[#allocation2 + $0x68] sm:$0xff]
    %v1208 = vld [vmem:[#allocation2 + $0x70] sm:$0xff]
    %v1209 = vld [vmem:[#allocation2 + $0x78] sm:$0xff]
    %v1210 = vld [vmem:[#allocation2 + $0x80] sm:$0xff]
    %v1211 = vld [vmem:[#allocation2 + $0x88] sm:$0xff]
    %v1212 = vld [vmem:[#allocation2 + $0x98] sm:$0xff]
    %v1213 = vld [vmem:[#allocation2 + $0xa0] sm:$0xff]
    %v1214 = vld [vmem:[#allocation2 + $0xa8] sm:$0xff]
    %v1215 = vld [vmem:[#allocation2 + $0xb0] sm:$0xff]
    %v1216 = vld [vmem:[#allocation2 + $0xb8] sm:$0xff]
    %s1217 = scalar_lea.vmem [#allocation3], 5
    %v1218 = vld [vmem:[%s1217] ss:$8 sm:$0xf]
    %v1220 = vlaneseq
    %v1221 = vshrl.u32 %v1220, 7
    %v1222 = vsub.s32 0, %v1221
    %v1223 = vrot.slane %v1218, %v1222
    %v1224 = vlaneseq
    %v1225 = vshrl.u32 %v1224, 7
    %v1226 = vsub.s32 1, %v1225
    %v1227 = vrot.slane %v1218, %v1226
    %v1228 = vlaneseq
    %v1229 = vshrl.u32 %v1228, 7
    %v1230 = vsub.s32 2, %v1229
    %v1231 = vrot.slane %v1218, %v1230
    %v1232 = vlaneseq
    %v1233 = vshrl.u32 %v1232, 7
    %v1234 = vsub.s32 3, %v1233
    %v1235 = vrot.slane %v1218, %v1234
    %1236 = vrot.lane.b32.xlu0 %v1223, 1
    %v1237 = vpop.permute.xlu0 %1236
    %1238 = vrot.lane.b32.xlu0 %v1227, 1
    %v1239 = vpop.permute.xlu0 %1238
    %1240 = vrot.lane.b32.xlu0 %v1231, 1
    %v1241 = vpop.permute.xlu0 %1240
    %1242 = vrot.lane.b32.xlu0 %v1235, 1
    %v1243 = vpop.permute.xlu0 %1242
    %vm1244 = vcmask 7168
    %v1245 = vsel %vm1244, %v1237, %v1239
    %v1246 = vsel %vm1244, %v1239, %v1241
    %v1247 = vsel %vm1244, %v1241, %v1243
    %v1253 = vmul.f32 %v1197, %v1237
    %v1254 = vmul.f32 %v1198, %v1245
    %v1255 = vmul.f32 %v1199, %v1246
    %v1256 = vmul.f32 %v1200, %v1247
    %v1257 = vmul.f32 %v1201, %v1243
    %v1258 = vmul.f32 %v1202, %v1237
    %v1259 = vmul.f32 %v1203, %v1245
    %v1260 = vmul.f32 %v1204, %v1246
    %v1261 = vmul.f32 %v1205, %v1247
    %v1262 = vmul.f32 %v1206, %v1243
    %v1263 = vmul.f32 %v1207, %v1237
    %v1264 = vmul.f32 %v1208, %v1245
    %v1265 = vmul.f32 %v1209, %v1246
    %v1266 = vmul.f32 %v1210, %v1247
    %v1267 = vmul.f32 %v1211, %v1243
    %v1268 = vmul.f32 %v1212, %v1237
    %v1269 = vmul.f32 %v1213, %v1245
    %v1270 = vmul.f32 %v1214, %v1246
    %v1271 = vmul.f32 %v1215, %v1247
    %v1272 = vmul.f32 %v1216, %v1243
    %s1273 = scalar_lea.vmem %s3, 40
    %v1274 = vld [vmem:[%s1273] sm:$0xf]
    %v1275 = vld [vmem:[%s1273 + $0x4] sm:$0xf]
    %v1276 = vpack.c.bf16 %v1258, %v1253
    %v1277 = vpack.c.bf16 %v1259, %v1254
    %v1278 = vpack.c.bf16 %v1260, %v1255
    %v1279 = vpack.c.bf16 %v1261, %v1256
    %v1280 = vpack.c.bf16 %v1262, %v1257
    %v1281 = vpack.c.bf16 %v1268, %v1263
    %v1282 = vpack.c.bf16 %v1269, %v1264
    %v1283 = vpack.c.bf16 %v1270, %v1265
    %v1284 = vpack.c.bf16 %v1271, %v1266
    %v1285 = vpack.c.bf16 %v1272, %v1267
    %v1288 = vunpack.c.l.b16 %v1274
    %v1289 = vunpack.c.l.b16 %v1275
    %v1290 = vpack.c.b16 %v1289, %v1288
    %1301 = vrot.lane.b32.xlu0 %v1276, 127
    %v1302 = vpop.permute.xlu0 %1301
    %1303 = vrot.lane.b32.xlu0 %v1277, 127
    %v1304 = vpop.permute.xlu0 %1303
    %1305 = vrot.lane.b32.xlu0 %v1278, 127
    %v1306 = vpop.permute.xlu0 %1305
    %1307 = vrot.lane.b32.xlu0 %v1279, 127
    %v1308 = vpop.permute.xlu0 %1307
    %1309 = vrot.lane.b32.xlu0 %v1280, 127
    %v1310 = vpop.permute.xlu0 %1309
    %1311 = vrot.lane.b32.xlu0 %v1281, 127
    %v1312 = vpop.permute.xlu0 %1311
    %1313 = vrot.lane.b32.xlu0 %v1282, 127
    %v1314 = vpop.permute.xlu0 %1313
    %1315 = vrot.lane.b32.xlu0 %v1283, 127
    %v1316 = vpop.permute.xlu0 %1315
    %1317 = vrot.lane.b32.xlu0 %v1284, 127
    %v1318 = vpop.permute.xlu0 %1317
    %1319 = vrot.lane.b32.xlu0 %v1285, 127
    %v1320 = vpop.permute.xlu0 %1319
    %vm1321 = vcmask 1039360
    %v1322 = vsel %vm1321, %v1302, %v1304
    %v1323 = vsel %vm1321, %v1304, %v1306
    %v1324 = vsel %vm1321, %v1306, %v1308
    %v1325 = vsel %vm1321, %v1308, %v1310
    %v1326 = vsel %vm1321, %v1312, %v1314
    %v1327 = vsel %vm1321, %v1314, %v1316
    %v1328 = vsel %vm1321, %v1316, %v1318
    %v1329 = vsel %vm1321, %v1318, %v1320
    %v1339 = vsel %vm417, %v1290, 0
    %1341 = vmatprep.subr.bf16.mxu0 0
    %1342 = vmatpush1.bf16.msra.mxu0 0
    %1343 = vmatprep.subr.bf16.mxu0 0
    %1344 = vmatpush1.bf16.msra.mxu0 0
    %1345 = vmatprep.subr.bf16.mxu0 0
    %1346 = vmatpush1.bf16.msra.mxu0 0
    %1347 = vmatprep.subr.bf16.mxu0 0
    %1348 = vmatpush1.bf16.msra.mxu0 0
    %1349 = vmatprep.subr.bf16.mxu0 0
    %1350 = vmatpush1.bf16.msra.mxu0 0
    %1351 = vmatprep.subr.bf16.mxu0 0
    %1352 = vmatpush1.bf16.msra.mxu0 0
    %1353 = vmatprep.subr.bf16.mxu0 %v1327
    %1354 = vmatpush1.bf16.msra.mxu0 %v1326
    %1355 = vmatprep.subr.bf16.mxu0 %v1323
    %1356 = vmatpush1.bf16.msra.mxu0 %v1322
    %1357 = vmatprep.subr.bf16.mxu0 0
    %1358 = vmatpush2.bf16.msra.mxu0 0
    %1359 = vmatprep.subr.bf16.mxu0 0
    %1360 = vmatpush2.bf16.msra.mxu0 0
    %1361 = vmatprep.subr.bf16.mxu0 0
    %1362 = vmatpush2.bf16.msra.mxu0 0
    %1363 = vmatprep.subr.bf16.mxu0 0
    %1364 = vmatpush2.bf16.msra.mxu0 0
    %1365 = vmatprep.subr.bf16.mxu0 0
    %1366 = vmatpush2.bf16.msra.mxu0 0
    %1367 = vmatprep.subr.bf16.mxu0 0
    %1368 = vmatpush2.bf16.msra.mxu0 0
    %1369 = vmatprep.subr.bf16.mxu0 0
    %1370 = vmatpush2.bf16.msra.mxu0 0
    %1371 = vmatprep.subr.bf16.mxu0 0
    %1372 = vmatpush2.bf16.msra.mxu0 0
    %1373 = vmatprep.mubr.bf16.mxu0 0
    %1374 = vmatmul.mubr.bf16.gmra.mxu0 %v1339
    %v1375 = vpop.f32.mrf.mxu0
    %v1376 = vadd.f32 0.0, %v1375
    %v1377 = vpop.f32.mrf.mxu0
    %v1378 = vadd.f32 0.0, %v1377
    %v1379 = vpop.f32.mrf.mxu0
    %v1380 = vadd.f32 0.0, %v1379
    %v1381 = vpop.f32.mrf.mxu0
    %v1382 = vadd.f32 0.0, %v1381
    %1383 = vdwg.mxu0
    %1384 = vmatprep.subr.bf16.mxu0 0
    %1385 = vmatpush1.bf16.msra.mxu0 0
    %1386 = vmatprep.subr.bf16.mxu0 0
    %1387 = vmatpush1.bf16.msra.mxu0 0
    %1388 = vmatprep.subr.bf16.mxu0 0
    %1389 = vmatpush1.bf16.msra.mxu0 0
    %1390 = vmatprep.subr.bf16.mxu0 0
    %1391 = vmatpush1.bf16.msra.mxu0 0
    %1392 = vmatprep.subr.bf16.mxu0 0
    %1393 = vmatpush1.bf16.msra.mxu0 0
    %1394 = vmatprep.subr.bf16.mxu0 0
    %1395 = vmatpush1.bf16.msra.mxu0 0
    %1396 = vmatprep.subr.bf16.mxu0 %v1329
    %1397 = vmatpush1.bf16.msra.mxu0 %v1328
    %1398 = vmatprep.subr.bf16.mxu0 %v1325
    %1399 = vmatpush1.bf16.msra.mxu0 %v1324
    %1400 = vmatprep.subr.bf16.mxu0 0
    %1401 = vmatpush2.bf16.msra.mxu0 0
    %1402 = vmatprep.subr.bf16.mxu0 0
    %1403 = vmatpush2.bf16.msra.mxu0 0
    %1404 = vmatprep.subr.bf16.mxu0 0
    %1405 = vmatpush2.bf16.msra.mxu0 0
    %1406 = vmatprep.subr.bf16.mxu0 0
    %1407 = vmatpush2.bf16.msra.mxu0 0
    %1408 = vmatprep.subr.bf16.mxu0 0
    %1409 = vmatpush2.bf16.msra.mxu0 0
    %1410 = vmatprep.subr.bf16.mxu0 0
    %1411 = vmatpush2.bf16.msra.mxu0 0
    %1412 = vmatprep.subr.bf16.mxu0 0
    %1413 = vmatpush2.bf16.msra.mxu0 0
    %1414 = vmatprep.subr.bf16.mxu0 0
    %1415 = vmatpush2.bf16.msra.mxu0 0
    %1416 = vmatprep.mubr.bf16.mxu0 0
    %1417 = vmatmul.mubr.bf16.gmra.mxu0 %v1339
    %v1418 = vpop.f32.mrf.mxu0
    %v1419 = vadd.f32 0.0, %v1418
    %v1420 = vpop.f32.mrf.mxu0
    %v1421 = vadd.f32 0.0, %v1420
    %v1422 = vpop.f32.mrf.mxu0
    %v1423 = vadd.f32 0.0, %v1422
    %v1424 = vpop.f32.mrf.mxu0
    %v1425 = vadd.f32 0.0, %v1424
    %1426 = vdwg.mxu0
    %v1427 = vadd.f32 %v1189, %v1376
    %v1428 = vadd.f32 %v1190, %v1378
    %v1429 = vadd.f32 %v1191, %v1419
    %v1430 = vadd.f32 %v1192, %v1421
    %v1431 = vadd.f32 %v1193, %v1380
    %v1432 = vadd.f32 %v1194, %v1382
    %v1433 = vadd.f32 %v1195, %v1423
    %v1434 = vadd.f32 %v1196, %v1425
    %s1435 = scalar_lea.vmem [#allocation3], 6
    %v1436 = vld [vmem:[%s1435] ss:$8 sm:$0xf]
    %v1438 = vlaneseq
    %v1439 = vshrl.u32 %v1438, 7
    %v1440 = vsub.s32 0, %v1439
    %v1441 = vrot.slane %v1436, %v1440
    %v1442 = vlaneseq
    %v1443 = vshrl.u32 %v1442, 7
    %v1444 = vsub.s32 1, %v1443
    %v1445 = vrot.slane %v1436, %v1444
    %v1446 = vlaneseq
    %v1447 = vshrl.u32 %v1446, 7
    %v1448 = vsub.s32 2, %v1447
    %v1449 = vrot.slane %v1436, %v1448
    %v1450 = vlaneseq
    %v1451 = vshrl.u32 %v1450, 7
    %v1452 = vsub.s32 3, %v1451
    %v1453 = vrot.slane %v1436, %v1452
    %1454 = vrot.lane.b32.xlu0 %v1441, 15
    %v1455 = vpop.permute.xlu0 %1454
    %1456 = vrot.lane.b32.xlu0 %v1445, 15
    %v1457 = vpop.permute.xlu0 %1456
    %1458 = vrot.lane.b32.xlu0 %v1449, 15
    %v1459 = vpop.permute.xlu0 %1458
    %1460 = vrot.lane.b32.xlu0 %v1453, 15
    %v1461 = vpop.permute.xlu0 %1460
    %vm1462 = vcmask 121856
    %v1463 = vsel %vm1462, %v1455, %v1457
    %v1464 = vsel %vm1462, %v1457, %v1459
    %v1465 = vsel %vm1462, %v1459, %v1461
    %v1471 = vmul.f32 %v1197, %v1455
    %v1472 = vmul.f32 %v1198, %v1463
    %v1473 = vmul.f32 %v1199, %v1464
    %v1474 = vmul.f32 %v1200, %v1465
    %v1475 = vmul.f32 %v1201, %v1461
    %v1476 = vmul.f32 %v1202, %v1455
    %v1477 = vmul.f32 %v1203, %v1463
    %v1478 = vmul.f32 %v1204, %v1464
    %v1479 = vmul.f32 %v1205, %v1465
    %v1480 = vmul.f32 %v1206, %v1461
    %v1481 = vmul.f32 %v1207, %v1455
    %v1482 = vmul.f32 %v1208, %v1463
    %v1483 = vmul.f32 %v1209, %v1464
    %v1484 = vmul.f32 %v1210, %v1465
    %v1485 = vmul.f32 %v1211, %v1461
    %v1486 = vmul.f32 %v1212, %v1455
    %v1487 = vmul.f32 %v1213, %v1463
    %v1488 = vmul.f32 %v1214, %v1464
    %v1489 = vmul.f32 %v1215, %v1465
    %v1490 = vmul.f32 %v1216, %v1461
    %s1491 = scalar_lea.vmem %s3, 48
    %v1492 = vld [vmem:[%s1491] sm:$0xf]
    %v1493 = vld [vmem:[%s1491 + $0x4] sm:$0xf]
    %v1494 = vpack.c.bf16 %v1476, %v1471
    %v1495 = vpack.c.bf16 %v1477, %v1472
    %v1496 = vpack.c.bf16 %v1478, %v1473
    %v1497 = vpack.c.bf16 %v1479, %v1474
    %v1498 = vpack.c.bf16 %v1480, %v1475
    %v1499 = vpack.c.bf16 %v1486, %v1481
    %v1500 = vpack.c.bf16 %v1487, %v1482
    %v1501 = vpack.c.bf16 %v1488, %v1483
    %v1502 = vpack.c.bf16 %v1489, %v1484
    %v1503 = vpack.c.bf16 %v1490, %v1485
    %v1506 = vunpack.c.l.b16 %v1492
    %v1507 = vunpack.c.l.b16 %v1493
    %v1508 = vpack.c.b16 %v1507, %v1506
    %1519 = vrot.lane.b32.xlu0 %v1494, 113
    %v1520 = vpop.permute.xlu0 %1519
    %1521 = vrot.lane.b32.xlu0 %v1495, 113
    %v1522 = vpop.permute.xlu0 %1521
    %1523 = vrot.lane.b32.xlu0 %v1496, 113
    %v1524 = vpop.permute.xlu0 %1523
    %1525 = vrot.lane.b32.xlu0 %v1497, 113
    %v1526 = vpop.permute.xlu0 %1525
    %1527 = vrot.lane.b32.xlu0 %v1498, 113
    %v1528 = vpop.permute.xlu0 %1527
    %1529 = vrot.lane.b32.xlu0 %v1499, 113
    %v1530 = vpop.permute.xlu0 %1529
    %1531 = vrot.lane.b32.xlu0 %v1500, 113
    %v1532 = vpop.permute.xlu0 %1531
    %1533 = vrot.lane.b32.xlu0 %v1501, 113
    %v1534 = vpop.permute.xlu0 %1533
    %1535 = vrot.lane.b32.xlu0 %v1502, 113
    %v1536 = vpop.permute.xlu0 %1535
    %1537 = vrot.lane.b32.xlu0 %v1503, 113
    %v1538 = vpop.permute.xlu0 %1537
    %vm1539 = vcmask 924672
    %v1540 = vsel %vm1539, %v1520, %v1522
    %v1541 = vsel %vm1539, %v1522, %v1524
    %v1542 = vsel %vm1539, %v1524, %v1526
    %v1543 = vsel %vm1539, %v1526, %v1528
    %v1544 = vsel %vm1539, %v1530, %v1532
    %v1545 = vsel %vm1539, %v1532, %v1534
    %v1546 = vsel %vm1539, %v1534, %v1536
    %v1547 = vsel %vm1539, %v1536, %v1538
    %v1557 = vsel %vm417, %v1508, 0
    %1559 = vmatprep.subr.bf16.mxu0 0
    %1560 = vmatpush1.bf16.msra.mxu0 0
    %1561 = vmatprep.subr.bf16.mxu0 0
    %1562 = vmatpush1.bf16.msra.mxu0 0
    %1563 = vmatprep.subr.bf16.mxu0 0
    %1564 = vmatpush1.bf16.msra.mxu0 0
    %1565 = vmatprep.subr.bf16.mxu0 0
    %1566 = vmatpush1.bf16.msra.mxu0 0
    %1567 = vmatprep.subr.bf16.mxu0 0
    %1568 = vmatpush1.bf16.msra.mxu0 0
    %1569 = vmatprep.subr.bf16.mxu0 0
    %1570 = vmatpush1.bf16.msra.mxu0 0
    %1571 = vmatprep.subr.bf16.mxu0 %v1545
    %1572 = vmatpush1.bf16.msra.mxu0 %v1544
    %1573 = vmatprep.subr.bf16.mxu0 %v1541
    %1574 = vmatpush1.bf16.msra.mxu0 %v1540
    %1575 = vmatprep.subr.bf16.mxu0 0
    %1576 = vmatpush2.bf16.msra.mxu0 0
    %1577 = vmatprep.subr.bf16.mxu0 0
    %1578 = vmatpush2.bf16.msra.mxu0 0
    %1579 = vmatprep.subr.bf16.mxu0 0
    %1580 = vmatpush2.bf16.msra.mxu0 0
    %1581 = vmatprep.subr.bf16.mxu0 0
    %1582 = vmatpush2.bf16.msra.mxu0 0
    %1583 = vmatprep.subr.bf16.mxu0 0
    %1584 = vmatpush2.bf16.msra.mxu0 0
    %1585 = vmatprep.subr.bf16.mxu0 0
    %1586 = vmatpush2.bf16.msra.mxu0 0
    %1587 = vmatprep.subr.bf16.mxu0 0
    %1588 = vmatpush2.bf16.msra.mxu0 0
    %1589 = vmatprep.subr.bf16.mxu0 0
    %1590 = vmatpush2.bf16.msra.mxu0 0
    %1591 = vmatprep.mubr.bf16.mxu0 0
    %1592 = vmatmul.mubr.bf16.gmra.mxu0 %v1557
    %v1593 = vpop.f32.mrf.mxu0
    %v1594 = vadd.f32 0.0, %v1593
    %v1595 = vpop.f32.mrf.mxu0
    %v1596 = vadd.f32 0.0, %v1595
    %v1597 = vpop.f32.mrf.mxu0
    %v1598 = vadd.f32 0.0, %v1597
    %v1599 = vpop.f32.mrf.mxu0
    %v1600 = vadd.f32 0.0, %v1599
    %1601 = vdwg.mxu0
    %1602 = vmatprep.subr.bf16.mxu0 0
    %1603 = vmatpush1.bf16.msra.mxu0 0
    %1604 = vmatprep.subr.bf16.mxu0 0
    %1605 = vmatpush1.bf16.msra.mxu0 0
    %1606 = vmatprep.subr.bf16.mxu0 0
    %1607 = vmatpush1.bf16.msra.mxu0 0
    %1608 = vmatprep.subr.bf16.mxu0 0
    %1609 = vmatpush1.bf16.msra.mxu0 0
    %1610 = vmatprep.subr.bf16.mxu0 0
    %1611 = vmatpush1.bf16.msra.mxu0 0
    %1612 = vmatprep.subr.bf16.mxu0 0
    %1613 = vmatpush1.bf16.msra.mxu0 0
    %1614 = vmatprep.subr.bf16.mxu0 %v1547
    %1615 = vmatpush1.bf16.msra.mxu0 %v1546
    %1616 = vmatprep.subr.bf16.mxu0 %v1543
    %1617 = vmatpush1.bf16.msra.mxu0 %v1542
    %1618 = vmatprep.subr.bf16.mxu0 0
    %1619 = vmatpush2.bf16.msra.mxu0 0
    %1620 = vmatprep.subr.bf16.mxu0 0
    %1621 = vmatpush2.bf16.msra.mxu0 0
    %1622 = vmatprep.subr.bf16.mxu0 0
    %1623 = vmatpush2.bf16.msra.mxu0 0
    %1624 = vmatprep.subr.bf16.mxu0 0
    %1625 = vmatpush2.bf16.msra.mxu0 0
    %1626 = vmatprep.subr.bf16.mxu0 0
    %1627 = vmatpush2.bf16.msra.mxu0 0
    %1628 = vmatprep.subr.bf16.mxu0 0
    %1629 = vmatpush2.bf16.msra.mxu0 0
    %1630 = vmatprep.subr.bf16.mxu0 0
    %1631 = vmatpush2.bf16.msra.mxu0 0
    %1632 = vmatprep.subr.bf16.mxu0 0
    %1633 = vmatpush2.bf16.msra.mxu0 0
    %1634 = vmatprep.mubr.bf16.mxu0 0
    %1635 = vmatmul.mubr.bf16.gmra.mxu0 %v1557
    %v1636 = vpop.f32.mrf.mxu0
    %v1637 = vadd.f32 0.0, %v1636
    %v1638 = vpop.f32.mrf.mxu0
    %v1639 = vadd.f32 0.0, %v1638
    %v1640 = vpop.f32.mrf.mxu0
    %v1641 = vadd.f32 0.0, %v1640
    %v1642 = vpop.f32.mrf.mxu0
    %v1643 = vadd.f32 0.0, %v1642
    %1644 = vdwg.mxu0
    %v1645 = vadd.f32 %v1427, %v1594
    %v1646 = vadd.f32 %v1428, %v1596
    %v1647 = vadd.f32 %v1429, %v1637
    %v1648 = vadd.f32 %v1430, %v1639
    %v1649 = vadd.f32 %v1431, %v1598
    %v1650 = vadd.f32 %v1432, %v1600
    %v1651 = vadd.f32 %v1433, %v1641
    %v1652 = vadd.f32 %v1434, %v1643
    %s1653 = scalar_lea.vmem [#allocation3], 7
    %v1654 = vld [vmem:[%s1653] ss:$8 sm:$0xf]
    %v1656 = vlaneseq
    %v1657 = vshrl.u32 %v1656, 7
    %v1658 = vsub.s32 0, %v1657
    %v1659 = vrot.slane %v1654, %v1658
    %v1660 = vlaneseq
    %v1661 = vshrl.u32 %v1660, 7
    %v1662 = vsub.s32 1, %v1661
    %v1663 = vrot.slane %v1654, %v1662
    %v1664 = vlaneseq
    %v1665 = vshrl.u32 %v1664, 7
    %v1666 = vsub.s32 2, %v1665
    %v1667 = vrot.slane %v1654, %v1666
    %v1668 = vlaneseq
    %v1669 = vshrl.u32 %v1668, 7
    %v1670 = vsub.s32 3, %v1669
    %v1671 = vrot.slane %v1654, %v1670
    %1672 = vrot.lane.b32.xlu0 %v1659, 16
    %v1673 = vpop.permute.xlu0 %1672
    %1674 = vrot.lane.b32.xlu0 %v1663, 16
    %v1675 = vpop.permute.xlu0 %1674
    %1676 = vrot.lane.b32.xlu0 %v1667, 16
    %v1677 = vpop.permute.xlu0 %1676
    %1678 = vrot.lane.b32.xlu0 %v1671, 16
    %v1679 = vpop.permute.xlu0 %1678
    %vm1680 = vcmask 130048
    %v1681 = vsel %vm1680, %v1673, %v1675
    %v1682 = vsel %vm1680, %v1675, %v1677
    %v1683 = vsel %vm1680, %v1677, %v1679
    %v1689 = vmul.f32 %v1197, %v1673
    %v1690 = vmul.f32 %v1198, %v1681
    %v1691 = vmul.f32 %v1199, %v1682
    %v1692 = vmul.f32 %v1200, %v1683
    %v1693 = vmul.f32 %v1201, %v1679
    %v1694 = vmul.f32 %v1202, %v1673
    %v1695 = vmul.f32 %v1203, %v1681
    %v1696 = vmul.f32 %v1204, %v1682
    %v1697 = vmul.f32 %v1205, %v1683
    %v1698 = vmul.f32 %v1206, %v1679
    %v1699 = vmul.f32 %v1207, %v1673
    %v1700 = vmul.f32 %v1208, %v1681
    %v1701 = vmul.f32 %v1209, %v1682
    %v1702 = vmul.f32 %v1210, %v1683
    %v1703 = vmul.f32 %v1211, %v1679
    %v1704 = vmul.f32 %v1212, %v1673
    %v1705 = vmul.f32 %v1213, %v1681
    %v1706 = vmul.f32 %v1214, %v1682
    %v1707 = vmul.f32 %v1215, %v1683
    %v1708 = vmul.f32 %v1216, %v1679
    %s1709 = scalar_lea.vmem %s3, 56
    %v1710 = vld [vmem:[%s1709] sm:$0xf]
    %v1711 = vld [vmem:[%s1709 + $0x4] sm:$0xf]
    %v1712 = vpack.c.bf16 %v1694, %v1689
    %v1713 = vpack.c.bf16 %v1695, %v1690
    %v1714 = vpack.c.bf16 %v1696, %v1691
    %v1715 = vpack.c.bf16 %v1697, %v1692
    %v1716 = vpack.c.bf16 %v1698, %v1693
    %v1717 = vpack.c.bf16 %v1704, %v1699
    %v1718 = vpack.c.bf16 %v1705, %v1700
    %v1719 = vpack.c.bf16 %v1706, %v1701
    %v1720 = vpack.c.bf16 %v1707, %v1702
    %v1721 = vpack.c.bf16 %v1708, %v1703
    %v1724 = vunpack.c.l.b16 %v1710
    %v1725 = vunpack.c.l.b16 %v1711
    %v1726 = vpack.c.b16 %v1725, %v1724
    %1737 = vrot.lane.b32.xlu0 %v1712, 112
    %v1738 = vpop.permute.xlu0 %1737
    %1739 = vrot.lane.b32.xlu0 %v1713, 112
    %v1740 = vpop.permute.xlu0 %1739
    %1741 = vrot.lane.b32.xlu0 %v1714, 112
    %v1742 = vpop.permute.xlu0 %1741
    %1743 = vrot.lane.b32.xlu0 %v1715, 112
    %v1744 = vpop.permute.xlu0 %1743
    %1745 = vrot.lane.b32.xlu0 %v1716, 112
    %v1746 = vpop.permute.xlu0 %1745
    %1747 = vrot.lane.b32.xlu0 %v1717, 112
    %v1748 = vpop.permute.xlu0 %1747
    %1749 = vrot.lane.b32.xlu0 %v1718, 112
    %v1750 = vpop.permute.xlu0 %1749
    %1751 = vrot.lane.b32.xlu0 %v1719, 112
    %v1752 = vpop.permute.xlu0 %1751
    %1753 = vrot.lane.b32.xlu0 %v1720, 112
    %v1754 = vpop.permute.xlu0 %1753
    %1755 = vrot.lane.b32.xlu0 %v1721, 112
    %v1756 = vpop.permute.xlu0 %1755
    %vm1757 = vcmask 916480
    %v1758 = vsel %vm1757, %v1738, %v1740
    %v1759 = vsel %vm1757, %v1740, %v1742
    %v1760 = vsel %vm1757, %v1742, %v1744
    %v1761 = vsel %vm1757, %v1744, %v1746
    %v1762 = vsel %vm1757, %v1748, %v1750
    %v1763 = vsel %vm1757, %v1750, %v1752
    %v1764 = vsel %vm1757, %v1752, %v1754
    %v1765 = vsel %vm1757, %v1754, %v1756
    %v1775 = vsel %vm417, %v1726, 0
    %1777 = vmatprep.subr.bf16.mxu0 0
    %1778 = vmatpush1.bf16.msra.mxu0 0
    %1779 = vmatprep.subr.bf16.mxu0 0
    %1780 = vmatpush1.bf16.msra.mxu0 0
    %1781 = vmatprep.subr.bf16.mxu0 0
    %1782 = vmatpush1.bf16.msra.mxu0 0
    %1783 = vmatprep.subr.bf16.mxu0 0
    %1784 = vmatpush1.bf16.msra.mxu0 0
    %1785 = vmatprep.subr.bf16.mxu0 0
    %1786 = vmatpush1.bf16.msra.mxu0 0
    %1787 = vmatprep.subr.bf16.mxu0 0
    %1788 = vmatpush1.bf16.msra.mxu0 0
    %1789 = vmatprep.subr.bf16.mxu0 %v1763
    %1790 = vmatpush1.bf16.msra.mxu0 %v1762
    %1791 = vmatprep.subr.bf16.mxu0 %v1759
    %1792 = vmatpush1.bf16.msra.mxu0 %v1758
    %1793 = vmatprep.subr.bf16.mxu0 0
    %1794 = vmatpush2.bf16.msra.mxu0 0
    %1795 = vmatprep.subr.bf16.mxu0 0
    %1796 = vmatpush2.bf16.msra.mxu0 0
    %1797 = vmatprep.subr.bf16.mxu0 0
    %1798 = vmatpush2.bf16.msra.mxu0 0
    %1799 = vmatprep.subr.bf16.mxu0 0
    %1800 = vmatpush2.bf16.msra.mxu0 0
    %1801 = vmatprep.subr.bf16.mxu0 0
    %1802 = vmatpush2.bf16.msra.mxu0 0
    %1803 = vmatprep.subr.bf16.mxu0 0
    %1804 = vmatpush2.bf16.msra.mxu0 0
    %1805 = vmatprep.subr.bf16.mxu0 0
    %1806 = vmatpush2.bf16.msra.mxu0 0
    %1807 = vmatprep.subr.bf16.mxu0 0
    %1808 = vmatpush2.bf16.msra.mxu0 0
    %1809 = vmatprep.mubr.bf16.mxu0 0
    %1810 = vmatmul.mubr.bf16.gmra.mxu0 %v1775
    %v1811 = vpop.f32.mrf.mxu0
    %v1812 = vadd.f32 0.0, %v1811
    %v1813 = vpop.f32.mrf.mxu0
    %v1814 = vadd.f32 0.0, %v1813
    %v1815 = vpop.f32.mrf.mxu0
    %v1816 = vadd.f32 0.0, %v1815
    %v1817 = vpop.f32.mrf.mxu0
    %v1818 = vadd.f32 0.0, %v1817
    %1819 = vdwg.mxu0
    %1820 = vmatprep.subr.bf16.mxu0 0
    %1821 = vmatpush1.bf16.msra.mxu0 0
    %1822 = vmatprep.subr.bf16.mxu0 0
    %1823 = vmatpush1.bf16.msra.mxu0 0
    %1824 = vmatprep.subr.bf16.mxu0 0
    %1825 = vmatpush1.bf16.msra.mxu0 0
    %1826 = vmatprep.subr.bf16.mxu0 0
    %1827 = vmatpush1.bf16.msra.mxu0 0
    %1828 = vmatprep.subr.bf16.mxu0 0
    %1829 = vmatpush1.bf16.msra.mxu0 0
    %1830 = vmatprep.subr.bf16.mxu0 0
    %1831 = vmatpush1.bf16.msra.mxu0 0
    %1832 = vmatprep.subr.bf16.mxu0 %v1765
    %1833 = vmatpush1.bf16.msra.mxu0 %v1764
    %1834 = vmatprep.subr.bf16.mxu0 %v1761
    %1835 = vmatpush1.bf16.msra.mxu0 %v1760
    %1836 = vmatprep.subr.bf16.mxu0 0
    %1837 = vmatpush2.bf16.msra.mxu0 0
    %1838 = vmatprep.subr.bf16.mxu0 0
    %1839 = vmatpush2.bf16.msra.mxu0 0
    %1840 = vmatprep.subr.bf16.mxu0 0
    %1841 = vmatpush2.bf16.msra.mxu0 0
    %1842 = vmatprep.subr.bf16.mxu0 0
    %1843 = vmatpush2.bf16.msra.mxu0 0
    %1844 = vmatprep.subr.bf16.mxu0 0
    %1845 = vmatpush2.bf16.msra.mxu0 0
    %1846 = vmatprep.subr.bf16.mxu0 0
    %1847 = vmatpush2.bf16.msra.mxu0 0
    %1848 = vmatprep.subr.bf16.mxu0 0
    %1849 = vmatpush2.bf16.msra.mxu0 0
    %1850 = vmatprep.subr.bf16.mxu0 0
    %1851 = vmatpush2.bf16.msra.mxu0 0
    %1852 = vmatprep.mubr.bf16.mxu0 0
    %1853 = vmatmul.mubr.bf16.gmra.mxu0 %v1775
    %v1854 = vpop.f32.mrf.mxu0
    %v1855 = vadd.f32 0.0, %v1854
    %v1856 = vpop.f32.mrf.mxu0
    %v1857 = vadd.f32 0.0, %v1856
    %v1858 = vpop.f32.mrf.mxu0
    %v1859 = vadd.f32 0.0, %v1858
    %v1860 = vpop.f32.mrf.mxu0
    %v1861 = vadd.f32 0.0, %v1860
    %1862 = vdwg.mxu0
    %v1863 = vadd.f32 %v1645, %v1812
    %v1864 = vadd.f32 %v1646, %v1814
    %v1865 = vadd.f32 %v1647, %v1855
    %v1866 = vadd.f32 %v1648, %v1857
    %v1867 = vadd.f32 %v1649, %v1816
    %v1868 = vadd.f32 %v1650, %v1818
    %v1869 = vadd.f32 %v1651, %v1859
    %v1870 = vadd.f32 %v1652, %v1861
    %s1871 = scalar_lea.vmem [#allocation3], 32
    %v1872 = vld [vmem:[%s1871] ss:$8 sm:$0xf]
    %v1874 = vlaneseq
    %v1875 = vshrl.u32 %v1874, 7
    %v1876 = vsub.s32 0, %v1875
    %v1877 = vrot.slane %v1872, %v1876
    %v1878 = vlaneseq
    %v1879 = vshrl.u32 %v1878, 7
    %v1880 = vsub.s32 1, %v1879
    %v1881 = vrot.slane %v1872, %v1880
    %v1882 = vlaneseq
    %v1883 = vshrl.u32 %v1882, 7
    %v1884 = vsub.s32 2, %v1883
    %v1885 = vrot.slane %v1872, %v1884
    %v1886 = vlaneseq
    %v1887 = vshrl.u32 %v1886, 7
    %v1888 = vsub.s32 3, %v1887
    %v1889 = vrot.slane %v1872, %v1888
    %1890 = vrot.lane.b32.xlu0 %v1877, 17
    %v1891 = vpop.permute.xlu0 %1890
    %1892 = vrot.lane.b32.xlu0 %v1881, 17
    %v1893 = vpop.permute.xlu0 %1892
    %1894 = vrot.lane.b32.xlu0 %v1885, 17
    %v1895 = vpop.permute.xlu0 %1894
    %1896 = vrot.lane.b32.xlu0 %v1889, 17
    %v1897 = vpop.permute.xlu0 %1896
    %vm1898 = vcmask 138240
    %v1899 = vsel %vm1898, %v1891, %v1893
    %v1900 = vsel %vm1898, %v1893, %v1895
    %v1901 = vsel %vm1898, %v1895, %v1897
    %v1907 = vmul.f32 %v1197, %v1891
    %v1908 = vmul.f32 %v1198, %v1899
    %v1909 = vmul.f32 %v1199, %v1900
    %v1910 = vmul.f32 %v1200, %v1901
    %v1911 = vmul.f32 %v1201, %v1897
    %v1912 = vmul.f32 %v1202, %v1891
    %v1913 = vmul.f32 %v1203, %v1899
    %v1914 = vmul.f32 %v1204, %v1900
    %v1915 = vmul.f32 %v1205, %v1901
    %v1916 = vmul.f32 %v1206, %v1897
    %v1917 = vmul.f32 %v1207, %v1891
    %v1918 = vmul.f32 %v1208, %v1899
    %v1919 = vmul.f32 %v1209, %v1900
    %v1920 = vmul.f32 %v1210, %v1901
    %v1921 = vmul.f32 %v1211, %v1897
    %v1922 = vmul.f32 %v1212, %v1891
    %v1923 = vmul.f32 %v1213, %v1899
    %v1924 = vmul.f32 %v1214, %v1900
    %v1925 = vmul.f32 %v1215, %v1901
    %v1926 = vmul.f32 %v1216, %v1897
    %s1927 = scalar_lea.vmem %s3, 64
    %v1928 = vld [vmem:[%s1927] sm:$0xf]
    %v1929 = vld [vmem:[%s1927 + $0x4] sm:$0xf]
    %v1930 = vpack.c.bf16 %v1912, %v1907
    %v1931 = vpack.c.bf16 %v1913, %v1908
    %v1932 = vpack.c.bf16 %v1914, %v1909
    %v1933 = vpack.c.bf16 %v1915, %v1910
    %v1934 = vpack.c.bf16 %v1916, %v1911
    %v1935 = vpack.c.bf16 %v1922, %v1917
    %v1936 = vpack.c.bf16 %v1923, %v1918
    %v1937 = vpack.c.bf16 %v1924, %v1919
    %v1938 = vpack.c.bf16 %v1925, %v1920
    %v1939 = vpack.c.bf16 %v1926, %v1921
    %v1942 = vunpack.c.l.b16 %v1928
    %v1943 = vunpack.c.l.b16 %v1929
    %v1944 = vpack.c.b16 %v1943, %v1942
    %1955 = vrot.lane.b32.xlu0 %v1930, 111
    %v1956 = vpop.permute.xlu0 %1955
    %1957 = vrot.lane.b32.xlu0 %v1931, 111
    %v1958 = vpop.permute.xlu0 %1957
    %1959 = vrot.lane.b32.xlu0 %v1932, 111
    %v1960 = vpop.permute.xlu0 %1959
    %1961 = vrot.lane.b32.xlu0 %v1933, 111
    %v1962 = vpop.permute.xlu0 %1961
    %1963 = vrot.lane.b32.xlu0 %v1934, 111
    %v1964 = vpop.permute.xlu0 %1963
    %1965 = vrot.lane.b32.xlu0 %v1935, 111
    %v1966 = vpop.permute.xlu0 %1965
    %1967 = vrot.lane.b32.xlu0 %v1936, 111
    %v1968 = vpop.permute.xlu0 %1967
    %1969 = vrot.lane.b32.xlu0 %v1937, 111
    %v1970 = vpop.permute.xlu0 %1969
    %1971 = vrot.lane.b32.xlu0 %v1938, 111
    %v1972 = vpop.permute.xlu0 %1971
    %1973 = vrot.lane.b32.xlu0 %v1939, 111
    %v1974 = vpop.permute.xlu0 %1973
    %vm1975 = vcmask 908288
    %v1976 = vsel %vm1975, %v1956, %v1958
    %v1977 = vsel %vm1975, %v1958, %v1960
    %v1978 = vsel %vm1975, %v1960, %v1962
    %v1979 = vsel %vm1975, %v1962, %v1964
    %v1980 = vsel %vm1975, %v1966, %v1968
    %v1981 = vsel %vm1975, %v1968, %v1970
    %v1982 = vsel %vm1975, %v1970, %v1972
    %v1983 = vsel %vm1975, %v1972, %v1974
    %v1993 = vsel %vm417, %v1944, 0
    %1995 = vmatprep.subr.bf16.mxu0 0
    %1996 = vmatpush1.bf16.msra.mxu0 0
    %1997 = vmatprep.subr.bf16.mxu0 0
    %1998 = vmatpush1.bf16.msra.mxu0 0
    %1999 = vmatprep.subr.bf16.mxu0 0
    %2000 = vmatpush1.bf16.msra.mxu0 0
    %2001 = vmatprep.subr.bf16.mxu0 0
    %2002 = vmatpush1.bf16.msra.mxu0 0
    %2003 = vmatprep.subr.bf16.mxu0 0
    %2004 = vmatpush1.bf16.msra.mxu0 0
    %2005 = vmatprep.subr.bf16.mxu0 0
    %2006 = vmatpush1.bf16.msra.mxu0 0
    %2007 = vmatprep.subr.bf16.mxu0 %v1981
    %2008 = vmatpush1.bf16.msra.mxu0 %v1980
    %2009 = vmatprep.subr.bf16.mxu0 %v1977
    %2010 = vmatpush1.bf16.msra.mxu0 %v1976
    %2011 = vmatprep.subr.bf16.mxu0 0
    %2012 = vmatpush2.bf16.msra.mxu0 0
    %2013 = vmatprep.subr.bf16.mxu0 0
    %2014 = vmatpush2.bf16.msra.mxu0 0
    %2015 = vmatprep.subr.bf16.mxu0 0
    %2016 = vmatpush2.bf16.msra.mxu0 0
    %2017 = vmatprep.subr.bf16.mxu0 0
    %2018 = vmatpush2.bf16.msra.mxu0 0
    %2019 = vmatprep.subr.bf16.mxu0 0
    %2020 = vmatpush2.bf16.msra.mxu0 0
    %2021 = vmatprep.subr.bf16.mxu0 0
    %2022 = vmatpush2.bf16.msra.mxu0 0
    %2023 = vmatprep.subr.bf16.mxu0 0
    %2024 = vmatpush2.bf16.msra.mxu0 0
    %2025 = vmatprep.subr.bf16.mxu0 0
    %2026 = vmatpush2.bf16.msra.mxu0 0
    %2027 = vmatprep.mubr.bf16.mxu0 0
    %2028 = vmatmul.mubr.bf16.gmra.mxu0 %v1993
    %v2029 = vpop.f32.mrf.mxu0
    %v2030 = vadd.f32 0.0, %v2029
    %v2031 = vpop.f32.mrf.mxu0
    %v2032 = vadd.f32 0.0, %v2031
    %v2033 = vpop.f32.mrf.mxu0
    %v2034 = vadd.f32 0.0, %v2033
    %v2035 = vpop.f32.mrf.mxu0
    %v2036 = vadd.f32 0.0, %v2035
    %2037 = vdwg.mxu0
    %2038 = vmatprep.subr.bf16.mxu0 0
    %2039 = vmatpush1.bf16.msra.mxu0 0
    %2040 = vmatprep.subr.bf16.mxu0 0
    %2041 = vmatpush1.bf16.msra.mxu0 0
    %2042 = vmatprep.subr.bf16.mxu0 0
    %2043 = vmatpush1.bf16.msra.mxu0 0
    %2044 = vmatprep.subr.bf16.mxu0 0
    %2045 = vmatpush1.bf16.msra.mxu0 0
    %2046 = vmatprep.subr.bf16.mxu0 0
    %2047 = vmatpush1.bf16.msra.mxu0 0
    %2048 = vmatprep.subr.bf16.mxu0 0
    %2049 = vmatpush1.bf16.msra.mxu0 0
    %2050 = vmatprep.subr.bf16.mxu0 %v1983
    %2051 = vmatpush1.bf16.msra.mxu0 %v1982
    %2052 = vmatprep.subr.bf16.mxu0 %v1979
    %2053 = vmatpush1.bf16.msra.mxu0 %v1978
    %2054 = vmatprep.subr.bf16.mxu0 0
    %2055 = vmatpush2.bf16.msra.mxu0 0
    %2056 = vmatprep.subr.bf16.mxu0 0
    %2057 = vmatpush2.bf16.msra.mxu0 0
    %2058 = vmatprep.subr.bf16.mxu0 0
    %2059 = vmatpush2.bf16.msra.mxu0 0
    %2060 = vmatprep.subr.bf16.mxu0 0
    %2061 = vmatpush2.bf16.msra.mxu0 0
    %2062 = vmatprep.subr.bf16.mxu0 0
    %2063 = vmatpush2.bf16.msra.mxu0 0
    %2064 = vmatprep.subr.bf16.mxu0 0
    %2065 = vmatpush2.bf16.msra.mxu0 0
    %2066 = vmatprep.subr.bf16.mxu0 0
    %2067 = vmatpush2.bf16.msra.mxu0 0
    %2068 = vmatprep.subr.bf16.mxu0 0
    %2069 = vmatpush2.bf16.msra.mxu0 0
    %2070 = vmatprep.mubr.bf16.mxu0 0
    %2071 = vmatmul.mubr.bf16.gmra.mxu0 %v1993
    %v2072 = vpop.f32.mrf.mxu0
    %v2073 = vadd.f32 0.0, %v2072
    %v2074 = vpop.f32.mrf.mxu0
    %v2075 = vadd.f32 0.0, %v2074
    %v2076 = vpop.f32.mrf.mxu0
    %v2077 = vadd.f32 0.0, %v2076
    %v2078 = vpop.f32.mrf.mxu0
    %v2079 = vadd.f32 0.0, %v2078
    %2080 = vdwg.mxu0
    %v2081 = vadd.f32 %v1863, %v2030
    %v2082 = vadd.f32 %v1864, %v2032
    %v2083 = vadd.f32 %v1865, %v2073
    %v2084 = vadd.f32 %v1866, %v2075
    %v2085 = vadd.f32 %v1867, %v2034
    %v2086 = vadd.f32 %v1868, %v2036
    %v2087 = vadd.f32 %v1869, %v2077
    %v2088 = vadd.f32 %v1870, %v2079
    %2090 = vset.pattern.permute.xlu0 0
    %2091 = vperm.xlu0 %2090, %v87
    %v2092 = vpop.permute.xlu0 %2091
    %2095 = vset.pattern.permute.xlu0 0
    %2096 = vperm.xlu0 %2095, %v88
    %v2097 = vpop.permute.xlu0 %2096
    %v2099 = vadd.f32 %v2081, %v2092
    %v2100 = vadd.f32 %v2082, %v2092
    %v2101 = vadd.f32 %v2083, %v2092
    %v2102 = vadd.f32 %v2084, %v2092
    %v2103 = vadd.f32 %v2085, %v2097
    %v2104 = vadd.f32 %v2086, %v2097
    %v2105 = vadd.f32 %v2087, %v2097
    %v2106 = vadd.f32 %v2088, %v2097
    %v2107 = vmax.f32 %v2099, 0.0
    %v2108 = vmax.f32 %v2100, 0.0
    %v2109 = vmax.f32 %v2101, 0.0
    %v2110 = vmax.f32 %v2102, 0.0
    %v2111 = vmax.f32 %v2103, 0.0
    %v2112 = vmax.f32 %v2104, 0.0
    %v2113 = vmax.f32 %v2105, 0.0
    %v2114 = vmax.f32 %v2106, 0.0
    %v2115 = vld [vmem:[#allocation6] sm:$0xff]
    %v2116 = vld [vmem:[#allocation6 + $0x8] sm:$0xff]
    %v2117 = vld [vmem:[#allocation6 + $0x10] sm:$0xff]
    %v2118 = vld [vmem:[#allocation6 + $0x18] sm:$0xff]
    %v2119 = vld [vmem:[#allocation6 + $0x20] sm:$0xff]
    %v2120 = vld [vmem:[#allocation6 + $0x28] sm:$0xff]
    %v2121 = vld [vmem:[#allocation6 + $0x30] sm:$0xff]
    %v2122 = vld [vmem:[#allocation6 + $0x38] sm:$0xff]
    %v2123 = vld [vmem:[#allocation6 + $0x40] sm:$0xff]
    %v2124 = vld [vmem:[#allocation6 + $0x48] sm:$0xff]
    %v2125 = vld [vmem:[#allocation6 + $0x50] sm:$0xff]
    %v2126 = vld [vmem:[#allocation6 + $0x58] sm:$0xff]
    %v2127 = vld [vmem:[#allocation6 + $0x60] sm:$0xff]
    %v2128 = vld [vmem:[#allocation6 + $0x68] sm:$0xff]
    %v2129 = vld [vmem:[#allocation6 + $0x70] sm:$0xff]
    %v2130 = vld [vmem:[#allocation6 + $0x78] sm:$0xff]
    %v2131 = vld [vmem:[%s4] sm:$0xf]
    %v2132 = vld [vmem:[%s4 + $0x4] sm:$0xf]
    %v2133 = vld [vmem:[%s4 + $0x8] sm:$0xf]
    %v2134 = vld [vmem:[%s4 + $0xc] sm:$0xf]
    %v2135 = vpack.c.bf16 %v2111, %v2107
    %v2136 = vpack.c.bf16 %v2112, %v2108
    %v2137 = vpack.c.bf16 %v2113, %v2109
    %v2138 = vpack.c.bf16 %v2114, %v2110
    %v2143 = vunpack.c.l.b16 %v2131
    %v2144 = vunpack.c.l.b16 %v2132
    %v2145 = vunpack.c.l.b16 %v2133
    %v2146 = vunpack.c.l.b16 %v2134
    %v2147 = vpack.c.b16 %v2144, %v2143
    %v2148 = vpack.c.b16 %v2146, %v2145
    %v2150 = vsel %vm1680, %v2147, 0
    %v2153 = vsel %vm1680, %v2148, 0
    %2155 = vmatprep.subr.bf16.mxu0 0
    %2156 = vmatpush1.bf16.msra.mxu0 0
    %2157 = vmatprep.subr.bf16.mxu0 0
    %2158 = vmatpush1.bf16.msra.mxu0 0
    %2159 = vmatprep.subr.bf16.mxu0 0
    %2160 = vmatpush1.bf16.msra.mxu0 0
    %2161 = vmatprep.subr.bf16.mxu0 0
    %2162 = vmatpush1.bf16.msra.mxu0 0
    %2163 = vmatprep.subr.bf16.mxu0 0
    %2164 = vmatpush1.bf16.msra.mxu0 0
    %2165 = vmatprep.subr.bf16.mxu0 0
    %2166 = vmatpush1.bf16.msra.mxu0 0
    %2167 = vmatprep.subr.bf16.mxu0 0
    %2168 = vmatpush1.bf16.msra.mxu0 0
    %2169 = vmatprep.subr.bf16.mxu0 %v2136
    %2170 = vmatpush1.bf16.msra.mxu0 %v2135
    %2171 = vmatprep.subr.bf16.mxu0 0
    %2172 = vmatpush2.bf16.msra.mxu0 0
    %2173 = vmatprep.subr.bf16.mxu0 0
    %2174 = vmatpush2.bf16.msra.mxu0 0
    %2175 = vmatprep.subr.bf16.mxu0 0
    %2176 = vmatpush2.bf16.msra.mxu0 0
    %2177 = vmatprep.subr.bf16.mxu0 0
    %2178 = vmatpush2.bf16.msra.mxu0 0
    %2179 = vmatprep.subr.bf16.mxu0 0
    %2180 = vmatpush2.bf16.msra.mxu0 0
    %2181 = vmatprep.subr.bf16.mxu0 0
    %2182 = vmatpush2.bf16.msra.mxu0 0
    %2183 = vmatprep.subr.bf16.mxu0 0
    %2184 = vmatpush2.bf16.msra.mxu0 0
    %2185 = vmatprep.subr.bf16.mxu0 0
    %2186 = vmatpush2.bf16.msra.mxu0 0
    %2187 = vmatprep.mubr.bf16.mxu0 0
    %2188 = vmatmul.mubr.bf16.gmra.mxu0 %v2150
    %v2189 = vpop.f32.mrf.mxu0
    %v2190 = vadd.f32 0.0, %v2189
    %v2191 = vpop.f32.mrf.mxu0
    %v2192 = vadd.f32 0.0, %v2191
    %v2193 = vpop.f32.mrf.mxu0
    %v2194 = vadd.f32 0.0, %v2193
    %v2195 = vpop.f32.mrf.mxu0
    %v2196 = vadd.f32 0.0, %v2195
    %2197 = vmatprep.mubr.bf16.mxu0 0
    %2198 = vmatmul.mubr.bf16.gmra.mxu0 %v2153
    %v2199 = vpop.f32.mrf.mxu0
    %v2200 = vadd.f32 0.0, %v2199
    %v2201 = vpop.f32.mrf.mxu0
    %v2202 = vadd.f32 0.0, %v2201
    %v2203 = vpop.f32.mrf.mxu0
    %v2204 = vadd.f32 0.0, %v2203
    %v2205 = vpop.f32.mrf.mxu0
    %v2206 = vadd.f32 0.0, %v2205
    %2207 = vdwg.mxu0
    %2208 = vmatprep.subr.bf16.mxu0 0
    %2209 = vmatpush1.bf16.msra.mxu0 0
    %2210 = vmatprep.subr.bf16.mxu0 0
    %2211 = vmatpush1.bf16.msra.mxu0 0
    %2212 = vmatprep.subr.bf16.mxu0 0
    %2213 = vmatpush1.bf16.msra.mxu0 0
    %2214 = vmatprep.subr.bf16.mxu0 0
    %2215 = vmatpush1.bf16.msra.mxu0 0
    %2216 = vmatprep.subr.bf16.mxu0 0
    %2217 = vmatpush1.bf16.msra.mxu0 0
    %2218 = vmatprep.subr.bf16.mxu0 0
    %2219 = vmatpush1.bf16.msra.mxu0 0
    %2220 = vmatprep.subr.bf16.mxu0 0
    %2221 = vmatpush1.bf16.msra.mxu0 0
    %2222 = vmatprep.subr.bf16.mxu0 %v2138
    %2223 = vmatpush1.bf16.msra.mxu0 %v2137
    %2224 = vmatprep.subr.bf16.mxu0 0
    %2225 = vmatpush2.bf16.msra.mxu0 0
    %2226 = vmatprep.subr.bf16.mxu0 0
    %2227 = vmatpush2.bf16.msra.mxu0 0
    %2228 = vmatprep.subr.bf16.mxu0 0
    %2229 = vmatpush2.bf16.msra.mxu0 0
    %2230 = vmatprep.subr.bf16.mxu0 0
    %2231 = vmatpush2.bf16.msra.mxu0 0
    %2232 = vmatprep.subr.bf16.mxu0 0
    %2233 = vmatpush2.bf16.msra.mxu0 0
    %2234 = vmatprep.subr.bf16.mxu0 0
    %2235 = vmatpush2.bf16.msra.mxu0 0
    %2236 = vmatprep.subr.bf16.mxu0 0
    %2237 = vmatpush2.bf16.msra.mxu0 0
    %2238 = vmatprep.subr.bf16.mxu0 0
    %2239 = vmatpush2.bf16.msra.mxu0 0
    %2240 = vmatprep.mubr.bf16.mxu0 0
    %2241 = vmatmul.mubr.bf16.gmra.mxu0 %v2150
    %v2242 = vpop.f32.mrf.mxu0
    %v2243 = vadd.f32 0.0, %v2242
    %v2244 = vpop.f32.mrf.mxu0
    %v2245 = vadd.f32 0.0, %v2244
    %v2246 = vpop.f32.mrf.mxu0
    %v2247 = vadd.f32 0.0, %v2246
    %v2248 = vpop.f32.mrf.mxu0
    %v2249 = vadd.f32 0.0, %v2248
    %2250 = vmatprep.mubr.bf16.mxu0 0
    %2251 = vmatmul.mubr.bf16.gmra.mxu0 %v2153
    %v2252 = vpop.f32.mrf.mxu0
    %v2253 = vadd.f32 0.0, %v2252
    %v2254 = vpop.f32.mrf.mxu0
    %v2255 = vadd.f32 0.0, %v2254
    %v2256 = vpop.f32.mrf.mxu0
    %v2257 = vadd.f32 0.0, %v2256
    %v2258 = vpop.f32.mrf.mxu0
    %v2259 = vadd.f32 0.0, %v2258
    %2260 = vdwg.mxu0
    %v2261 = vadd.f32 %v2115, %v2190
    %v2262 = vadd.f32 %v2116, %v2192
    %v2263 = vadd.f32 %v2117, %v2243
    %v2264 = vadd.f32 %v2118, %v2245
    %v2265 = vadd.f32 %v2119, %v2194
    %v2266 = vadd.f32 %v2120, %v2196
    %v2267 = vadd.f32 %v2121, %v2247
    %v2268 = vadd.f32 %v2122, %v2249
    %v2269 = vadd.f32 %v2123, %v2200
    %v2270 = vadd.f32 %v2124, %v2202
    %v2271 = vadd.f32 %v2125, %v2253
    %v2272 = vadd.f32 %v2126, %v2255
    %v2273 = vadd.f32 %v2127, %v2204
    %v2274 = vadd.f32 %v2128, %v2206
    %v2275 = vadd.f32 %v2129, %v2257
    %v2276 = vadd.f32 %v2130, %v2259
    %2277 = vst [vmem:[#allocation6] sm:$0xff] %v2261
    %2278 = vst [vmem:[#allocation6 + $0x8] sm:$0xff] %v2262
    %2279 = vst [vmem:[#allocation6 + $0x10] sm:$0xff] %v2263
    %2280 = vst [vmem:[#allocation6 + $0x18] sm:$0xff] %v2264
    %2281 = vst [vmem:[#allocation6 + $0x20] sm:$0xff] %v2265
    %2282 = vst [vmem:[#allocation6 + $0x28] sm:$0xff] %v2266
    %2283 = vst [vmem:[#allocation6 + $0x30] sm:$0xff] %v2267
    %2284 = vst [vmem:[#allocation6 + $0x38] sm:$0xff] %v2268
    %2285 = vst [vmem:[#allocation6 + $0x40] sm:$0xff] %v2269
    %2286 = vst [vmem:[#allocation6 + $0x48] sm:$0xff] %v2270
    %2287 = vst [vmem:[#allocation6 + $0x50] sm:$0xff] %v2271
    %2288 = vst [vmem:[#allocation6 + $0x58] sm:$0xff] %v2272
    %2289 = vst [vmem:[#allocation6 + $0x60] sm:$0xff] %v2273
    %2290 = vst [vmem:[#allocation6 + $0x68] sm:$0xff] %v2274
    %2291 = vst [vmem:[#allocation6 + $0x70] sm:$0xff] %v2275
    %2292 = vst [vmem:[#allocation6 + $0x78] sm:$0xff] %v2276
    %s2293 = scalar_lea.vmem %s2, 80
    %v2294 = vld [vmem:[%s2293] sm:$0xff]
    %v2295 = vld [vmem:[%s2293 + $0x8] sm:$0xff]
    %v2296 = vld [vmem:[%s2293 + $0x10] sm:$0xff]
    %v2297 = vld [vmem:[%s2293 + $0x18] sm:$0xff]
    %v2298 = vld [vmem:[%s2293 + $0x20] sm:$0xff]
    %v2299 = vld [vmem:[%s2293 + $0x28] sm:$0xff]
    %v2300 = vld [vmem:[%s2293 + $0x30] sm:$0xff]
    %v2301 = vld [vmem:[%s2293 + $0x38] sm:$0xff]
    %v2302 = vld [vmem:[%s2293 + $0x40] sm:$0xff]
    %v2303 = vld [vmem:[%s2293 + $0x48] sm:$0xff]
    %v2304 = vld [vmem:[#allocation6] sm:$0xff]
    %v2305 = vld [vmem:[#allocation6 + $0x8] sm:$0xff]
    %v2306 = vld [vmem:[#allocation6 + $0x10] sm:$0xff]
    %v2307 = vld [vmem:[#allocation6 + $0x18] sm:$0xff]
    %v2308 = vld [vmem:[#allocation6 + $0x20] sm:$0xff]
    %v2309 = vld [vmem:[#allocation6 + $0x28] sm:$0xff]
    %v2310 = vld [vmem:[#allocation6 + $0x30] sm:$0xff]
    %v2311 = vld [vmem:[#allocation6 + $0x38] sm:$0xff]
    %v2312 = vld [vmem:[#allocation6 + $0x40] sm:$0xff]
    %v2313 = vld [vmem:[#allocation6 + $0x48] sm:$0xff]
    %v2314 = vld [vmem:[#allocation6 + $0x50] sm:$0xff]
    %v2315 = vld [vmem:[#allocation6 + $0x58] sm:$0xff]
    %v2316 = vld [vmem:[#allocation6 + $0x60] sm:$0xff]
    %v2317 = vld [vmem:[#allocation6 + $0x68] sm:$0xff]
    %v2318 = vld [vmem:[#allocation6 + $0x70] sm:$0xff]
    %v2319 = vld [vmem:[#allocation6 + $0x78] sm:$0xff]
    %2321 = vset.pattern.permute.xlu0 0
    %2322 = vperm.xlu0 %2321, %v2294
    %v2323 = vpop.permute.xlu0 %2322
    %2326 = vset.pattern.permute.xlu0 0
    %2327 = vperm.xlu0 %2326, %v2295
    %v2328 = vpop.permute.xlu0 %2327
    %2331 = vset.pattern.permute.xlu0 0
    %2332 = vperm.xlu0 %2331, %v2296
    %v2333 = vpop.permute.xlu0 %2332
    %2336 = vset.pattern.permute.xlu0 0
    %2337 = vperm.xlu0 %2336, %v2297
    %v2338 = vpop.permute.xlu0 %2337
    %v2340 = vmul.f32 %v2304, %v2323
    %v2341 = vmul.f32 %v2305, %v2323
    %v2342 = vmul.f32 %v2306, %v2323
    %v2343 = vmul.f32 %v2307, %v2323
    %v2344 = vmul.f32 %v2308, %v2328
    %v2345 = vmul.f32 %v2309, %v2328
    %v2346 = vmul.f32 %v2310, %v2328
    %v2347 = vmul.f32 %v2311, %v2328
    %v2348 = vmul.f32 %v2312, %v2333
    %v2349 = vmul.f32 %v2313, %v2333
    %v2350 = vmul.f32 %v2314, %v2333
    %v2351 = vmul.f32 %v2315, %v2333
    %v2352 = vmul.f32 %v2316, %v2338
    %v2353 = vmul.f32 %v2317, %v2338
    %v2354 = vmul.f32 %v2318, %v2338
    %v2355 = vmul.f32 %v2319, %v2338
    %2357 = vset.pattern.permute.xlu0 0
    %2358 = vperm.xlu0 %2357, %v2298
    %v2359 = vpop.permute.xlu0 %2358
    %2362 = vset.pattern.permute.xlu0 0
    %2363 = vperm.xlu0 %2362, %v2299
    %v2364 = vpop.permute.xlu0 %2363
    %2367 = vset.pattern.permute.xlu0 0
    %2368 = vperm.xlu0 %2367, %v2300
    %v2369 = vpop.permute.xlu0 %2368
    %2372 = vset.pattern.permute.xlu0 0
    %2373 = vperm.xlu0 %2372, %v2301
    %v2374 = vpop.permute.xlu0 %2373
    %v2376 = vadd.f32 %v2340, %v2359
    %v2377 = vadd.f32 %v2341, %v2359
    %v2378 = vadd.f32 %v2342, %v2359
    %v2379 = vadd.f32 %v2343, %v2359
    %v2380 = vadd.f32 %v2344, %v2364
    %v2381 = vadd.f32 %v2345, %v2364
    %v2382 = vadd.f32 %v2346, %v2364
    %v2383 = vadd.f32 %v2347, %v2364
    %v2384 = vadd.f32 %v2348, %v2369
    %v2385 = vadd.f32 %v2349, %v2369
    %v2386 = vadd.f32 %v2350, %v2369
    %v2387 = vadd.f32 %v2351, %v2369
    %v2388 = vadd.f32 %v2352, %v2374
    %v2389 = vadd.f32 %v2353, %v2374
    %v2390 = vadd.f32 %v2354, %v2374
    %v2391 = vadd.f32 %v2355, %v2374
    %v2392 = vmax.f32 %v2376, 0.0
    %v2393 = vmax.f32 %v2377, 0.0
    %v2394 = vmax.f32 %v2378, 0.0
    %v2395 = vmax.f32 %v2379, 0.0
    %v2396 = vmax.f32 %v2380, 0.0
    %v2397 = vmax.f32 %v2381, 0.0
    %v2398 = vmax.f32 %v2382, 0.0
    %v2399 = vmax.f32 %v2383, 0.0
    %v2400 = vmax.f32 %v2384, 0.0
    %v2401 = vmax.f32 %v2385, 0.0
    %v2402 = vmax.f32 %v2386, 0.0
    %v2403 = vmax.f32 %v2387, 0.0
    %v2404 = vmax.f32 %v2388, 0.0
    %v2405 = vmax.f32 %v2389, 0.0
    %v2406 = vmax.f32 %v2390, 0.0
    %v2407 = vmax.f32 %v2391, 0.0
    %2408 = vst [vmem:[#allocation2 + $0x8] sm:$0xff] %v2392
    %2409 = vst [vmem:[#allocation2 + $0x10] sm:$0xff] %v2393
    %2410 = vst [vmem:[#allocation2 + $0x18] sm:$0xff] %v2394
    %2411 = vst [vmem:[#allocation2 + $0x20] sm:$0xff] %v2395
    %2412 = vst [vmem:[#allocation2 + $0x38] sm:$0xff] %v2396
    %2413 = vst [vmem:[#allocation2 + $0x40] sm:$0xff] %v2397
    %2414 = vst [vmem:[#allocation2 + $0x48] sm:$0xff] %v2398
    %2415 = vst [vmem:[#allocation2 + $0x50] sm:$0xff] %v2399
    %2416 = vst [vmem:[#allocation2 + $0x68] sm:$0xff] %v2400
    %2417 = vst [vmem:[#allocation2 + $0x70] sm:$0xff] %v2401
    %2418 = vst [vmem:[#allocation2 + $0x78] sm:$0xff] %v2402
    %2419 = vst [vmem:[#allocation2 + $0x80] sm:$0xff] %v2403
    %2420 = vst [vmem:[#allocation2 + $0x98] sm:$0xff] %v2404
    %2421 = vst [vmem:[#allocation2 + $0xa0] sm:$0xff] %v2405
    %2422 = vst [vmem:[#allocation2 + $0xa8] sm:$0xff] %v2406
    %2423 = vst [vmem:[#allocation2 + $0xb0] sm:$0xff] %v2407
    %v2424 = vld [vmem:[#allocation2] sm:$0xff]
    %v2425 = vld [vmem:[#allocation2 + $0x8] sm:$0xff]
    %v2426 = vld [vmem:[#allocation2 + $0x10] sm:$0xff]
    %v2427 = vld [vmem:[#allocation2 + $0x18] sm:$0xff]
    %v2428 = vld [vmem:[#allocation2 + $0x20] sm:$0xff]
    %v2429 = vld [vmem:[#allocation2 + $0x30] sm:$0xff]
    %v2430 = vld [vmem:[#allocation2 + $0x38] sm:$0xff]
    %v2431 = vld [vmem:[#allocation2 + $0x40] sm:$0xff]
    %v2432 = vld [vmem:[#allocation2 + $0x48] sm:$0xff]
    %v2433 = vld [vmem:[#allocation2 + $0x50] sm:$0xff]
    %v2434 = vld [vmem:[#allocation2 + $0x60] sm:$0xff]
    %v2435 = vld [vmem:[#allocation2 + $0x68] sm:$0xff]
    %v2436 = vld [vmem:[#allocation2 + $0x70] sm:$0xff]
    %v2437 = vld [vmem:[#allocation2 + $0x78] sm:$0xff]
    %v2438 = vld [vmem:[#allocation2 + $0x80] sm:$0xff]
    %v2439 = vld [vmem:[#allocation2 + $0x90] sm:$0xff]
    %v2440 = vld [vmem:[#allocation2 + $0x98] sm:$0xff]
    %v2441 = vld [vmem:[#allocation2 + $0xa0] sm:$0xff]
    %v2442 = vld [vmem:[#allocation2 + $0xa8] sm:$0xff]
    %v2443 = vld [vmem:[#allocation2 + $0xb0] sm:$0xff]
    %v2444 = vld [vmem:[#allocation3] ss:$8 sm:$0xf]
    %v2446 = vlaneseq
    %v2447 = vshrl.u32 %v2446, 7
    %v2448 = vsub.s32 0, %v2447
    %v2449 = vrot.slane %v2444, %v2448
    %v2450 = vlaneseq
    %v2451 = vshrl.u32 %v2450, 7
    %v2452 = vsub.s32 1, %v2451
    %v2453 = vrot.slane %v2444, %v2452
    %v2454 = vlaneseq
    %v2455 = vshrl.u32 %v2454, 7
    %v2456 = vsub.s32 2, %v2455
    %v2457 = vrot.slane %v2444, %v2456
    %v2458 = vlaneseq
    %v2459 = vshrl.u32 %v2458, 7
    %v2460 = vsub.s32 3, %v2459
    %v2461 = vrot.slane %v2444, %v2460
    %2462 = vrot.lane.b32.xlu0 %v2449, 111
    %v2463 = vpop.permute.xlu0 %2462
    %2464 = vrot.lane.b32.xlu0 %v2453, 111
    %v2465 = vpop.permute.xlu0 %2464
    %2466 = vrot.lane.b32.xlu0 %v2457, 111
    %v2467 = vpop.permute.xlu0 %2466
    %2468 = vrot.lane.b32.xlu0 %v2461, 111
    %v2469 = vpop.permute.xlu0 %2468
    %v2470 = vsel %vm255, %v2463, %v2465
    %v2471 = vsel %vm255, %v2465, %v2467
    %v2472 = vsel %vm255, %v2467, %v2469
    %v2478 = vmul.f32 %v2424, %v2463
    %v2479 = vmul.f32 %v2425, %v2470
    %v2480 = vmul.f32 %v2426, %v2471
    %v2481 = vmul.f32 %v2427, %v2472
    %v2482 = vmul.f32 %v2428, %v2469
    %v2483 = vmul.f32 %v2429, %v2463
    %v2484 = vmul.f32 %v2430, %v2470
    %v2485 = vmul.f32 %v2431, %v2471
    %v2486 = vmul.f32 %v2432, %v2472
    %v2487 = vmul.f32 %v2433, %v2469
    %v2488 = vmul.f32 %v2434, %v2463
    %v2489 = vmul.f32 %v2435, %v2470
    %v2490 = vmul.f32 %v2436, %v2471
    %v2491 = vmul.f32 %v2437, %v2472
    %v2492 = vmul.f32 %v2438, %v2469
    %v2493 = vmul.f32 %v2439, %v2463
    %v2494 = vmul.f32 %v2440, %v2470
    %v2495 = vmul.f32 %v2441, %v2471
    %v2496 = vmul.f32 %v2442, %v2472
    %v2497 = vmul.f32 %v2443, %v2469
    %s2498 = scalar_lea.vmem %s3, 72
    %v2499 = vld [vmem:[%s2498] sm:$0xf]
    %v2500 = vld [vmem:[%s2498 + $0x4] sm:$0xf]
    %v2501 = vpack.c.bf16 %v2483, %v2478
    %v2502 = vpack.c.bf16 %v2484, %v2479
    %v2503 = vpack.c.bf16 %v2485, %v2480
    %v2504 = vpack.c.bf16 %v2486, %v2481
    %v2505 = vpack.c.bf16 %v2487, %v2482
    %v2506 = vpack.c.bf16 %v2493, %v2488
    %v2507 = vpack.c.bf16 %v2494, %v2489
    %v2508 = vpack.c.bf16 %v2495, %v2490
    %v2509 = vpack.c.bf16 %v2496, %v2491
    %v2510 = vpack.c.bf16 %v2497, %v2492
    %v2511 = vld [vmem:[%s296] ss:$8 sm:$0xf]
    %v2513 = vlaneseq
    %v2514 = vshrl.u32 %v2513, 7
    %v2515 = vsub.s32 0, %v2514
    %v2516 = vrot.slane %v2511, %v2515
    %v2517 = vlaneseq
    %v2518 = vshrl.u32 %v2517, 7
    %v2519 = vsub.s32 1, %v2518
    %v2520 = vrot.slane %v2511, %v2519
    %v2521 = vlaneseq
    %v2522 = vshrl.u32 %v2521, 7
    %v2523 = vsub.s32 2, %v2522
    %v2524 = vrot.slane %v2511, %v2523
    %v2525 = vlaneseq
    %v2526 = vshrl.u32 %v2525, 7
    %v2527 = vsub.s32 3, %v2526
    %v2528 = vrot.slane %v2511, %v2527
    %2529 = vrot.lane.b32.xlu0 %v2516, 112
    %v2530 = vpop.permute.xlu0 %2529
    %2531 = vrot.lane.b32.xlu0 %v2520, 112
    %v2532 = vpop.permute.xlu0 %2531
    %2533 = vrot.lane.b32.xlu0 %v2524, 112
    %v2534 = vpop.permute.xlu0 %2533
    %2535 = vrot.lane.b32.xlu0 %v2528, 112
    %v2536 = vpop.permute.xlu0 %2535
    %v2537 = vsel %vm323, %v2530, %v2532
    %v2538 = vsel %vm323, %v2532, %v2534
    %v2539 = vsel %vm323, %v2534, %v2536
    %v2545 = vmul.f32 %v2424, %v2530
    %v2546 = vmul.f32 %v2425, %v2537
    %v2547 = vmul.f32 %v2426, %v2538
    %v2548 = vmul.f32 %v2427, %v2539
    %v2549 = vmul.f32 %v2428, %v2536
    %v2550 = vmul.f32 %v2429, %v2530
    %v2551 = vmul.f32 %v2430, %v2537
    %v2552 = vmul.f32 %v2431, %v2538
    %v2553 = vmul.f32 %v2432, %v2539
    %v2554 = vmul.f32 %v2433, %v2536
    %v2555 = vmul.f32 %v2434, %v2530
    %v2556 = vmul.f32 %v2435, %v2537
    %v2557 = vmul.f32 %v2436, %v2538
    %v2558 = vmul.f32 %v2437, %v2539
    %v2559 = vmul.f32 %v2438, %v2536
    %v2560 = vmul.f32 %v2439, %v2530
    %v2561 = vmul.f32 %v2440, %v2537
    %v2562 = vmul.f32 %v2441, %v2538
    %v2563 = vmul.f32 %v2442, %v2539
    %v2564 = vmul.f32 %v2443, %v2536
    %s2565 = scalar_lea.vmem %s3, 80
    %v2566 = vld [vmem:[%s2565] sm:$0xf]
    %v2567 = vld [vmem:[%s2565 + $0x4] sm:$0xf]
    %v2568 = vpack.c.bf16 %v2550, %v2545
    %v2569 = vpack.c.bf16 %v2551, %v2546
    %v2570 = vpack.c.bf16 %v2552, %v2547
    %v2571 = vpack.c.bf16 %v2553, %v2548
    %v2572 = vpack.c.bf16 %v2554, %v2549
    %v2573 = vpack.c.bf16 %v2560, %v2555
    %v2574 = vpack.c.bf16 %v2561, %v2556
    %v2575 = vpack.c.bf16 %v2562, %v2557
    %v2576 = vpack.c.bf16 %v2563, %v2558
    %v2577 = vpack.c.bf16 %v2564, %v2559
    %v2580 = vunpack.c.l.b16 %v2566
    %v2581 = vunpack.c.l.b16 %v2567
    %v2582 = vpack.c.b16 %v2581, %v2580
    %2593 = vrot.lane.b32.xlu0 %v2568, 16
    %v2594 = vpop.permute.xlu0 %2593
    %2595 = vrot.lane.b32.xlu0 %v2569, 16
    %v2596 = vpop.permute.xlu0 %2595
    %2597 = vrot.lane.b32.xlu0 %v2570, 16
    %v2598 = vpop.permute.xlu0 %2597
    %2599 = vrot.lane.b32.xlu0 %v2571, 16
    %v2600 = vpop.permute.xlu0 %2599
    %2601 = vrot.lane.b32.xlu0 %v2572, 16
    %v2602 = vpop.permute.xlu0 %2601
    %2603 = vrot.lane.b32.xlu0 %v2573, 16
    %v2604 = vpop.permute.xlu0 %2603
    %2605 = vrot.lane.b32.xlu0 %v2574, 16
    %v2606 = vpop.permute.xlu0 %2605
    %2607 = vrot.lane.b32.xlu0 %v2575, 16
    %v2608 = vpop.permute.xlu0 %2607
    %2609 = vrot.lane.b32.xlu0 %v2576, 16
    %v2610 = vpop.permute.xlu0 %2609
    %2611 = vrot.lane.b32.xlu0 %v2577, 16
    %v2612 = vpop.permute.xlu0 %2611
    %v2613 = vsel %vm400, %v2594, %v2596
    %v2614 = vsel %vm400, %v2596, %v2598
    %v2615 = vsel %vm400, %v2598, %v2600
    %v2616 = vsel %vm400, %v2600, %v2602
    %v2617 = vsel %vm400, %v2604, %v2606
    %v2618 = vsel %vm400, %v2606, %v2608
    %v2619 = vsel %vm400, %v2608, %v2610
    %v2620 = vsel %vm400, %v2610, %v2612
    %v2630 = vsel %vm417, %v2582, 0
    %2632 = vmatprep.subr.bf16.mxu0 0
    %2633 = vmatpush1.bf16.msra.mxu0 0
    %2634 = vmatprep.subr.bf16.mxu0 0
    %2635 = vmatpush1.bf16.msra.mxu0 0
    %2636 = vmatprep.subr.bf16.mxu0 0
    %2637 = vmatpush1.bf16.msra.mxu0 0
    %2638 = vmatprep.subr.bf16.mxu0 0
    %2639 = vmatpush1.bf16.msra.mxu0 0
    %2640 = vmatprep.subr.bf16.mxu0 0
    %2641 = vmatpush1.bf16.msra.mxu0 0
    %2642 = vmatprep.subr.bf16.mxu0 0
    %2643 = vmatpush1.bf16.msra.mxu0 0
    %2644 = vmatprep.subr.bf16.mxu0 %v2618
    %2645 = vmatpush1.bf16.msra.mxu0 %v2617
    %2646 = vmatprep.subr.bf16.mxu0 %v2614
    %2647 = vmatpush1.bf16.msra.mxu0 %v2613
    %2648 = vmatprep.subr.bf16.mxu0 0
    %2649 = vmatpush2.bf16.msra.mxu0 0
    %2650 = vmatprep.subr.bf16.mxu0 0
    %2651 = vmatpush2.bf16.msra.mxu0 0
    %2652 = vmatprep.subr.bf16.mxu0 0
    %2653 = vmatpush2.bf16.msra.mxu0 0
    %2654 = vmatprep.subr.bf16.mxu0 0
    %2655 = vmatpush2.bf16.msra.mxu0 0
    %2656 = vmatprep.subr.bf16.mxu0 0
    %2657 = vmatpush2.bf16.msra.mxu0 0
    %2658 = vmatprep.subr.bf16.mxu0 0
    %2659 = vmatpush2.bf16.msra.mxu0 0
    %2660 = vmatprep.subr.bf16.mxu0 0
    %2661 = vmatpush2.bf16.msra.mxu0 0
    %2662 = vmatprep.subr.bf16.mxu0 0
    %2663 = vmatpush2.bf16.msra.mxu0 0
    %2664 = vmatprep.mubr.bf16.mxu0 0
    %2665 = vmatmul.mubr.bf16.gmra.mxu0 %v2630
    %v2666 = vpop.f32.mrf.mxu0
    %v2667 = vadd.f32 0.0, %v2666
    %v2668 = vpop.f32.mrf.mxu0
    %v2669 = vadd.f32 0.0, %v2668
    %v2670 = vpop.f32.mrf.mxu0
    %v2671 = vadd.f32 0.0, %v2670
    %v2672 = vpop.f32.mrf.mxu0
    %v2673 = vadd.f32 0.0, %v2672
    %2674 = vdwg.mxu0
    %2675 = vmatprep.subr.bf16.mxu0 0
    %2676 = vmatpush1.bf16.msra.mxu0 0
    %2677 = vmatprep.subr.bf16.mxu0 0
    %2678 = vmatpush1.bf16.msra.mxu0 0
    %2679 = vmatprep.subr.bf16.mxu0 0
    %2680 = vmatpush1.bf16.msra.mxu0 0
    %2681 = vmatprep.subr.bf16.mxu0 0
    %2682 = vmatpush1.bf16.msra.mxu0 0
    %2683 = vmatprep.subr.bf16.mxu0 0
    %2684 = vmatpush1.bf16.msra.mxu0 0
    %2685 = vmatprep.subr.bf16.mxu0 0
    %2686 = vmatpush1.bf16.msra.mxu0 0
    %2687 = vmatprep.subr.bf16.mxu0 %v2620
    %2688 = vmatpush1.bf16.msra.mxu0 %v2619
    %2689 = vmatprep.subr.bf16.mxu0 %v2616
    %2690 = vmatpush1.bf16.msra.mxu0 %v2615
    %2691 = vmatprep.subr.bf16.mxu0 0
    %2692 = vmatpush2.bf16.msra.mxu0 0
    %2693 = vmatprep.subr.bf16.mxu0 0
    %2694 = vmatpush2.bf16.msra.mxu0 0
    %2695 = vmatprep.subr.bf16.mxu0 0
    %2696 = vmatpush2.bf16.msra.mxu0 0
    %2697 = vmatprep.subr.bf16.mxu0 0
    %2698 = vmatpush2.bf16.msra.mxu0 0
    %2699 = vmatprep.subr.bf16.mxu0 0
    %2700 = vmatpush2.bf16.msra.mxu0 0
    %2701 = vmatprep.subr.bf16.mxu0 0
    %2702 = vmatpush2.bf16.msra.mxu0 0
    %2703 = vmatprep.subr.bf16.mxu0 0
    %2704 = vmatpush2.bf16.msra.mxu0 0
    %2705 = vmatprep.subr.bf16.mxu0 0
    %2706 = vmatpush2.bf16.msra.mxu0 0
    %2707 = vmatprep.mubr.bf16.mxu0 0
    %2708 = vmatmul.mubr.bf16.gmra.mxu0 %v2630
    %v2709 = vpop.f32.mrf.mxu0
    %v2710 = vadd.f32 0.0, %v2709
    %v2711 = vpop.f32.mrf.mxu0
    %v2712 = vadd.f32 0.0, %v2711
    %v2713 = vpop.f32.mrf.mxu0
    %v2714 = vadd.f32 0.0, %v2713
    %v2715 = vpop.f32.mrf.mxu0
    %v2716 = vadd.f32 0.0, %v2715
    %2717 = vdwg.mxu0
    %v2720 = vunpack.c.l.b16 %v2499
    %v2721 = vunpack.c.l.b16 %v2500
    %v2722 = vpack.c.b16 %v2721, %v2720
    %2733 = vrot.lane.b32.xlu0 %v2501, 17
    %v2734 = vpop.permute.xlu0 %2733
    %2735 = vrot.lane.b32.xlu0 %v2502, 17
    %v2736 = vpop.permute.xlu0 %2735
    %2737 = vrot.lane.b32.xlu0 %v2503, 17
    %v2738 = vpop.permute.xlu0 %2737
    %2739 = vrot.lane.b32.xlu0 %v2504, 17
    %v2740 = vpop.permute.xlu0 %2739
    %2741 = vrot.lane.b32.xlu0 %v2505, 17
    %v2742 = vpop.permute.xlu0 %2741
    %2743 = vrot.lane.b32.xlu0 %v2506, 17
    %v2744 = vpop.permute.xlu0 %2743
    %2745 = vrot.lane.b32.xlu0 %v2507, 17
    %v2746 = vpop.permute.xlu0 %2745
    %2747 = vrot.lane.b32.xlu0 %v2508, 17
    %v2748 = vpop.permute.xlu0 %2747
    %2749 = vrot.lane.b32.xlu0 %v2509, 17
    %v2750 = vpop.permute.xlu0 %2749
    %2751 = vrot.lane.b32.xlu0 %v2510, 17
    %v2752 = vpop.permute.xlu0 %2751
    %v2753 = vsel %vm542, %v2734, %v2736
    %v2754 = vsel %vm542, %v2736, %v2738
    %v2755 = vsel %vm542, %v2738, %v2740
    %v2756 = vsel %vm542, %v2740, %v2742
    %v2757 = vsel %vm542, %v2744, %v2746
    %v2758 = vsel %vm542, %v2746, %v2748
    %v2759 = vsel %vm542, %v2748, %v2750
    %v2760 = vsel %vm542, %v2750, %v2752
    %v2770 = vsel %vm417, %v2722, 0
    %2772 = vmatprep.subr.bf16.mxu0 0
    %2773 = vmatpush1.bf16.msra.mxu0 0
    %2774 = vmatprep.subr.bf16.mxu0 0
    %2775 = vmatpush1.bf16.msra.mxu0 0
    %2776 = vmatprep.subr.bf16.mxu0 0
    %2777 = vmatpush1.bf16.msra.mxu0 0
    %2778 = vmatprep.subr.bf16.mxu0 0
    %2779 = vmatpush1.bf16.msra.mxu0 0
    %2780 = vmatprep.subr.bf16.mxu0 0
    %2781 = vmatpush1.bf16.msra.mxu0 0
    %2782 = vmatprep.subr.bf16.mxu0 0
    %2783 = vmatpush1.bf16.msra.mxu0 0
    %2784 = vmatprep.subr.bf16.mxu0 %v2758
    %2785 = vmatpush1.bf16.msra.mxu0 %v2757
    %2786 = vmatprep.subr.bf16.mxu0 %v2754
    %2787 = vmatpush1.bf16.msra.mxu0 %v2753
    %2788 = vmatprep.subr.bf16.mxu0 0
    %2789 = vmatpush2.bf16.msra.mxu0 0
    %2790 = vmatprep.subr.bf16.mxu0 0
    %2791 = vmatpush2.bf16.msra.mxu0 0
    %2792 = vmatprep.subr.bf16.mxu0 0
    %2793 = vmatpush2.bf16.msra.mxu0 0
    %2794 = vmatprep.subr.bf16.mxu0 0
    %2795 = vmatpush2.bf16.msra.mxu0 0
    %2796 = vmatprep.subr.bf16.mxu0 0
    %2797 = vmatpush2.bf16.msra.mxu0 0
    %2798 = vmatprep.subr.bf16.mxu0 0
    %2799 = vmatpush2.bf16.msra.mxu0 0
    %2800 = vmatprep.subr.bf16.mxu0 0
    %2801 = vmatpush2.bf16.msra.mxu0 0
    %2802 = vmatprep.subr.bf16.mxu0 0
    %2803 = vmatpush2.bf16.msra.mxu0 0
    %2804 = vmatprep.mubr.bf16.mxu0 0
    %2805 = vmatmul.mubr.bf16.gmra.mxu0 %v2770
    %v2806 = vpop.f32.mrf.mxu0
    %v2807 = vadd.f32 %v2667, %v2806
    %v2808 = vpop.f32.mrf.mxu0
    %v2809 = vadd.f32 %v2669, %v2808
    %v2810 = vpop.f32.mrf.mxu0
    %v2811 = vadd.f32 %v2671, %v2810
    %v2812 = vpop.f32.mrf.mxu0
    %v2813 = vadd.f32 %v2673, %v2812
    %2814 = vdwg.mxu0
    %2815 = vmatprep.subr.bf16.mxu0 0
    %2816 = vmatpush1.bf16.msra.mxu0 0
    %2817 = vmatprep.subr.bf16.mxu0 0
    %2818 = vmatpush1.bf16.msra.mxu0 0
    %2819 = vmatprep.subr.bf16.mxu0 0
    %2820 = vmatpush1.bf16.msra.mxu0 0
    %2821 = vmatprep.subr.bf16.mxu0 0
    %2822 = vmatpush1.bf16.msra.mxu0 0
    %2823 = vmatprep.subr.bf16.mxu0 0
    %2824 = vmatpush1.bf16.msra.mxu0 0
    %2825 = vmatprep.subr.bf16.mxu0 0
    %2826 = vmatpush1.bf16.msra.mxu0 0
    %2827 = vmatprep.subr.bf16.mxu0 %v2760
    %2828 = vmatpush1.bf16.msra.mxu0 %v2759
    %2829 = vmatprep.subr.bf16.mxu0 %v2756
    %2830 = vmatpush1.bf16.msra.mxu0 %v2755
    %2831 = vmatprep.subr.bf16.mxu0 0
    %2832 = vmatpush2.bf16.msra.mxu0 0
    %2833 = vmatprep.subr.bf16.mxu0 0
    %2834 = vmatpush2.bf16.msra.mxu0 0
    %2835 = vmatprep.subr.bf16.mxu0 0
    %2836 = vmatpush2.bf16.msra.mxu0 0
    %2837 = vmatprep.subr.bf16.mxu0 0
    %2838 = vmatpush2.bf16.msra.mxu0 0
    %2839 = vmatprep.subr.bf16.mxu0 0
    %2840 = vmatpush2.bf16.msra.mxu0 0
    %2841 = vmatprep.subr.bf16.mxu0 0
    %2842 = vmatpush2.bf16.msra.mxu0 0
    %2843 = vmatprep.subr.bf16.mxu0 0
    %2844 = vmatpush2.bf16.msra.mxu0 0
    %2845 = vmatprep.subr.bf16.mxu0 0
    %2846 = vmatpush2.bf16.msra.mxu0 0
    %2847 = vmatprep.mubr.bf16.mxu0 0
    %2848 = vmatmul.mubr.bf16.gmra.mxu0 %v2770
    %v2849 = vpop.f32.mrf.mxu0
    %v2850 = vadd.f32 %v2710, %v2849
    %v2851 = vpop.f32.mrf.mxu0
    %v2852 = vadd.f32 %v2712, %v2851
    %v2853 = vpop.f32.mrf.mxu0
    %v2854 = vadd.f32 %v2714, %v2853
    %v2855 = vpop.f32.mrf.mxu0
    %v2856 = vadd.f32 %v2716, %v2855
    %2857 = vdwg.mxu0
    %v2858 = vld [vmem:[%s648] ss:$8 sm:$0xf]
    %v2860 = vlaneseq
    %v2861 = vshrl.u32 %v2860, 7
    %v2862 = vsub.s32 0, %v2861
    %v2863 = vrot.slane %v2858, %v2862
    %v2864 = vlaneseq
    %v2865 = vshrl.u32 %v2864, 7
    %v2866 = vsub.s32 1, %v2865
    %v2867 = vrot.slane %v2858, %v2866
    %v2868 = vlaneseq
    %v2869 = vshrl.u32 %v2868, 7
    %v2870 = vsub.s32 2, %v2869
    %v2871 = vrot.slane %v2858, %v2870
    %v2872 = vlaneseq
    %v2873 = vshrl.u32 %v2872, 7
    %v2874 = vsub.s32 3, %v2873
    %v2875 = vrot.slane %v2858, %v2874
    %2876 = vrot.lane.b32.xlu0 %v2863, 113
    %v2877 = vpop.permute.xlu0 %2876
    %2878 = vrot.lane.b32.xlu0 %v2867, 113
    %v2879 = vpop.permute.xlu0 %2878
    %2880 = vrot.lane.b32.xlu0 %v2871, 113
    %v2881 = vpop.permute.xlu0 %2880
    %2882 = vrot.lane.b32.xlu0 %v2875, 113
    %v2883 = vpop.permute.xlu0 %2882
    %v2884 = vsel %vm675, %v2877, %v2879
    %v2885 = vsel %vm675, %v2879, %v2881
    %v2886 = vsel %vm675, %v2881, %v2883
    %v2892 = vmul.f32 %v2424, %v2877
    %v2893 = vmul.f32 %v2425, %v2884
    %v2894 = vmul.f32 %v2426, %v2885
    %v2895 = vmul.f32 %v2427, %v2886
    %v2896 = vmul.f32 %v2428, %v2883
    %v2897 = vmul.f32 %v2429, %v2877
    %v2898 = vmul.f32 %v2430, %v2884
    %v2899 = vmul.f32 %v2431, %v2885
    %v2900 = vmul.f32 %v2432, %v2886
    %v2901 = vmul.f32 %v2433, %v2883
    %v2902 = vmul.f32 %v2434, %v2877
    %v2903 = vmul.f32 %v2435, %v2884
    %v2904 = vmul.f32 %v2436, %v2885
    %v2905 = vmul.f32 %v2437, %v2886
    %v2906 = vmul.f32 %v2438, %v2883
    %v2907 = vmul.f32 %v2439, %v2877
    %v2908 = vmul.f32 %v2440, %v2884
    %v2909 = vmul.f32 %v2441, %v2885
    %v2910 = vmul.f32 %v2442, %v2886
    %v2911 = vmul.f32 %v2443, %v2883
    %s2912 = scalar_lea.vmem %s3, 88
    %v2913 = vld [vmem:[%s2912] sm:$0xf]
    %v2914 = vld [vmem:[%s2912 + $0x4] sm:$0xf]
    %v2915 = vpack.c.bf16 %v2897, %v2892
    %v2916 = vpack.c.bf16 %v2898, %v2893
    %v2917 = vpack.c.bf16 %v2899, %v2894
    %v2918 = vpack.c.bf16 %v2900, %v2895
    %v2919 = vpack.c.bf16 %v2901, %v2896
    %v2920 = vpack.c.bf16 %v2907, %v2902
    %v2921 = vpack.c.bf16 %v2908, %v2903
    %v2922 = vpack.c.bf16 %v2909, %v2904
    %v2923 = vpack.c.bf16 %v2910, %v2905
    %v2924 = vpack.c.bf16 %v2911, %v2906
    %v2927 = vunpack.c.l.b16 %v2913
    %v2928 = vunpack.c.l.b16 %v2914
    %v2929 = vpack.c.b16 %v2928, %v2927
    %2940 = vrot.lane.b32.xlu0 %v2915, 15
    %v2941 = vpop.permute.xlu0 %2940
    %2942 = vrot.lane.b32.xlu0 %v2916, 15
    %v2943 = vpop.permute.xlu0 %2942
    %2944 = vrot.lane.b32.xlu0 %v2917, 15
    %v2945 = vpop.permute.xlu0 %2944
    %2946 = vrot.lane.b32.xlu0 %v2918, 15
    %v2947 = vpop.permute.xlu0 %2946
    %2948 = vrot.lane.b32.xlu0 %v2919, 15
    %v2949 = vpop.permute.xlu0 %2948
    %2950 = vrot.lane.b32.xlu0 %v2920, 15
    %v2951 = vpop.permute.xlu0 %2950
    %2952 = vrot.lane.b32.xlu0 %v2921, 15
    %v2953 = vpop.permute.xlu0 %2952
    %2954 = vrot.lane.b32.xlu0 %v2922, 15
    %v2955 = vpop.permute.xlu0 %2954
    %2956 = vrot.lane.b32.xlu0 %v2923, 15
    %v2957 = vpop.permute.xlu0 %2956
    %2958 = vrot.lane.b32.xlu0 %v2924, 15
    %v2959 = vpop.permute.xlu0 %2958
    %v2960 = vsel %vm752, %v2941, %v2943
    %v2961 = vsel %vm752, %v2943, %v2945
    %v2962 = vsel %vm752, %v2945, %v2947
    %v2963 = vsel %vm752, %v2947, %v2949
    %v2964 = vsel %vm752, %v2951, %v2953
    %v2965 = vsel %vm752, %v2953, %v2955
    %v2966 = vsel %vm752, %v2955, %v2957
    %v2967 = vsel %vm752, %v2957, %v2959
    %v2977 = vsel %vm417, %v2929, 0
    %2979 = vmatprep.subr.bf16.mxu0 0
    %2980 = vmatpush1.bf16.msra.mxu0 0
    %2981 = vmatprep.subr.bf16.mxu0 0
    %2982 = vmatpush1.bf16.msra.mxu0 0
    %2983 = vmatprep.subr.bf16.mxu0 0
    %2984 = vmatpush1.bf16.msra.mxu0 0
    %2985 = vmatprep.subr.bf16.mxu0 0
    %2986 = vmatpush1.bf16.msra.mxu0 0
    %2987 = vmatprep.subr.bf16.mxu0 0
    %2988 = vmatpush1.bf16.msra.mxu0 0
    %2989 = vmatprep.subr.bf16.mxu0 0
    %2990 = vmatpush1.bf16.msra.mxu0 0
    %2991 = vmatprep.subr.bf16.mxu0 %v2965
    %2992 = vmatpush1.bf16.msra.mxu0 %v2964
    %2993 = vmatprep.subr.bf16.mxu0 %v2961
    %2994 = vmatpush1.bf16.msra.mxu0 %v2960
    %2995 = vmatprep.subr.bf16.mxu0 0
    %2996 = vmatpush2.bf16.msra.mxu0 0
    %2997 = vmatprep.subr.bf16.mxu0 0
    %2998 = vmatpush2.bf16.msra.mxu0 0
    %2999 = vmatprep.subr.bf16.mxu0 0
    %3000 = vmatpush2.bf16.msra.mxu0 0
    %3001 = vmatprep.subr.bf16.mxu0 0
    %3002 = vmatpush2.bf16.msra.mxu0 0
    %3003 = vmatprep.subr.bf16.mxu0 0
    %3004 = vmatpush2.bf16.msra.mxu0 0
    %3005 = vmatprep.subr.bf16.mxu0 0
    %3006 = vmatpush2.bf16.msra.mxu0 0
    %3007 = vmatprep.subr.bf16.mxu0 0
    %3008 = vmatpush2.bf16.msra.mxu0 0
    %3009 = vmatprep.subr.bf16.mxu0 0
    %3010 = vmatpush2.bf16.msra.mxu0 0
    %3011 = vmatprep.mubr.bf16.mxu0 0
    %3012 = vmatmul.mubr.bf16.gmra.mxu0 %v2977
    %v3013 = vpop.f32.mrf.mxu0
    %v3014 = vadd.f32 0.0, %v3013
    %v3015 = vpop.f32.mrf.mxu0
    %v3016 = vadd.f32 0.0, %v3015
    %v3017 = vpop.f32.mrf.mxu0
    %v3018 = vadd.f32 0.0, %v3017
    %v3019 = vpop.f32.mrf.mxu0
    %v3020 = vadd.f32 0.0, %v3019
    %3021 = vdwg.mxu0
    %3022 = vmatprep.subr.bf16.mxu0 0
    %3023 = vmatpush1.bf16.msra.mxu0 0
    %3024 = vmatprep.subr.bf16.mxu0 0
    %3025 = vmatpush1.bf16.msra.mxu0 0
    %3026 = vmatprep.subr.bf16.mxu0 0
    %3027 = vmatpush1.bf16.msra.mxu0 0
    %3028 = vmatprep.subr.bf16.mxu0 0
    %3029 = vmatpush1.bf16.msra.mxu0 0
    %3030 = vmatprep.subr.bf16.mxu0 0
    %3031 = vmatpush1.bf16.msra.mxu0 0
    %3032 = vmatprep.subr.bf16.mxu0 0
    %3033 = vmatpush1.bf16.msra.mxu0 0
    %3034 = vmatprep.subr.bf16.mxu0 %v2967
    %3035 = vmatpush1.bf16.msra.mxu0 %v2966
    %3036 = vmatprep.subr.bf16.mxu0 %v2963
    %3037 = vmatpush1.bf16.msra.mxu0 %v2962
    %3038 = vmatprep.subr.bf16.mxu0 0
    %3039 = vmatpush2.bf16.msra.mxu0 0
    %3040 = vmatprep.subr.bf16.mxu0 0
    %3041 = vmatpush2.bf16.msra.mxu0 0
    %3042 = vmatprep.subr.bf16.mxu0 0
    %3043 = vmatpush2.bf16.msra.mxu0 0
    %3044 = vmatprep.subr.bf16.mxu0 0
    %3045 = vmatpush2.bf16.msra.mxu0 0
    %3046 = vmatprep.subr.bf16.mxu0 0
    %3047 = vmatpush2.bf16.msra.mxu0 0
    %3048 = vmatprep.subr.bf16.mxu0 0
    %3049 = vmatpush2.bf16.msra.mxu0 0
    %3050 = vmatprep.subr.bf16.mxu0 0
    %3051 = vmatpush2.bf16.msra.mxu0 0
    %3052 = vmatprep.subr.bf16.mxu0 0
    %3053 = vmatpush2.bf16.msra.mxu0 0
    %3054 = vmatprep.mubr.bf16.mxu0 0
    %3055 = vmatmul.mubr.bf16.gmra.mxu0 %v2977
    %v3056 = vpop.f32.mrf.mxu0
    %v3057 = vadd.f32 0.0, %v3056
    %v3058 = vpop.f32.mrf.mxu0
    %v3059 = vadd.f32 0.0, %v3058
    %v3060 = vpop.f32.mrf.mxu0
    %v3061 = vadd.f32 0.0, %v3060
    %v3062 = vpop.f32.mrf.mxu0
    %v3063 = vadd.f32 0.0, %v3062
    %3064 = vdwg.mxu0
    %v3065 = vadd.f32 %v2807, %v3014
    %v3066 = vadd.f32 %v2809, %v3016
    %v3067 = vadd.f32 %v2850, %v3057
    %v3068 = vadd.f32 %v2852, %v3059
    %v3069 = vadd.f32 %v2811, %v3018
    %v3070 = vadd.f32 %v2813, %v3020
    %v3071 = vadd.f32 %v2854, %v3061
    %v3072 = vadd.f32 %v2856, %v3063
    %v3073 = vld [vmem:[%s866] ss:$8 sm:$0xf]
    %v3075 = vlaneseq
    %v3076 = vshrl.u32 %v3075, 7
    %v3077 = vsub.s32 0, %v3076
    %v3078 = vrot.slane %v3073, %v3077
    %v3079 = vlaneseq
    %v3080 = vshrl.u32 %v3079, 7
    %v3081 = vsub.s32 1, %v3080
    %v3082 = vrot.slane %v3073, %v3081
    %v3083 = vlaneseq
    %v3084 = vshrl.u32 %v3083, 7
    %v3085 = vsub.s32 2, %v3084
    %v3086 = vrot.slane %v3073, %v3085
    %v3087 = vlaneseq
    %v3088 = vshrl.u32 %v3087, 7
    %v3089 = vsub.s32 3, %v3088
    %v3090 = vrot.slane %v3073, %v3089
    %3091 = vrot.lane.b32.xlu0 %v3078, 127
    %v3092 = vpop.permute.xlu0 %3091
    %3093 = vrot.lane.b32.xlu0 %v3082, 127
    %v3094 = vpop.permute.xlu0 %3093
    %3095 = vrot.lane.b32.xlu0 %v3086, 127
    %v3096 = vpop.permute.xlu0 %3095
    %3097 = vrot.lane.b32.xlu0 %v3090, 127
    %v3098 = vpop.permute.xlu0 %3097
    %v3099 = vsel %vm893, %v3092, %v3094
    %v3100 = vsel %vm893, %v3094, %v3096
    %v3101 = vsel %vm893, %v3096, %v3098
    %v3107 = vmul.f32 %v2424, %v3092
    %v3108 = vmul.f32 %v2425, %v3099
    %v3109 = vmul.f32 %v2426, %v3100
    %v3110 = vmul.f32 %v2427, %v3101
    %v3111 = vmul.f32 %v2428, %v3098
    %v3112 = vmul.f32 %v2429, %v3092
    %v3113 = vmul.f32 %v2430, %v3099
    %v3114 = vmul.f32 %v2431, %v3100
    %v3115 = vmul.f32 %v2432, %v3101
    %v3116 = vmul.f32 %v2433, %v3098
    %v3117 = vmul.f32 %v2434, %v3092
    %v3118 = vmul.f32 %v2435, %v3099
    %v3119 = vmul.f32 %v2436, %v3100
    %v3120 = vmul.f32 %v2437, %v3101
    %v3121 = vmul.f32 %v2438, %v3098
    %v3122 = vmul.f32 %v2439, %v3092
    %v3123 = vmul.f32 %v2440, %v3099
    %v3124 = vmul.f32 %v2441, %v3100
    %v3125 = vmul.f32 %v2442, %v3101
    %v3126 = vmul.f32 %v2443, %v3098
    %s3127 = scalar_lea.vmem %s3, 96
    %v3128 = vld [vmem:[%s3127] sm:$0xf]
    %v3129 = vld [vmem:[%s3127 + $0x4] sm:$0xf]
    %v3130 = vpack.c.bf16 %v3112, %v3107
    %v3131 = vpack.c.bf16 %v3113, %v3108
    %v3132 = vpack.c.bf16 %v3114, %v3109
    %v3133 = vpack.c.bf16 %v3115, %v3110
    %v3134 = vpack.c.bf16 %v3116, %v3111
    %v3135 = vpack.c.bf16 %v3122, %v3117
    %v3136 = vpack.c.bf16 %v3123, %v3118
    %v3137 = vpack.c.bf16 %v3124, %v3119
    %v3138 = vpack.c.bf16 %v3125, %v3120
    %v3139 = vpack.c.bf16 %v3126, %v3121
    %v3142 = vunpack.c.l.b16 %v3128
    %v3143 = vunpack.c.l.b16 %v3129
    %v3144 = vpack.c.b16 %v3143, %v3142
    %3155 = vrot.lane.b32.xlu0 %v3130, 1
    %v3156 = vpop.permute.xlu0 %3155
    %3157 = vrot.lane.b32.xlu0 %v3131, 1
    %v3158 = vpop.permute.xlu0 %3157
    %3159 = vrot.lane.b32.xlu0 %v3132, 1
    %v3160 = vpop.permute.xlu0 %3159
    %3161 = vrot.lane.b32.xlu0 %v3133, 1
    %v3162 = vpop.permute.xlu0 %3161
    %3163 = vrot.lane.b32.xlu0 %v3134, 1
    %v3164 = vpop.permute.xlu0 %3163
    %3165 = vrot.lane.b32.xlu0 %v3135, 1
    %v3166 = vpop.permute.xlu0 %3165
    %3167 = vrot.lane.b32.xlu0 %v3136, 1
    %v3168 = vpop.permute.xlu0 %3167
    %3169 = vrot.lane.b32.xlu0 %v3137, 1
    %v3170 = vpop.permute.xlu0 %3169
    %3171 = vrot.lane.b32.xlu0 %v3138, 1
    %v3172 = vpop.permute.xlu0 %3171
    %3173 = vrot.lane.b32.xlu0 %v3139, 1
    %v3174 = vpop.permute.xlu0 %3173
    %v3175 = vsel %vm970, %v3156, %v3158
    %v3176 = vsel %vm970, %v3158, %v3160
    %v3177 = vsel %vm970, %v3160, %v3162
    %v3178 = vsel %vm970, %v3162, %v3164
    %v3179 = vsel %vm970, %v3166, %v3168
    %v3180 = vsel %vm970, %v3168, %v3170
    %v3181 = vsel %vm970, %v3170, %v3172
    %v3182 = vsel %vm970, %v3172, %v3174
    %v3192 = vsel %vm417, %v3144, 0
    %3194 = vmatprep.subr.bf16.mxu0 0
    %3195 = vmatpush1.bf16.msra.mxu0 0
    %3196 = vmatprep.subr.bf16.mxu0 0
    %3197 = vmatpush1.bf16.msra.mxu0 0
    %3198 = vmatprep.subr.bf16.mxu0 0
    %3199 = vmatpush1.bf16.msra.mxu0 0
    %3200 = vmatprep.subr.bf16.mxu0 0
    %3201 = vmatpush1.bf16.msra.mxu0 0
    %3202 = vmatprep.subr.bf16.mxu0 0
    %3203 = vmatpush1.bf16.msra.mxu0 0
    %3204 = vmatprep.subr.bf16.mxu0 0
    %3205 = vmatpush1.bf16.msra.mxu0 0
    %3206 = vmatprep.subr.bf16.mxu0 %v3180
    %3207 = vmatpush1.bf16.msra.mxu0 %v3179
    %3208 = vmatprep.subr.bf16.mxu0 %v3176
    %3209 = vmatpush1.bf16.msra.mxu0 %v3175
    %3210 = vmatprep.subr.bf16.mxu0 0
    %3211 = vmatpush2.bf16.msra.mxu0 0
    %3212 = vmatprep.subr.bf16.mxu0 0
    %3213 = vmatpush2.bf16.msra.mxu0 0
    %3214 = vmatprep.subr.bf16.mxu0 0
    %3215 = vmatpush2.bf16.msra.mxu0 0
    %3216 = vmatprep.subr.bf16.mxu0 0
    %3217 = vmatpush2.bf16.msra.mxu0 0
    %3218 = vmatprep.subr.bf16.mxu0 0
    %3219 = vmatpush2.bf16.msra.mxu0 0
    %3220 = vmatprep.subr.bf16.mxu0 0
    %3221 = vmatpush2.bf16.msra.mxu0 0
    %3222 = vmatprep.subr.bf16.mxu0 0
    %3223 = vmatpush2.bf16.msra.mxu0 0
    %3224 = vmatprep.subr.bf16.mxu0 0
    %3225 = vmatpush2.bf16.msra.mxu0 0
    %3226 = vmatprep.mubr.bf16.mxu0 0
    %3227 = vmatmul.mubr.bf16.gmra.mxu0 %v3192
    %v3228 = vpop.f32.mrf.mxu0
    %v3229 = vadd.f32 0.0, %v3228
    %v3230 = vpop.f32.mrf.mxu0
    %v3231 = vadd.f32 0.0, %v3230
    %v3232 = vpop.f32.mrf.mxu0
    %v3233 = vadd.f32 0.0, %v3232
    %v3234 = vpop.f32.mrf.mxu0
    %v3235 = vadd.f32 0.0, %v3234
    %3236 = vdwg.mxu0
    %3237 = vmatprep.subr.bf16.mxu0 0
    %3238 = vmatpush1.bf16.msra.mxu0 0
    %3239 = vmatprep.subr.bf16.mxu0 0
    %3240 = vmatpush1.bf16.msra.mxu0 0
    %3241 = vmatprep.subr.bf16.mxu0 0
    %3242 = vmatpush1.bf16.msra.mxu0 0
    %3243 = vmatprep.subr.bf16.mxu0 0
    %3244 = vmatpush1.bf16.msra.mxu0 0
    %3245 = vmatprep.subr.bf16.mxu0 0
    %3246 = vmatpush1.bf16.msra.mxu0 0
    %3247 = vmatprep.subr.bf16.mxu0 0
    %3248 = vmatpush1.bf16.msra.mxu0 0
    %3249 = vmatprep.subr.bf16.mxu0 %v3182
    %3250 = vmatpush1.bf16.msra.mxu0 %v3181
    %3251 = vmatprep.subr.bf16.mxu0 %v3178
    %3252 = vmatpush1.bf16.msra.mxu0 %v3177
    %3253 = vmatprep.subr.bf16.mxu0 0
    %3254 = vmatpush2.bf16.msra.mxu0 0
    %3255 = vmatprep.subr.bf16.mxu0 0
    %3256 = vmatpush2.bf16.msra.mxu0 0
    %3257 = vmatprep.subr.bf16.mxu0 0
    %3258 = vmatpush2.bf16.msra.mxu0 0
    %3259 = vmatprep.subr.bf16.mxu0 0
    %3260 = vmatpush2.bf16.msra.mxu0 0
    %3261 = vmatprep.subr.bf16.mxu0 0
    %3262 = vmatpush2.bf16.msra.mxu0 0
    %3263 = vmatprep.subr.bf16.mxu0 0
    %3264 = vmatpush2.bf16.msra.mxu0 0
    %3265 = vmatprep.subr.bf16.mxu0 0
    %3266 = vmatpush2.bf16.msra.mxu0 0
    %3267 = vmatprep.subr.bf16.mxu0 0
    %3268 = vmatpush2.bf16.msra.mxu0 0
    %3269 = vmatprep.mubr.bf16.mxu0 0
    %3270 = vmatmul.mubr.bf16.gmra.mxu0 %v3192
    %v3271 = vpop.f32.mrf.mxu0
    %v3272 = vadd.f32 0.0, %v3271
    %v3273 = vpop.f32.mrf.mxu0
    %v3274 = vadd.f32 0.0, %v3273
    %v3275 = vpop.f32.mrf.mxu0
    %v3276 = vadd.f32 0.0, %v3275
    %v3277 = vpop.f32.mrf.mxu0
    %v3278 = vadd.f32 0.0, %v3277
    %3279 = vdwg.mxu0
    %v3280 = vadd.f32 %v3065, %v3229
    %v3281 = vadd.f32 %v3066, %v3231
    %v3282 = vadd.f32 %v3067, %v3272
    %v3283 = vadd.f32 %v3068, %v3274
    %v3284 = vadd.f32 %v3069, %v3233
    %v3285 = vadd.f32 %v3070, %v3235
    %v3286 = vadd.f32 %v3071, %v3276
    %v3287 = vadd.f32 %v3072, %v3278
    %s3288 = scalar_lea.vmem %s3, 104
    %v3289 = vld [vmem:[%s3288] sm:$0xf]
    %v3290 = vld [vmem:[%s3288 + $0x4] sm:$0xf]
    %v3291 = vpack.c.bf16 %v2430, %v2425
    %v3292 = vpack.c.bf16 %v2431, %v2426
    %v3293 = vpack.c.bf16 %v2432, %v2427
    %v3294 = vpack.c.bf16 %v2433, %v2428
    %v3295 = vpack.c.bf16 %v2440, %v2435
    %v3296 = vpack.c.bf16 %v2441, %v2436
    %v3297 = vpack.c.bf16 %v2442, %v2437
    %v3298 = vpack.c.bf16 %v2443, %v2438
    %v3301 = vunpack.c.l.b16 %v3289
    %v3302 = vunpack.c.l.b16 %v3290
    %v3303 = vpack.c.b16 %v3302, %v3301
    %v3305 = vsel %vm417, %v3303, 0
    %3307 = vmatprep.subr.bf16.mxu0 0
    %3308 = vmatpush1.bf16.msra.mxu0 0
    %3309 = vmatprep.subr.bf16.mxu0 0
    %3310 = vmatpush1.bf16.msra.mxu0 0
    %3311 = vmatprep.subr.bf16.mxu0 0
    %3312 = vmatpush1.bf16.msra.mxu0 0
    %3313 = vmatprep.subr.bf16.mxu0 0
    %3314 = vmatpush1.bf16.msra.mxu0 0
    %3315 = vmatprep.subr.bf16.mxu0 0
    %3316 = vmatpush1.bf16.msra.mxu0 0
    %3317 = vmatprep.subr.bf16.mxu0 0
    %3318 = vmatpush1.bf16.msra.mxu0 0
    %3319 = vmatprep.subr.bf16.mxu0 %v3296
    %3320 = vmatpush1.bf16.msra.mxu0 %v3295
    %3321 = vmatprep.subr.bf16.mxu0 %v3292
    %3322 = vmatpush1.bf16.msra.mxu0 %v3291
    %3323 = vmatprep.subr.bf16.mxu0 0
    %3324 = vmatpush2.bf16.msra.mxu0 0
    %3325 = vmatprep.subr.bf16.mxu0 0
    %3326 = vmatpush2.bf16.msra.mxu0 0
    %3327 = vmatprep.subr.bf16.mxu0 0
    %3328 = vmatpush2.bf16.msra.mxu0 0
    %3329 = vmatprep.subr.bf16.mxu0 0
    %3330 = vmatpush2.bf16.msra.mxu0 0
    %3331 = vmatprep.subr.bf16.mxu0 0
    %3332 = vmatpush2.bf16.msra.mxu0 0
    %3333 = vmatprep.subr.bf16.mxu0 0
    %3334 = vmatpush2.bf16.msra.mxu0 0
    %3335 = vmatprep.subr.bf16.mxu0 0
    %3336 = vmatpush2.bf16.msra.mxu0 0
    %3337 = vmatprep.subr.bf16.mxu0 0
    %3338 = vmatpush2.bf16.msra.mxu0 0
    %3339 = vmatprep.mubr.bf16.mxu0 0
    %3340 = vmatmul.mubr.bf16.gmra.mxu0 %v3305
    %v3341 = vpop.f32.mrf.mxu0
    %v3342 = vadd.f32 0.0, %v3341
    %v3343 = vpop.f32.mrf.mxu0
    %v3344 = vadd.f32 0.0, %v3343
    %v3345 = vpop.f32.mrf.mxu0
    %v3346 = vadd.f32 0.0, %v3345
    %v3347 = vpop.f32.mrf.mxu0
    %v3348 = vadd.f32 0.0, %v3347
    %3349 = vdwg.mxu0
    %3350 = vmatprep.subr.bf16.mxu0 0
    %3351 = vmatpush1.bf16.msra.mxu0 0
    %3352 = vmatprep.subr.bf16.mxu0 0
    %3353 = vmatpush1.bf16.msra.mxu0 0
    %3354 = vmatprep.subr.bf16.mxu0 0
    %3355 = vmatpush1.bf16.msra.mxu0 0
    %3356 = vmatprep.subr.bf16.mxu0 0
    %3357 = vmatpush1.bf16.msra.mxu0 0
    %3358 = vmatprep.subr.bf16.mxu0 0
    %3359 = vmatpush1.bf16.msra.mxu0 0
    %3360 = vmatprep.subr.bf16.mxu0 0
    %3361 = vmatpush1.bf16.msra.mxu0 0
    %3362 = vmatprep.subr.bf16.mxu0 %v3298
    %3363 = vmatpush1.bf16.msra.mxu0 %v3297
    %3364 = vmatprep.subr.bf16.mxu0 %v3294
    %3365 = vmatpush1.bf16.msra.mxu0 %v3293
    %3366 = vmatprep.subr.bf16.mxu0 0
    %3367 = vmatpush2.bf16.msra.mxu0 0
    %3368 = vmatprep.subr.bf16.mxu0 0
    %3369 = vmatpush2.bf16.msra.mxu0 0
    %3370 = vmatprep.subr.bf16.mxu0 0
    %3371 = vmatpush2.bf16.msra.mxu0 0
    %3372 = vmatprep.subr.bf16.mxu0 0
    %3373 = vmatpush2.bf16.msra.mxu0 0
    %3374 = vmatprep.subr.bf16.mxu0 0
    %3375 = vmatpush2.bf16.msra.mxu0 0
    %3376 = vmatprep.subr.bf16.mxu0 0
    %3377 = vmatpush2.bf16.msra.mxu0 0
    %3378 = vmatprep.subr.bf16.mxu0 0
    %3379 = vmatpush2.bf16.msra.mxu0 0
    %3380 = vmatprep.subr.bf16.mxu0 0
    %3381 = vmatpush2.bf16.msra.mxu0 0
    %3382 = vmatprep.mubr.bf16.mxu0 0
    %3383 = vmatmul.mubr.bf16.gmra.mxu0 %v3305
    %v3384 = vpop.f32.mrf.mxu0
    %v3385 = vadd.f32 0.0, %v3384
    %v3386 = vpop.f32.mrf.mxu0
    %v3387 = vadd.f32 0.0, %v3386
    %v3388 = vpop.f32.mrf.mxu0
    %v3389 = vadd.f32 0.0, %v3388
    %v3390 = vpop.f32.mrf.mxu0
    %v3391 = vadd.f32 0.0, %v3390
    %3392 = vdwg.mxu0
    %v3393 = vadd.f32 %v3280, %v3342
    %v3394 = vadd.f32 %v3281, %v3344
    %v3395 = vadd.f32 %v3282, %v3385
    %v3396 = vadd.f32 %v3283, %v3387
    %v3397 = vadd.f32 %v3284, %v3346
    %v3398 = vadd.f32 %v3285, %v3348
    %v3399 = vadd.f32 %v3286, %v3389
    %v3400 = vadd.f32 %v3287, %v3391
    %v3401 = vld [vmem:[#allocation2 + $0x8] sm:$0xff]
    %v3402 = vld [vmem:[#allocation2 + $0x10] sm:$0xff]
    %v3403 = vld [vmem:[#allocation2 + $0x18] sm:$0xff]
    %v3404 = vld [vmem:[#allocation2 + $0x20] sm:$0xff]
    %v3405 = vld [vmem:[#allocation2 + $0x28] sm:$0xff]
    %v3406 = vld [vmem:[#allocation2 + $0x38] sm:$0xff]
    %v3407 = vld [vmem:[#allocation2 + $0x40] sm:$0xff]
    %v3408 = vld [vmem:[#allocation2 + $0x48] sm:$0xff]
    %v3409 = vld [vmem:[#allocation2 + $0x50] sm:$0xff]
    %v3410 = vld [vmem:[#allocation2 + $0x58] sm:$0xff]
    %v3411 = vld [vmem:[#allocation2 + $0x68] sm:$0xff]
    %v3412 = vld [vmem:[#allocation2 + $0x70] sm:$0xff]
    %v3413 = vld [vmem:[#allocation2 + $0x78] sm:$0xff]
    %v3414 = vld [vmem:[#allocation2 + $0x80] sm:$0xff]
    %v3415 = vld [vmem:[#allocation2 + $0x88] sm:$0xff]
    %v3416 = vld [vmem:[#allocation2 + $0x98] sm:$0xff]
    %v3417 = vld [vmem:[#allocation2 + $0xa0] sm:$0xff]
    %v3418 = vld [vmem:[#allocation2 + $0xa8] sm:$0xff]
    %v3419 = vld [vmem:[#allocation2 + $0xb0] sm:$0xff]
    %v3420 = vld [vmem:[#allocation2 + $0xb8] sm:$0xff]
    %v3421 = vld [vmem:[%s1217] ss:$8 sm:$0xf]
    %v3423 = vlaneseq
    %v3424 = vshrl.u32 %v3423, 7
    %v3425 = vsub.s32 0, %v3424
    %v3426 = vrot.slane %v3421, %v3425
    %v3427 = vlaneseq
    %v3428 = vshrl.u32 %v3427, 7
    %v3429 = vsub.s32 1, %v3428
    %v3430 = vrot.slane %v3421, %v3429
    %v3431 = vlaneseq
    %v3432 = vshrl.u32 %v3431, 7
    %v3433 = vsub.s32 2, %v3432
    %v3434 = vrot.slane %v3421, %v3433
    %v3435 = vlaneseq
    %v3436 = vshrl.u32 %v3435, 7
    %v3437 = vsub.s32 3, %v3436
    %v3438 = vrot.slane %v3421, %v3437
    %3439 = vrot.lane.b32.xlu0 %v3426, 1
    %v3440 = vpop.permute.xlu0 %3439
    %3441 = vrot.lane.b32.xlu0 %v3430, 1
    %v3442 = vpop.permute.xlu0 %3441
    %3443 = vrot.lane.b32.xlu0 %v3434, 1
    %v3444 = vpop.permute.xlu0 %3443
    %3445 = vrot.lane.b32.xlu0 %v3438, 1
    %v3446 = vpop.permute.xlu0 %3445
    %v3447 = vsel %vm1244, %v3440, %v3442
    %v3448 = vsel %vm1244, %v3442, %v3444
    %v3449 = vsel %vm1244, %v3444, %v3446
    %v3455 = vmul.f32 %v3401, %v3440
    %v3456 = vmul.f32 %v3402, %v3447
    %v3457 = vmul.f32 %v3403, %v3448
    %v3458 = vmul.f32 %v3404, %v3449
    %v3459 = vmul.f32 %v3405, %v3446
    %v3460 = vmul.f32 %v3406, %v3440
    %v3461 = vmul.f32 %v3407, %v3447
    %v3462 = vmul.f32 %v3408, %v3448
    %v3463 = vmul.f32 %v3409, %v3449
    %v3464 = vmul.f32 %v3410, %v3446
    %v3465 = vmul.f32 %v3411, %v3440
    %v3466 = vmul.f32 %v3412, %v3447
    %v3467 = vmul.f32 %v3413, %v3448
    %v3468 = vmul.f32 %v3414, %v3449
    %v3469 = vmul.f32 %v3415, %v3446
    %v3470 = vmul.f32 %v3416, %v3440
    %v3471 = vmul.f32 %v3417, %v3447
    %v3472 = vmul.f32 %v3418, %v3448
    %v3473 = vmul.f32 %v3419, %v3449
    %v3474 = vmul.f32 %v3420, %v3446
    %s3475 = scalar_lea.vmem %s3, 112
    %v3476 = vld [vmem:[%s3475] sm:$0xf]
    %v3477 = vld [vmem:[%s3475 + $0x4] sm:$0xf]
    %v3478 = vpack.c.bf16 %v3460, %v3455
    %v3479 = vpack.c.bf16 %v3461, %v3456
    %v3480 = vpack.c.bf16 %v3462, %v3457
    %v3481 = vpack.c.bf16 %v3463, %v3458
    %v3482 = vpack.c.bf16 %v3464, %v3459
    %v3483 = vpack.c.bf16 %v3470, %v3465
    %v3484 = vpack.c.bf16 %v3471, %v3466
    %v3485 = vpack.c.bf16 %v3472, %v3467
    %v3486 = vpack.c.bf16 %v3473, %v3468
    %v3487 = vpack.c.bf16 %v3474, %v3469
    %v3490 = vunpack.c.l.b16 %v3476
    %v3491 = vunpack.c.l.b16 %v3477
    %v3492 = vpack.c.b16 %v3491, %v3490
    %3503 = vrot.lane.b32.xlu0 %v3478, 127
    %v3504 = vpop.permute.xlu0 %3503
    %3505 = vrot.lane.b32.xlu0 %v3479, 127
    %v3506 = vpop.permute.xlu0 %3505
    %3507 = vrot.lane.b32.xlu0 %v3480, 127
    %v3508 = vpop.permute.xlu0 %3507
    %3509 = vrot.lane.b32.xlu0 %v3481, 127
    %v3510 = vpop.permute.xlu0 %3509
    %3511 = vrot.lane.b32.xlu0 %v3482, 127
    %v3512 = vpop.permute.xlu0 %3511
    %3513 = vrot.lane.b32.xlu0 %v3483, 127
    %v3514 = vpop.permute.xlu0 %3513
    %3515 = vrot.lane.b32.xlu0 %v3484, 127
    %v3516 = vpop.permute.xlu0 %3515
    %3517 = vrot.lane.b32.xlu0 %v3485, 127
    %v3518 = vpop.permute.xlu0 %3517
    %3519 = vrot.lane.b32.xlu0 %v3486, 127
    %v3520 = vpop.permute.xlu0 %3519
    %3521 = vrot.lane.b32.xlu0 %v3487, 127
    %v3522 = vpop.permute.xlu0 %3521
    %v3523 = vsel %vm1321, %v3504, %v3506
    %v3524 = vsel %vm1321, %v3506, %v3508
    %v3525 = vsel %vm1321, %v3508, %v3510
    %v3526 = vsel %vm1321, %v3510, %v3512
    %v3527 = vsel %vm1321, %v3514, %v3516
    %v3528 = vsel %vm1321, %v3516, %v3518
    %v3529 = vsel %vm1321, %v3518, %v3520
    %v3530 = vsel %vm1321, %v3520, %v3522
    %v3540 = vsel %vm417, %v3492, 0
    %3542 = vmatprep.subr.bf16.mxu0 0
    %3543 = vmatpush1.bf16.msra.mxu0 0
    %3544 = vmatprep.subr.bf16.mxu0 0
    %3545 = vmatpush1.bf16.msra.mxu0 0
    %3546 = vmatprep.subr.bf16.mxu0 0
    %3547 = vmatpush1.bf16.msra.mxu0 0
    %3548 = vmatprep.subr.bf16.mxu0 0
    %3549 = vmatpush1.bf16.msra.mxu0 0
    %3550 = vmatprep.subr.bf16.mxu0 0
    %3551 = vmatpush1.bf16.msra.mxu0 0
    %3552 = vmatprep.subr.bf16.mxu0 0
    %3553 = vmatpush1.bf16.msra.mxu0 0
    %3554 = vmatprep.subr.bf16.mxu0 %v3528
    %3555 = vmatpush1.bf16.msra.mxu0 %v3527
    %3556 = vmatprep.subr.bf16.mxu0 %v3524
    %3557 = vmatpush1.bf16.msra.mxu0 %v3523
    %3558 = vmatprep.subr.bf16.mxu0 0
    %3559 = vmatpush2.bf16.msra.mxu0 0
    %3560 = vmatprep.subr.bf16.mxu0 0
    %3561 = vmatpush2.bf16.msra.mxu0 0
    %3562 = vmatprep.subr.bf16.mxu0 0
    %3563 = vmatpush2.bf16.msra.mxu0 0
    %3564 = vmatprep.subr.bf16.mxu0 0
    %3565 = vmatpush2.bf16.msra.mxu0 0
    %3566 = vmatprep.subr.bf16.mxu0 0
    %3567 = vmatpush2.bf16.msra.mxu0 0
    %3568 = vmatprep.subr.bf16.mxu0 0
    %3569 = vmatpush2.bf16.msra.mxu0 0
    %3570 = vmatprep.subr.bf16.mxu0 0
    %3571 = vmatpush2.bf16.msra.mxu0 0
    %3572 = vmatprep.subr.bf16.mxu0 0
    %3573 = vmatpush2.bf16.msra.mxu0 0
    %3574 = vmatprep.mubr.bf16.mxu0 0
    %3575 = vmatmul.mubr.bf16.gmra.mxu0 %v3540
    %v3576 = vpop.f32.mrf.mxu0
    %v3577 = vadd.f32 0.0, %v3576
    %v3578 = vpop.f32.mrf.mxu0
    %v3579 = vadd.f32 0.0, %v3578
    %v3580 = vpop.f32.mrf.mxu0
    %v3581 = vadd.f32 0.0, %v3580
    %v3582 = vpop.f32.mrf.mxu0
    %v3583 = vadd.f32 0.0, %v3582
    %3584 = vdwg.mxu0
    %3585 = vmatprep.subr.bf16.mxu0 0
    %3586 = vmatpush1.bf16.msra.mxu0 0
    %3587 = vmatprep.subr.bf16.mxu0 0
    %3588 = vmatpush1.bf16.msra.mxu0 0
    %3589 = vmatprep.subr.bf16.mxu0 0
    %3590 = vmatpush1.bf16.msra.mxu0 0
    %3591 = vmatprep.subr.bf16.mxu0 0
    %3592 = vmatpush1.bf16.msra.mxu0 0
    %3593 = vmatprep.subr.bf16.mxu0 0
    %3594 = vmatpush1.bf16.msra.mxu0 0
    %3595 = vmatprep.subr.bf16.mxu0 0
    %3596 = vmatpush1.bf16.msra.mxu0 0
    %3597 = vmatprep.subr.bf16.mxu0 %v3530
    %3598 = vmatpush1.bf16.msra.mxu0 %v3529
    %3599 = vmatprep.subr.bf16.mxu0 %v3526
    %3600 = vmatpush1.bf16.msra.mxu0 %v3525
    %3601 = vmatprep.subr.bf16.mxu0 0
    %3602 = vmatpush2.bf16.msra.mxu0 0
    %3603 = vmatprep.subr.bf16.mxu0 0
    %3604 = vmatpush2.bf16.msra.mxu0 0
    %3605 = vmatprep.subr.bf16.mxu0 0
    %3606 = vmatpush2.bf16.msra.mxu0 0
    %3607 = vmatprep.subr.bf16.mxu0 0
    %3608 = vmatpush2.bf16.msra.mxu0 0
    %3609 = vmatprep.subr.bf16.mxu0 0
    %3610 = vmatpush2.bf16.msra.mxu0 0
    %3611 = vmatprep.subr.bf16.mxu0 0
    %3612 = vmatpush2.bf16.msra.mxu0 0
    %3613 = vmatprep.subr.bf16.mxu0 0
    %3614 = vmatpush2.bf16.msra.mxu0 0
    %3615 = vmatprep.subr.bf16.mxu0 0
    %3616 = vmatpush2.bf16.msra.mxu0 0
    %3617 = vmatprep.mubr.bf16.mxu0 0
    %3618 = vmatmul.mubr.bf16.gmra.mxu0 %v3540
    %v3619 = vpop.f32.mrf.mxu0
    %v3620 = vadd.f32 0.0, %v3619
    %v3621 = vpop.f32.mrf.mxu0
    %v3622 = vadd.f32 0.0, %v3621
    %v3623 = vpop.f32.mrf.mxu0
    %v3624 = vadd.f32 0.0, %v3623
    %v3625 = vpop.f32.mrf.mxu0
    %v3626 = vadd.f32 0.0, %v3625
    %3627 = vdwg.mxu0
    %v3628 = vadd.f32 %v3393, %v3577
    %v3629 = vadd.f32 %v3394, %v3579
    %v3630 = vadd.f32 %v3395, %v3620
    %v3631 = vadd.f32 %v3396, %v3622
    %v3632 = vadd.f32 %v3397, %v3581
    %v3633 = vadd.f32 %v3398, %v3583
    %v3634 = vadd.f32 %v3399, %v3624
    %v3635 = vadd.f32 %v3400, %v3626
    %v3636 = vld [vmem:[%s1435] ss:$8 sm:$0xf]
    %v3638 = vlaneseq
    %v3639 = vshrl.u32 %v3638, 7
    %v3640 = vsub.s32 0, %v3639
    %v3641 = vrot.slane %v3636, %v3640
    %v3642 = vlaneseq
    %v3643 = vshrl.u32 %v3642, 7
    %v3644 = vsub.s32 1, %v3643
    %v3645 = vrot.slane %v3636, %v3644
    %v3646 = vlaneseq
    %v3647 = vshrl.u32 %v3646, 7
    %v3648 = vsub.s32 2, %v3647
    %v3649 = vrot.slane %v3636, %v3648
    %v3650 = vlaneseq
    %v3651 = vshrl.u32 %v3650, 7
    %v3652 = vsub.s32 3, %v3651
    %v3653 = vrot.slane %v3636, %v3652
    %3654 = vrot.lane.b32.xlu0 %v3641, 15
    %v3655 = vpop.permute.xlu0 %3654
    %3656 = vrot.lane.b32.xlu0 %v3645, 15
    %v3657 = vpop.permute.xlu0 %3656
    %3658 = vrot.lane.b32.xlu0 %v3649, 15
    %v3659 = vpop.permute.xlu0 %3658
    %3660 = vrot.lane.b32.xlu0 %v3653, 15
    %v3661 = vpop.permute.xlu0 %3660
    %v3662 = vsel %vm1462, %v3655, %v3657
    %v3663 = vsel %vm1462, %v3657, %v3659
    %v3664 = vsel %vm1462, %v3659, %v3661
    %v3670 = vmul.f32 %v3401, %v3655
    %v3671 = vmul.f32 %v3402, %v3662
    %v3672 = vmul.f32 %v3403, %v3663
    %v3673 = vmul.f32 %v3404, %v3664
    %v3674 = vmul.f32 %v3405, %v3661
    %v3675 = vmul.f32 %v3406, %v3655
    %v3676 = vmul.f32 %v3407, %v3662
    %v3677 = vmul.f32 %v3408, %v3663
    %v3678 = vmul.f32 %v3409, %v3664
    %v3679 = vmul.f32 %v3410, %v3661
    %v3680 = vmul.f32 %v3411, %v3655
    %v3681 = vmul.f32 %v3412, %v3662
    %v3682 = vmul.f32 %v3413, %v3663
    %v3683 = vmul.f32 %v3414, %v3664
    %v3684 = vmul.f32 %v3415, %v3661
    %v3685 = vmul.f32 %v3416, %v3655
    %v3686 = vmul.f32 %v3417, %v3662
    %v3687 = vmul.f32 %v3418, %v3663
    %v3688 = vmul.f32 %v3419, %v3664
    %v3689 = vmul.f32 %v3420, %v3661
    %s3690 = scalar_lea.vmem %s3, 120
    %v3691 = vld [vmem:[%s3690] sm:$0xf]
    %v3692 = vld [vmem:[%s3690 + $0x4] sm:$0xf]
    %v3693 = vpack.c.bf16 %v3675, %v3670
    %v3694 = vpack.c.bf16 %v3676, %v3671
    %v3695 = vpack.c.bf16 %v3677, %v3672
    %v3696 = vpack.c.bf16 %v3678, %v3673
    %v3697 = vpack.c.bf16 %v3679, %v3674
    %v3698 = vpack.c.bf16 %v3685, %v3680
    %v3699 = vpack.c.bf16 %v3686, %v3681
    %v3700 = vpack.c.bf16 %v3687, %v3682
    %v3701 = vpack.c.bf16 %v3688, %v3683
    %v3702 = vpack.c.bf16 %v3689, %v3684
    %v3705 = vunpack.c.l.b16 %v3691
    %v3706 = vunpack.c.l.b16 %v3692
    %v3707 = vpack.c.b16 %v3706, %v3705
    %3718 = vrot.lane.b32.xlu0 %v3693, 113
    %v3719 = vpop.permute.xlu0 %3718
    %3720 = vrot.lane.b32.xlu0 %v3694, 113
    %v3721 = vpop.permute.xlu0 %3720
    %3722 = vrot.lane.b32.xlu0 %v3695, 113
    %v3723 = vpop.permute.xlu0 %3722
    %3724 = vrot.lane.b32.xlu0 %v3696, 113
    %v3725 = vpop.permute.xlu0 %3724
    %3726 = vrot.lane.b32.xlu0 %v3697, 113
    %v3727 = vpop.permute.xlu0 %3726
    %3728 = vrot.lane.b32.xlu0 %v3698, 113
    %v3729 = vpop.permute.xlu0 %3728
    %3730 = vrot.lane.b32.xlu0 %v3699, 113
    %v3731 = vpop.permute.xlu0 %3730
    %3732 = vrot.lane.b32.xlu0 %v3700, 113
    %v3733 = vpop.permute.xlu0 %3732
    %3734 = vrot.lane.b32.xlu0 %v3701, 113
    %v3735 = vpop.permute.xlu0 %3734
    %3736 = vrot.lane.b32.xlu0 %v3702, 113
    %v3737 = vpop.permute.xlu0 %3736
    %v3738 = vsel %vm1539, %v3719, %v3721
    %v3739 = vsel %vm1539, %v3721, %v3723
    %v3740 = vsel %vm1539, %v3723, %v3725
    %v3741 = vsel %vm1539, %v3725, %v3727
    %v3742 = vsel %vm1539, %v3729, %v3731
    %v3743 = vsel %vm1539, %v3731, %v3733
    %v3744 = vsel %vm1539, %v3733, %v3735
    %v3745 = vsel %vm1539, %v3735, %v3737
    %v3755 = vsel %vm417, %v3707, 0
    %3757 = vmatprep.subr.bf16.mxu0 0
    %3758 = vmatpush1.bf16.msra.mxu0 0
    %3759 = vmatprep.subr.bf16.mxu0 0
    %3760 = vmatpush1.bf16.msra.mxu0 0
    %3761 = vmatprep.subr.bf16.mxu0 0
    %3762 = vmatpush1.bf16.msra.mxu0 0
    %3763 = vmatprep.subr.bf16.mxu0 0
    %3764 = vmatpush1.bf16.msra.mxu0 0
    %3765 = vmatprep.subr.bf16.mxu0 0
    %3766 = vmatpush1.bf16.msra.mxu0 0
    %3767 = vmatprep.subr.bf16.mxu0 0
    %3768 = vmatpush1.bf16.msra.mxu0 0
    %3769 = vmatprep.subr.bf16.mxu0 %v3743
    %3770 = vmatpush1.bf16.msra.mxu0 %v3742
    %3771 = vmatprep.subr.bf16.mxu0 %v3739
    %3772 = vmatpush1.bf16.msra.mxu0 %v3738
    %3773 = vmatprep.subr.bf16.mxu0 0
    %3774 = vmatpush2.bf16.msra.mxu0 0
    %3775 = vmatprep.subr.bf16.mxu0 0
    %3776 = vmatpush2.bf16.msra.mxu0 0
    %3777 = vmatprep.subr.bf16.mxu0 0
    %3778 = vmatpush2.bf16.msra.mxu0 0
    %3779 = vmatprep.subr.bf16.mxu0 0
    %3780 = vmatpush2.bf16.msra.mxu0 0
    %3781 = vmatprep.subr.bf16.mxu0 0
    %3782 = vmatpush2.bf16.msra.mxu0 0
    %3783 = vmatprep.subr.bf16.mxu0 0
    %3784 = vmatpush2.bf16.msra.mxu0 0
    %3785 = vmatprep.subr.bf16.mxu0 0
    %3786 = vmatpush2.bf16.msra.mxu0 0
    %3787 = vmatprep.subr.bf16.mxu0 0
    %3788 = vmatpush2.bf16.msra.mxu0 0
    %3789 = vmatprep.mubr.bf16.mxu0 0
    %3790 = vmatmul.mubr.bf16.gmra.mxu0 %v3755
    %v3791 = vpop.f32.mrf.mxu0
    %v3792 = vadd.f32 0.0, %v3791
    %v3793 = vpop.f32.mrf.mxu0
    %v3794 = vadd.f32 0.0, %v3793
    %v3795 = vpop.f32.mrf.mxu0
    %v3796 = vadd.f32 0.0, %v3795
    %v3797 = vpop.f32.mrf.mxu0
    %v3798 = vadd.f32 0.0, %v3797
    %3799 = vdwg.mxu0
    %3800 = vmatprep.subr.bf16.mxu0 0
    %3801 = vmatpush1.bf16.msra.mxu0 0
    %3802 = vmatprep.subr.bf16.mxu0 0
    %3803 = vmatpush1.bf16.msra.mxu0 0
    %3804 = vmatprep.subr.bf16.mxu0 0
    %3805 = vmatpush1.bf16.msra.mxu0 0
    %3806 = vmatprep.subr.bf16.mxu0 0
    %3807 = vmatpush1.bf16.msra.mxu0 0
    %3808 = vmatprep.subr.bf16.mxu0 0
    %3809 = vmatpush1.bf16.msra.mxu0 0
    %3810 = vmatprep.subr.bf16.mxu0 0
    %3811 = vmatpush1.bf16.msra.mxu0 0
    %3812 = vmatprep.subr.bf16.mxu0 %v3745
    %3813 = vmatpush1.bf16.msra.mxu0 %v3744
    %3814 = vmatprep.subr.bf16.mxu0 %v3741
    %3815 = vmatpush1.bf16.msra.mxu0 %v3740
    %3816 = vmatprep.subr.bf16.mxu0 0
    %3817 = vmatpush2.bf16.msra.mxu0 0
    %3818 = vmatprep.subr.bf16.mxu0 0
    %3819 = vmatpush2.bf16.msra.mxu0 0
    %3820 = vmatprep.subr.bf16.mxu0 0
    %3821 = vmatpush2.bf16.msra.mxu0 0
    %3822 = vmatprep.subr.bf16.mxu0 0
    %3823 = vmatpush2.bf16.msra.mxu0 0
    %3824 = vmatprep.subr.bf16.mxu0 0
    %3825 = vmatpush2.bf16.msra.mxu0 0
    %3826 = vmatprep.subr.bf16.mxu0 0
    %3827 = vmatpush2.bf16.msra.mxu0 0
    %3828 = vmatprep.subr.bf16.mxu0 0
    %3829 = vmatpush2.bf16.msra.mxu0 0
    %3830 = vmatprep.subr.bf16.mxu0 0
    %3831 = vmatpush2.bf16.msra.mxu0 0
    %3832 = vmatprep.mubr.bf16.mxu0 0
    %3833 = vmatmul.mubr.bf16.gmra.mxu0 %v3755
    %v3834 = vpop.f32.mrf.mxu0
    %v3835 = vadd.f32 0.0, %v3834
    %v3836 = vpop.f32.mrf.mxu0
    %v3837 = vadd.f32 0.0, %v3836
    %v3838 = vpop.f32.mrf.mxu0
    %v3839 = vadd.f32 0.0, %v3838
    %v3840 = vpop.f32.mrf.mxu0
    %v3841 = vadd.f32 0.0, %v3840
    %3842 = vdwg.mxu0
    %v3843 = vadd.f32 %v3628, %v3792
    %v3844 = vadd.f32 %v3629, %v3794
    %v3845 = vadd.f32 %v3630, %v3835
    %v3846 = vadd.f32 %v3631, %v3837
    %v3847 = vadd.f32 %v3632, %v3796
    %v3848 = vadd.f32 %v3633, %v3798
    %v3849 = vadd.f32 %v3634, %v3839
    %v3850 = vadd.f32 %v3635, %v3841
    %v3851 = vld [vmem:[%s1653] ss:$8 sm:$0xf]
    %v3853 = vlaneseq
    %v3854 = vshrl.u32 %v3853, 7
    %v3855 = vsub.s32 0, %v3854
    %v3856 = vrot.slane %v3851, %v3855
    %v3857 = vlaneseq
    %v3858 = vshrl.u32 %v3857, 7
    %v3859 = vsub.s32 1, %v3858
    %v3860 = vrot.slane %v3851, %v3859
    %v3861 = vlaneseq
    %v3862 = vshrl.u32 %v3861, 7
    %v3863 = vsub.s32 2, %v3862
    %v3864 = vrot.slane %v3851, %v3863
    %v3865 = vlaneseq
    %v3866 = vshrl.u32 %v3865, 7
    %v3867 = vsub.s32 3, %v3866
    %v3868 = vrot.slane %v3851, %v3867
    %3869 = vrot.lane.b32.xlu0 %v3856, 16
    %v3870 = vpop.permute.xlu0 %3869
    %3871 = vrot.lane.b32.xlu0 %v3860, 16
    %v3872 = vpop.permute.xlu0 %3871
    %3873 = vrot.lane.b32.xlu0 %v3864, 16
    %v3874 = vpop.permute.xlu0 %3873
    %3875 = vrot.lane.b32.xlu0 %v3868, 16
    %v3876 = vpop.permute.xlu0 %3875
    %v3877 = vsel %vm1680, %v3870, %v3872
    %v3878 = vsel %vm1680, %v3872, %v3874
    %v3879 = vsel %vm1680, %v3874, %v3876
    %v3885 = vmul.f32 %v3401, %v3870
    %v3886 = vmul.f32 %v3402, %v3877
    %v3887 = vmul.f32 %v3403, %v3878
    %v3888 = vmul.f32 %v3404, %v3879
    %v3889 = vmul.f32 %v3405, %v3876
    %v3890 = vmul.f32 %v3406, %v3870
    %v3891 = vmul.f32 %v3407, %v3877
    %v3892 = vmul.f32 %v3408, %v3878
    %v3893 = vmul.f32 %v3409, %v3879
    %v3894 = vmul.f32 %v3410, %v3876
    %v3895 = vmul.f32 %v3411, %v3870
    %v3896 = vmul.f32 %v3412, %v3877
    %v3897 = vmul.f32 %v3413, %v3878
    %v3898 = vmul.f32 %v3414, %v3879
    %v3899 = vmul.f32 %v3415, %v3876
    %v3900 = vmul.f32 %v3416, %v3870
    %v3901 = vmul.f32 %v3417, %v3877
    %v3902 = vmul.f32 %v3418, %v3878
    %v3903 = vmul.f32 %v3419, %v3879
    %v3904 = vmul.f32 %v3420, %v3876
    %s3905 = scalar_lea.vmem %s3, 128
    %v3906 = vld [vmem:[%s3905] sm:$0xf]
    %v3907 = vld [vmem:[%s3905 + $0x4] sm:$0xf]
    %v3908 = vpack.c.bf16 %v3890, %v3885
    %v3909 = vpack.c.bf16 %v3891, %v3886
    %v3910 = vpack.c.bf16 %v3892, %v3887
    %v3911 = vpack.c.bf16 %v3893, %v3888
    %v3912 = vpack.c.bf16 %v3894, %v3889
    %v3913 = vpack.c.bf16 %v3900, %v3895
    %v3914 = vpack.c.bf16 %v3901, %v3896
    %v3915 = vpack.c.bf16 %v3902, %v3897
    %v3916 = vpack.c.bf16 %v3903, %v3898
    %v3917 = vpack.c.bf16 %v3904, %v3899
    %v3920 = vunpack.c.l.b16 %v3906
    %v3921 = vunpack.c.l.b16 %v3907
    %v3922 = vpack.c.b16 %v3921, %v3920
    %3933 = vrot.lane.b32.xlu0 %v3908, 112
    %v3934 = vpop.permute.xlu0 %3933
    %3935 = vrot.lane.b32.xlu0 %v3909, 112
    %v3936 = vpop.permute.xlu0 %3935
    %3937 = vrot.lane.b32.xlu0 %v3910, 112
    %v3938 = vpop.permute.xlu0 %3937
    %3939 = vrot.lane.b32.xlu0 %v3911, 112
    %v3940 = vpop.permute.xlu0 %3939
    %3941 = vrot.lane.b32.xlu0 %v3912, 112
    %v3942 = vpop.permute.xlu0 %3941
    %3943 = vrot.lane.b32.xlu0 %v3913, 112
    %v3944 = vpop.permute.xlu0 %3943
    %3945 = vrot.lane.b32.xlu0 %v3914, 112
    %v3946 = vpop.permute.xlu0 %3945
    %3947 = vrot.lane.b32.xlu0 %v3915, 112
    %v3948 = vpop.permute.xlu0 %3947
    %3949 = vrot.lane.b32.xlu0 %v3916, 112
    %v3950 = vpop.permute.xlu0 %3949
    %3951 = vrot.lane.b32.xlu0 %v3917, 112
    %v3952 = vpop.permute.xlu0 %3951
    %v3953 = vsel %vm1757, %v3934, %v3936
    %v3954 = vsel %vm1757, %v3936, %v3938
    %v3955 = vsel %vm1757, %v3938, %v3940
    %v3956 = vsel %vm1757, %v3940, %v3942
    %v3957 = vsel %vm1757, %v3944, %v3946
    %v3958 = vsel %vm1757, %v3946, %v3948
    %v3959 = vsel %vm1757, %v3948, %v3950
    %v3960 = vsel %vm1757, %v3950, %v3952
    %v3970 = vsel %vm417, %v3922, 0
    %3972 = vmatprep.subr.bf16.mxu0 0
    %3973 = vmatpush1.bf16.msra.mxu0 0
    %3974 = vmatprep.subr.bf16.mxu0 0
    %3975 = vmatpush1.bf16.msra.mxu0 0
    %3976 = vmatprep.subr.bf16.mxu0 0
    %3977 = vmatpush1.bf16.msra.mxu0 0
    %3978 = vmatprep.subr.bf16.mxu0 0
    %3979 = vmatpush1.bf16.msra.mxu0 0
    %3980 = vmatprep.subr.bf16.mxu0 0
    %3981 = vmatpush1.bf16.msra.mxu0 0
    %3982 = vmatprep.subr.bf16.mxu0 0
    %3983 = vmatpush1.bf16.msra.mxu0 0
    %3984 = vmatprep.subr.bf16.mxu0 %v3958
    %3985 = vmatpush1.bf16.msra.mxu0 %v3957
    %3986 = vmatprep.subr.bf16.mxu0 %v3954
    %3987 = vmatpush1.bf16.msra.mxu0 %v3953
    %3988 = vmatprep.subr.bf16.mxu0 0
    %3989 = vmatpush2.bf16.msra.mxu0 0
    %3990 = vmatprep.subr.bf16.mxu0 0
    %3991 = vmatpush2.bf16.msra.mxu0 0
    %3992 = vmatprep.subr.bf16.mxu0 0
    %3993 = vmatpush2.bf16.msra.mxu0 0
    %3994 = vmatprep.subr.bf16.mxu0 0
    %3995 = vmatpush2.bf16.msra.mxu0 0
    %3996 = vmatprep.subr.bf16.mxu0 0
    %3997 = vmatpush2.bf16.msra.mxu0 0
    %3998 = vmatprep.subr.bf16.mxu0 0
    %3999 = vmatpush2.bf16.msra.mxu0 0
    %4000 = vmatprep.subr.bf16.mxu0 0
    %4001 = vmatpush2.bf16.msra.mxu0 0
    %4002 = vmatprep.subr.bf16.mxu0 0
    %4003 = vmatpush2.bf16.msra.mxu0 0
    %4004 = vmatprep.mubr.bf16.mxu0 0
    %4005 = vmatmul.mubr.bf16.gmra.mxu0 %v3970
    %v4006 = vpop.f32.mrf.mxu0
    %v4007 = vadd.f32 0.0, %v4006
    %v4008 = vpop.f32.mrf.mxu0
    %v4009 = vadd.f32 0.0, %v4008
    %v4010 = vpop.f32.mrf.mxu0
    %v4011 = vadd.f32 0.0, %v4010
    %v4012 = vpop.f32.mrf.mxu0
    %v4013 = vadd.f32 0.0, %v4012
    %4014 = vdwg.mxu0
    %4015 = vmatprep.subr.bf16.mxu0 0
    %4016 = vmatpush1.bf16.msra.mxu0 0
    %4017 = vmatprep.subr.bf16.mxu0 0
    %4018 = vmatpush1.bf16.msra.mxu0 0
    %4019 = vmatprep.subr.bf16.mxu0 0
    %4020 = vmatpush1.bf16.msra.mxu0 0
    %4021 = vmatprep.subr.bf16.mxu0 0
    %4022 = vmatpush1.bf16.msra.mxu0 0
    %4023 = vmatprep.subr.bf16.mxu0 0
    %4024 = vmatpush1.bf16.msra.mxu0 0
    %4025 = vmatprep.subr.bf16.mxu0 0
    %4026 = vmatpush1.bf16.msra.mxu0 0
    %4027 = vmatprep.subr.bf16.mxu0 %v3960
    %4028 = vmatpush1.bf16.msra.mxu0 %v3959
    %4029 = vmatprep.subr.bf16.mxu0 %v3956
    %4030 = vmatpush1.bf16.msra.mxu0 %v3955
    %4031 = vmatprep.subr.bf16.mxu0 0
    %4032 = vmatpush2.bf16.msra.mxu0 0
    %4033 = vmatprep.subr.bf16.mxu0 0
    %4034 = vmatpush2.bf16.msra.mxu0 0
    %4035 = vmatprep.subr.bf16.mxu0 0
    %4036 = vmatpush2.bf16.msra.mxu0 0
    %4037 = vmatprep.subr.bf16.mxu0 0
    %4038 = vmatpush2.bf16.msra.mxu0 0
    %4039 = vmatprep.subr.bf16.mxu0 0
    %4040 = vmatpush2.bf16.msra.mxu0 0
    %4041 = vmatprep.subr.bf16.mxu0 0
    %4042 = vmatpush2.bf16.msra.mxu0 0
    %4043 = vmatprep.subr.bf16.mxu0 0
    %4044 = vmatpush2.bf16.msra.mxu0 0
    %4045 = vmatprep.subr.bf16.mxu0 0
    %4046 = vmatpush2.bf16.msra.mxu0 0
    %4047 = vmatprep.mubr.bf16.mxu0 0
    %4048 = vmatmul.mubr.bf16.gmra.mxu0 %v3970
    %v4049 = vpop.f32.mrf.mxu0
    %v4050 = vadd.f32 0.0, %v4049
    %v4051 = vpop.f32.mrf.mxu0
    %v4052 = vadd.f32 0.0, %v4051
    %v4053 = vpop.f32.mrf.mxu0
    %v4054 = vadd.f32 0.0, %v4053
    %v4055 = vpop.f32.mrf.mxu0
    %v4056 = vadd.f32 0.0, %v4055
    %4057 = vdwg.mxu0
    %v4058 = vadd.f32 %v3843, %v4007
    %v4059 = vadd.f32 %v3844, %v4009
    %v4060 = vadd.f32 %v3845, %v4050
    %v4061 = vadd.f32 %v3846, %v4052
    %v4062 = vadd.f32 %v3847, %v4011
    %v4063 = vadd.f32 %v3848, %v4013
    %v4064 = vadd.f32 %v3849, %v4054
    %v4065 = vadd.f32 %v3850, %v4056
    %v4066 = vld [vmem:[%s1871] ss:$8 sm:$0xf]
    %v4068 = vlaneseq
    %v4069 = vshrl.u32 %v4068, 7
    %v4070 = vsub.s32 0, %v4069
    %v4071 = vrot.slane %v4066, %v4070
    %v4072 = vlaneseq
    %v4073 = vshrl.u32 %v4072, 7
    %v4074 = vsub.s32 1, %v4073
    %v4075 = vrot.slane %v4066, %v4074
    %v4076 = vlaneseq
    %v4077 = vshrl.u32 %v4076, 7
    %v4078 = vsub.s32 2, %v4077
    %v4079 = vrot.slane %v4066, %v4078
    %v4080 = vlaneseq
    %v4081 = vshrl.u32 %v4080, 7
    %v4082 = vsub.s32 3, %v4081
    %v4083 = vrot.slane %v4066, %v4082
    %4084 = vrot.lane.b32.xlu0 %v4071, 17
    %v4085 = vpop.permute.xlu0 %4084
    %4086 = vrot.lane.b32.xlu0 %v4075, 17
    %v4087 = vpop.permute.xlu0 %4086
    %4088 = vrot.lane.b32.xlu0 %v4079, 17
    %v4089 = vpop.permute.xlu0 %4088
    %4090 = vrot.lane.b32.xlu0 %v4083, 17
    %v4091 = vpop.permute.xlu0 %4090
    %v4092 = vsel %vm1898, %v4085, %v4087
    %v4093 = vsel %vm1898, %v4087, %v4089
    %v4094 = vsel %vm1898, %v4089, %v4091
    %v4100 = vmul.f32 %v3401, %v4085
    %v4101 = vmul.f32 %v3402, %v4092
    %v4102 = vmul.f32 %v3403, %v4093
    %v4103 = vmul.f32 %v3404, %v4094
    %v4104 = vmul.f32 %v3405, %v4091
    %v4105 = vmul.f32 %v3406, %v4085
    %v4106 = vmul.f32 %v3407, %v4092
    %v4107 = vmul.f32 %v3408, %v4093
    %v4108 = vmul.f32 %v3409, %v4094
    %v4109 = vmul.f32 %v3410, %v4091
    %v4110 = vmul.f32 %v3411, %v4085
    %v4111 = vmul.f32 %v3412, %v4092
    %v4112 = vmul.f32 %v3413, %v4093
    %v4113 = vmul.f32 %v3414, %v4094
    %v4114 = vmul.f32 %v3415, %v4091
    %v4115 = vmul.f32 %v3416, %v4085
    %v4116 = vmul.f32 %v3417, %v4092
    %v4117 = vmul.f32 %v3418, %v4093
    %v4118 = vmul.f32 %v3419, %v4094
    %v4119 = vmul.f32 %v3420, %v4091
    %s4120 = scalar_lea.vmem %s3, 136
    %v4121 = vld [vmem:[%s4120] sm:$0xf]
    %v4122 = vld [vmem:[%s4120 + $0x4] sm:$0xf]
    %v4123 = vpack.c.bf16 %v4105, %v4100
    %v4124 = vpack.c.bf16 %v4106, %v4101
    %v4125 = vpack.c.bf16 %v4107, %v4102
    %v4126 = vpack.c.bf16 %v4108, %v4103
    %v4127 = vpack.c.bf16 %v4109, %v4104
    %v4128 = vpack.c.bf16 %v4115, %v4110
    %v4129 = vpack.c.bf16 %v4116, %v4111
    %v4130 = vpack.c.bf16 %v4117, %v4112
    %v4131 = vpack.c.bf16 %v4118, %v4113
    %v4132 = vpack.c.bf16 %v4119, %v4114
    %v4135 = vunpack.c.l.b16 %v4121
    %v4136 = vunpack.c.l.b16 %v4122
    %v4137 = vpack.c.b16 %v4136, %v4135
    %4148 = vrot.lane.b32.xlu0 %v4123, 111
    %v4149 = vpop.permute.xlu0 %4148
    %4150 = vrot.lane.b32.xlu0 %v4124, 111
    %v4151 = vpop.permute.xlu0 %4150
    %4152 = vrot.lane.b32.xlu0 %v4125, 111
    %v4153 = vpop.permute.xlu0 %4152
    %4154 = vrot.lane.b32.xlu0 %v4126, 111
    %v4155 = vpop.permute.xlu0 %4154
    %4156 = vrot.lane.b32.xlu0 %v4127, 111
    %v4157 = vpop.permute.xlu0 %4156
    %4158 = vrot.lane.b32.xlu0 %v4128, 111
    %v4159 = vpop.permute.xlu0 %4158
    %4160 = vrot.lane.b32.xlu0 %v4129, 111
    %v4161 = vpop.permute.xlu0 %4160
    %4162 = vrot.lane.b32.xlu0 %v4130, 111
    %v4163 = vpop.permute.xlu0 %4162
    %4164 = vrot.lane.b32.xlu0 %v4131, 111
    %v4165 = vpop.permute.xlu0 %4164
    %4166 = vrot.lane.b32.xlu0 %v4132, 111
    %v4167 = vpop.permute.xlu0 %4166
    %v4168 = vsel %vm1975, %v4149, %v4151
    %v4169 = vsel %vm1975, %v4151, %v4153
    %v4170 = vsel %vm1975, %v4153, %v4155
    %v4171 = vsel %vm1975, %v4155, %v4157
    %v4172 = vsel %vm1975, %v4159, %v4161
    %v4173 = vsel %vm1975, %v4161, %v4163
    %v4174 = vsel %vm1975, %v4163, %v4165
    %v4175 = vsel %vm1975, %v4165, %v4167
    %v4185 = vsel %vm417, %v4137, 0
    %4187 = vmatprep.subr.bf16.mxu0 0
    %4188 = vmatpush1.bf16.msra.mxu0 0
    %4189 = vmatprep.subr.bf16.mxu0 0
    %4190 = vmatpush1.bf16.msra.mxu0 0
    %4191 = vmatprep.subr.bf16.mxu0 0
    %4192 = vmatpush1.bf16.msra.mxu0 0
    %4193 = vmatprep.subr.bf16.mxu0 0
    %4194 = vmatpush1.bf16.msra.mxu0 0
    %4195 = vmatprep.subr.bf16.mxu0 0
    %4196 = vmatpush1.bf16.msra.mxu0 0
    %4197 = vmatprep.subr.bf16.mxu0 0
    %4198 = vmatpush1.bf16.msra.mxu0 0
    %4199 = vmatprep.subr.bf16.mxu0 %v4173
    %4200 = vmatpush1.bf16.msra.mxu0 %v4172
    %4201 = vmatprep.subr.bf16.mxu0 %v4169
    %4202 = vmatpush1.bf16.msra.mxu0 %v4168
    %4203 = vmatprep.subr.bf16.mxu0 0
    %4204 = vmatpush2.bf16.msra.mxu0 0
    %4205 = vmatprep.subr.bf16.mxu0 0
    %4206 = vmatpush2.bf16.msra.mxu0 0
    %4207 = vmatprep.subr.bf16.mxu0 0
    %4208 = vmatpush2.bf16.msra.mxu0 0
    %4209 = vmatprep.subr.bf16.mxu0 0
    %4210 = vmatpush2.bf16.msra.mxu0 0
    %4211 = vmatprep.subr.bf16.mxu0 0
    %4212 = vmatpush2.bf16.msra.mxu0 0
    %4213 = vmatprep.subr.bf16.mxu0 0
    %4214 = vmatpush2.bf16.msra.mxu0 0
    %4215 = vmatprep.subr.bf16.mxu0 0
    %4216 = vmatpush2.bf16.msra.mxu0 0
    %4217 = vmatprep.subr.bf16.mxu0 0
    %4218 = vmatpush2.bf16.msra.mxu0 0
    %4219 = vmatprep.mubr.bf16.mxu0 0
    %4220 = vmatmul.mubr.bf16.gmra.mxu0 %v4185
    %v4221 = vpop.f32.mrf.mxu0
    %v4222 = vadd.f32 0.0, %v4221
    %v4223 = vpop.f32.mrf.mxu0
    %v4224 = vadd.f32 0.0, %v4223
    %v4225 = vpop.f32.mrf.mxu0
    %v4226 = vadd.f32 0.0, %v4225
    %v4227 = vpop.f32.mrf.mxu0
    %v4228 = vadd.f32 0.0, %v4227
    %4229 = vdwg.mxu0
    %4230 = vmatprep.subr.bf16.mxu0 0
    %4231 = vmatpush1.bf16.msra.mxu0 0
    %4232 = vmatprep.subr.bf16.mxu0 0
    %4233 = vmatpush1.bf16.msra.mxu0 0
    %4234 = vmatprep.subr.bf16.mxu0 0
    %4235 = vmatpush1.bf16.msra.mxu0 0
    %4236 = vmatprep.subr.bf16.mxu0 0
    %4237 = vmatpush1.bf16.msra.mxu0 0
    %4238 = vmatprep.subr.bf16.mxu0 0
    %4239 = vmatpush1.bf16.msra.mxu0 0
    %4240 = vmatprep.subr.bf16.mxu0 0
    %4241 = vmatpush1.bf16.msra.mxu0 0
    %4242 = vmatprep.subr.bf16.mxu0 %v4175
    %4243 = vmatpush1.bf16.msra.mxu0 %v4174
    %4244 = vmatprep.subr.bf16.mxu0 %v4171
    %4245 = vmatpush1.bf16.msra.mxu0 %v4170
    %4246 = vmatprep.subr.bf16.mxu0 0
    %4247 = vmatpush2.bf16.msra.mxu0 0
    %4248 = vmatprep.subr.bf16.mxu0 0
    %4249 = vmatpush2.bf16.msra.mxu0 0
    %4250 = vmatprep.subr.bf16.mxu0 0
    %4251 = vmatpush2.bf16.msra.mxu0 0
    %4252 = vmatprep.subr.bf16.mxu0 0
    %4253 = vmatpush2.bf16.msra.mxu0 0
    %4254 = vmatprep.subr.bf16.mxu0 0
    %4255 = vmatpush2.bf16.msra.mxu0 0
    %4256 = vmatprep.subr.bf16.mxu0 0
    %4257 = vmatpush2.bf16.msra.mxu0 0
    %4258 = vmatprep.subr.bf16.mxu0 0
    %4259 = vmatpush2.bf16.msra.mxu0 0
    %4260 = vmatprep.subr.bf16.mxu0 0
    %4261 = vmatpush2.bf16.msra.mxu0 0
    %4262 = vmatprep.mubr.bf16.mxu0 0
    %4263 = vmatmul.mubr.bf16.gmra.mxu0 %v4185
    %v4264 = vpop.f32.mrf.mxu0
    %v4265 = vadd.f32 0.0, %v4264
    %v4266 = vpop.f32.mrf.mxu0
    %v4267 = vadd.f32 0.0, %v4266
    %v4268 = vpop.f32.mrf.mxu0
    %v4269 = vadd.f32 0.0, %v4268
    %v4270 = vpop.f32.mrf.mxu0
    %v4271 = vadd.f32 0.0, %v4270
    %4272 = vdwg.mxu0
    %v4273 = vadd.f32 %v4058, %v4222
    %v4274 = vadd.f32 %v4059, %v4224
    %v4275 = vadd.f32 %v4060, %v4265
    %v4276 = vadd.f32 %v4061, %v4267
    %v4277 = vadd.f32 %v4062, %v4226
    %v4278 = vadd.f32 %v4063, %v4228
    %v4279 = vadd.f32 %v4064, %v4269
    %v4280 = vadd.f32 %v4065, %v4271
    %4282 = vset.pattern.permute.xlu0 0
    %4283 = vperm.xlu0 %4282, %v2302
    %v4284 = vpop.permute.xlu0 %4283
    %4287 = vset.pattern.permute.xlu0 0
    %4288 = vperm.xlu0 %4287, %v2303
    %v4289 = vpop.permute.xlu0 %4288
    %v4291 = vadd.f32 %v4273, %v4284
    %v4292 = vadd.f32 %v4274, %v4284
    %v4293 = vadd.f32 %v4275, %v4284
    %v4294 = vadd.f32 %v4276, %v4284
    %v4295 = vadd.f32 %v4277, %v4289
    %v4296 = vadd.f32 %v4278, %v4289
    %v4297 = vadd.f32 %v4279, %v4289
    %v4298 = vadd.f32 %v4280, %v4289
    %v4299 = vmax.f32 %v4291, 0.0
    %v4300 = vmax.f32 %v4292, 0.0
    %v4301 = vmax.f32 %v4293, 0.0
    %v4302 = vmax.f32 %v4294, 0.0
    %v4303 = vmax.f32 %v4295, 0.0
    %v4304 = vmax.f32 %v4296, 0.0
    %v4305 = vmax.f32 %v4297, 0.0
    %v4306 = vmax.f32 %v4298, 0.0
    %v4307 = vld [vmem:[#allocation6] sm:$0xff]
    %v4308 = vld [vmem:[#allocation6 + $0x8] sm:$0xff]
    %v4309 = vld [vmem:[#allocation6 + $0x10] sm:$0xff]
    %v4310 = vld [vmem:[#allocation6 + $0x18] sm:$0xff]
    %v4311 = vld [vmem:[#allocation6 + $0x20] sm:$0xff]
    %v4312 = vld [vmem:[#allocation6 + $0x28] sm:$0xff]
    %v4313 = vld [vmem:[#allocation6 + $0x30] sm:$0xff]
    %v4314 = vld [vmem:[#allocation6 + $0x38] sm:$0xff]
    %v4315 = vld [vmem:[#allocation6 + $0x40] sm:$0xff]
    %v4316 = vld [vmem:[#allocation6 + $0x48] sm:$0xff]
    %v4317 = vld [vmem:[#allocation6 + $0x50] sm:$0xff]
    %v4318 = vld [vmem:[#allocation6 + $0x58] sm:$0xff]
    %v4319 = vld [vmem:[#allocation6 + $0x60] sm:$0xff]
    %v4320 = vld [vmem:[#allocation6 + $0x68] sm:$0xff]
    %v4321 = vld [vmem:[#allocation6 + $0x70] sm:$0xff]
    %v4322 = vld [vmem:[#allocation6 + $0x78] sm:$0xff]
    %s4323 = scalar_lea.vmem %s4, 16
    %v4324 = vld [vmem:[%s4323] sm:$0xf]
    %v4325 = vld [vmem:[%s4323 + $0x4] sm:$0xf]
    %v4326 = vld [vmem:[%s4323 + $0x8] sm:$0xf]
    %v4327 = vld [vmem:[%s4323 + $0xc] sm:$0xf]
    %v4328 = vpack.c.bf16 %v4303, %v4299
    %v4329 = vpack.c.bf16 %v4304, %v4300
    %v4330 = vpack.c.bf16 %v4305, %v4301
    %v4331 = vpack.c.bf16 %v4306, %v4302
    %v4336 = vunpack.c.l.b16 %v4324
    %v4337 = vunpack.c.l.b16 %v4325
    %v4338 = vunpack.c.l.b16 %v4326
    %v4339 = vunpack.c.l.b16 %v4327
    %v4340 = vpack.c.b16 %v4337, %v4336
    %v4341 = vpack.c.b16 %v4339, %v4338
    %v4343 = vsel %vm1680, %v4340, 0
    %v4346 = vsel %vm1680, %v4341, 0
    %4348 = vmatprep.subr.bf16.mxu0 0
    %4349 = vmatpush1.bf16.msra.mxu0 0
    %4350 = vmatprep.subr.bf16.mxu0 0
    %4351 = vmatpush1.bf16.msra.mxu0 0
    %4352 = vmatprep.subr.bf16.mxu0 0
    %4353 = vmatpush1.bf16.msra.mxu0 0
    %4354 = vmatprep.subr.bf16.mxu0 0
    %4355 = vmatpush1.bf16.msra.mxu0 0
    %4356 = vmatprep.subr.bf16.mxu0 0
    %4357 = vmatpush1.bf16.msra.mxu0 0
    %4358 = vmatprep.subr.bf16.mxu0 0
    %4359 = vmatpush1.bf16.msra.mxu0 0
    %4360 = vmatprep.subr.bf16.mxu0 0
    %4361 = vmatpush1.bf16.msra.mxu0 0
    %4362 = vmatprep.subr.bf16.mxu0 %v4329
    %4363 = vmatpush1.bf16.msra.mxu0 %v4328
    %4364 = vmatprep.subr.bf16.mxu0 0
    %4365 = vmatpush2.bf16.msra.mxu0 0
    %4366 = vmatprep.subr.bf16.mxu0 0
    %4367 = vmatpush2.bf16.msra.mxu0 0
    %4368 = vmatprep.subr.bf16.mxu0 0
    %4369 = vmatpush2.bf16.msra.mxu0 0
    %4370 = vmatprep.subr.bf16.mxu0 0
    %4371 = vmatpush2.bf16.msra.mxu0 0
    %4372 = vmatprep.subr.bf16.mxu0 0
    %4373 = vmatpush2.bf16.msra.mxu0 0
    %4374 = vmatprep.subr.bf16.mxu0 0
    %4375 = vmatpush2.bf16.msra.mxu0 0
    %4376 = vmatprep.subr.bf16.mxu0 0
    %4377 = vmatpush2.bf16.msra.mxu0 0
    %4378 = vmatprep.subr.bf16.mxu0 0
    %4379 = vmatpush2.bf16.msra.mxu0 0
    %4380 = vmatprep.mubr.bf16.mxu0 0
    %4381 = vmatmul.mubr.bf16.gmra.mxu0 %v4343
    %v4382 = vpop.f32.mrf.mxu0
    %v4383 = vadd.f32 0.0, %v4382
    %v4384 = vpop.f32.mrf.mxu0
    %v4385 = vadd.f32 0.0, %v4384
    %v4386 = vpop.f32.mrf.mxu0
    %v4387 = vadd.f32 0.0, %v4386
    %v4388 = vpop.f32.mrf.mxu0
    %v4389 = vadd.f32 0.0, %v4388
    %4390 = vmatprep.mubr.bf16.mxu0 0
    %4391 = vmatmul.mubr.bf16.gmra.mxu0 %v4346
    %v4392 = vpop.f32.mrf.mxu0
    %v4393 = vadd.f32 0.0, %v4392
    %v4394 = vpop.f32.mrf.mxu0
    %v4395 = vadd.f32 0.0, %v4394
    %v4396 = vpop.f32.mrf.mxu0
    %v4397 = vadd.f32 0.0, %v4396
    %v4398 = vpop.f32.mrf.mxu0
    %v4399 = vadd.f32 0.0, %v4398
    %4400 = vdwg.mxu0
    %4401 = vmatprep.subr.bf16.mxu0 0
    %4402 = vmatpush1.bf16.msra.mxu0 0
    %4403 = vmatprep.subr.bf16.mxu0 0
    %4404 = vmatpush1.bf16.msra.mxu0 0
    %4405 = vmatprep.subr.bf16.mxu0 0
    %4406 = vmatpush1.bf16.msra.mxu0 0
    %4407 = vmatprep.subr.bf16.mxu0 0
    %4408 = vmatpush1.bf16.msra.mxu0 0
    %4409 = vmatprep.subr.bf16.mxu0 0
    %4410 = vmatpush1.bf16.msra.mxu0 0
    %4411 = vmatprep.subr.bf16.mxu0 0
    %4412 = vmatpush1.bf16.msra.mxu0 0
    %4413 = vmatprep.subr.bf16.mxu0 0
    %4414 = vmatpush1.bf16.msra.mxu0 0
    %4415 = vmatprep.subr.bf16.mxu0 %v4331
    %4416 = vmatpush1.bf16.msra.mxu0 %v4330
    %4417 = vmatprep.subr.bf16.mxu0 0
    %4418 = vmatpush2.bf16.msra.mxu0 0
    %4419 = vmatprep.subr.bf16.mxu0 0
    %4420 = vmatpush2.bf16.msra.mxu0 0
    %4421 = vmatprep.subr.bf16.mxu0 0
    %4422 = vmatpush2.bf16.msra.mxu0 0
    %4423 = vmatprep.subr.bf16.mxu0 0
    %4424 = vmatpush2.bf16.msra.mxu0 0
    %4425 = vmatprep.subr.bf16.mxu0 0
    %4426 = vmatpush2.bf16.msra.mxu0 0
    %4427 = vmatprep.subr.bf16.mxu0 0
    %4428 = vmatpush2.bf16.msra.mxu0 0
    %4429 = vmatprep.subr.bf16.mxu0 0
    %4430 = vmatpush2.bf16.msra.mxu0 0
    %4431 = vmatprep.subr.bf16.mxu0 0
    %4432 = vmatpush2.bf16.msra.mxu0 0
    %4433 = vmatprep.mubr.bf16.mxu0 0
    %4434 = vmatmul.mubr.bf16.gmra.mxu0 %v4343
    %v4435 = vpop.f32.mrf.mxu0
    %v4436 = vadd.f32 0.0, %v4435
    %v4437 = vpop.f32.mrf.mxu0
    %v4438 = vadd.f32 0.0, %v4437
    %v4439 = vpop.f32.mrf.mxu0
    %v4440 = vadd.f32 0.0, %v4439
    %v4441 = vpop.f32.mrf.mxu0
    %v4442 = vadd.f32 0.0, %v4441
    %4443 = vmatprep.mubr.bf16.mxu0 0
    %4444 = vmatmul.mubr.bf16.gmra.mxu0 %v4346
    %v4445 = vpop.f32.mrf.mxu0
    %v4446 = vadd.f32 0.0, %v4445
    %v4447 = vpop.f32.mrf.mxu0
    %v4448 = vadd.f32 0.0, %v4447
    %v4449 = vpop.f32.mrf.mxu0
    %v4450 = vadd.f32 0.0, %v4449
    %v4451 = vpop.f32.mrf.mxu0
    %v4452 = vadd.f32 0.0, %v4451
    %4453 = vdwg.mxu0
    %v4454 = vadd.f32 %v4307, %v4383
    %v4455 = vadd.f32 %v4308, %v4385
    %v4456 = vadd.f32 %v4309, %v4436
    %v4457 = vadd.f32 %v4310, %v4438
    %v4458 = vadd.f32 %v4311, %v4387
    %v4459 = vadd.f32 %v4312, %v4389
    %v4460 = vadd.f32 %v4313, %v4440
    %v4461 = vadd.f32 %v4314, %v4442
    %v4462 = vadd.f32 %v4315, %v4393
    %v4463 = vadd.f32 %v4316, %v4395
    %v4464 = vadd.f32 %v4317, %v4446
    %v4465 = vadd.f32 %v4318, %v4448
    %v4466 = vadd.f32 %v4319, %v4397
    %v4467 = vadd.f32 %v4320, %v4399
    %v4468 = vadd.f32 %v4321, %v4450
    %v4469 = vadd.f32 %v4322, %v4452
    %4470 = vst [vmem:[#allocation6] sm:$0xff] %v4454
    %4471 = vst [vmem:[#allocation6 + $0x8] sm:$0xff] %v4455
    %4472 = vst [vmem:[#allocation6 + $0x10] sm:$0xff] %v4456
    %4473 = vst [vmem:[#allocation6 + $0x18] sm:$0xff] %v4457
    %4474 = vst [vmem:[#allocation6 + $0x20] sm:$0xff] %v4458
    %4475 = vst [vmem:[#allocation6 + $0x28] sm:$0xff] %v4459
    %4476 = vst [vmem:[#allocation6 + $0x30] sm:$0xff] %v4460
    %4477 = vst [vmem:[#allocation6 + $0x38] sm:$0xff] %v4461
    %4478 = vst [vmem:[#allocation6 + $0x40] sm:$0xff] %v4462
    %4479 = vst [vmem:[#allocation6 + $0x48] sm:$0xff] %v4463
    %4480 = vst [vmem:[#allocation6 + $0x50] sm:$0xff] %v4464
    %4481 = vst [vmem:[#allocation6 + $0x58] sm:$0xff] %v4465
    %4482 = vst [vmem:[#allocation6 + $0x60] sm:$0xff] %v4466
    %4483 = vst [vmem:[#allocation6 + $0x68] sm:$0xff] %v4467
    %4484 = vst [vmem:[#allocation6 + $0x70] sm:$0xff] %v4468
    %4485 = vst [vmem:[#allocation6 + $0x78] sm:$0xff] %v4469
    %v4486 = vld [vmem:[%s5] sm:$0xff]
    %v4487 = vld [vmem:[%s5 + $0x8] sm:$0xff]
    %v4488 = vld [vmem:[%s5 + $0x10] sm:$0xff]
    %v4489 = vld [vmem:[%s5 + $0x18] sm:$0xff]
    %v4490 = vld [vmem:[%s5 + $0x20] sm:$0xff]
    %v4491 = vld [vmem:[%s5 + $0x28] sm:$0xff]
    %v4492 = vld [vmem:[%s5 + $0x30] sm:$0xff]
    %v4493 = vld [vmem:[%s5 + $0x38] sm:$0xff]
    %v4494 = vld [vmem:[#allocation6] sm:$0xff]
    %v4495 = vld [vmem:[#allocation6 + $0x8] sm:$0xff]
    %v4496 = vld [vmem:[#allocation6 + $0x10] sm:$0xff]
    %v4497 = vld [vmem:[#allocation6 + $0x18] sm:$0xff]
    %v4498 = vld [vmem:[#allocation6 + $0x20] sm:$0xff]
    %v4499 = vld [vmem:[#allocation6 + $0x28] sm:$0xff]
    %v4500 = vld [vmem:[#allocation6 + $0x30] sm:$0xff]
    %v4501 = vld [vmem:[#allocation6 + $0x38] sm:$0xff]
    %v4502 = vld [vmem:[#allocation6 + $0x40] sm:$0xff]
    %v4503 = vld [vmem:[#allocation6 + $0x48] sm:$0xff]
    %v4504 = vld [vmem:[#allocation6 + $0x50] sm:$0xff]
    %v4505 = vld [vmem:[#allocation6 + $0x58] sm:$0xff]
    %v4506 = vld [vmem:[#allocation6 + $0x60] sm:$0xff]
    %v4507 = vld [vmem:[#allocation6 + $0x68] sm:$0xff]
    %v4508 = vld [vmem:[#allocation6 + $0x70] sm:$0xff]
    %v4509 = vld [vmem:[#allocation6 + $0x78] sm:$0xff]
    %4511 = vset.pattern.permute.xlu0 0
    %4512 = vperm.xlu0 %4511, %v4486
    %v4513 = vpop.permute.xlu0 %4512
    %4516 = vset.pattern.permute.xlu0 0
    %4517 = vperm.xlu0 %4516, %v4487
    %v4518 = vpop.permute.xlu0 %4517
    %4521 = vset.pattern.permute.xlu0 0
    %4522 = vperm.xlu0 %4521, %v4488
    %v4523 = vpop.permute.xlu0 %4522
    %4526 = vset.pattern.permute.xlu0 0
    %4527 = vperm.xlu0 %4526, %v4489
    %v4528 = vpop.permute.xlu0 %4527
    %v4530 = vmul.f32 %v4494, %v4513
    %v4531 = vmul.f32 %v4495, %v4513
    %v4532 = vmul.f32 %v4496, %v4513
    %v4533 = vmul.f32 %v4497, %v4513
    %v4534 = vmul.f32 %v4498, %v4518
    %v4535 = vmul.f32 %v4499, %v4518
    %v4536 = vmul.f32 %v4500, %v4518
    %v4537 = vmul.f32 %v4501, %v4518
    %v4538 = vmul.f32 %v4502, %v4523
    %v4539 = vmul.f32 %v4503, %v4523
    %v4540 = vmul.f32 %v4504, %v4523
    %v4541 = vmul.f32 %v4505, %v4523
    %v4542 = vmul.f32 %v4506, %v4528
    %v4543 = vmul.f32 %v4507, %v4528
    %v4544 = vmul.f32 %v4508, %v4528
    %v4545 = vmul.f32 %v4509, %v4528
    %4547 = vset.pattern.permute.xlu0 0
    %4548 = vperm.xlu0 %4547, %v4490
    %v4549 = vpop.permute.xlu0 %4548
    %4552 = vset.pattern.permute.xlu0 0
    %4553 = vperm.xlu0 %4552, %v4491
    %v4554 = vpop.permute.xlu0 %4553
    %4557 = vset.pattern.permute.xlu0 0
    %4558 = vperm.xlu0 %4557, %v4492
    %v4559 = vpop.permute.xlu0 %4558
    %4562 = vset.pattern.permute.xlu0 0
    %4563 = vperm.xlu0 %4562, %v4493
    %v4564 = vpop.permute.xlu0 %4563
    %v4566 = vadd.f32 %v4530, %v4549
    %v4567 = vadd.f32 %v4531, %v4549
    %v4568 = vadd.f32 %v4532, %v4549
    %v4569 = vadd.f32 %v4533, %v4549
    %v4570 = vadd.f32 %v4534, %v4554
    %v4571 = vadd.f32 %v4535, %v4554
    %v4572 = vadd.f32 %v4536, %v4554
    %v4573 = vadd.f32 %v4537, %v4554
    %v4574 = vadd.f32 %v4538, %v4559
    %v4575 = vadd.f32 %v4539, %v4559
    %v4576 = vadd.f32 %v4540, %v4559
    %v4577 = vadd.f32 %v4541, %v4559
    %v4578 = vadd.f32 %v4542, %v4564
    %v4579 = vadd.f32 %v4543, %v4564
    %v4580 = vadd.f32 %v4544, %v4564
    %v4581 = vadd.f32 %v4545, %v4564
    %v4582 = vmax.f32 %v4566, 0.0
    %v4583 = vmax.f32 %v4567, 0.0
    %v4584 = vmax.f32 %v4568, 0.0
    %v4585 = vmax.f32 %v4569, 0.0
    %v4586 = vmax.f32 %v4570, 0.0
    %v4587 = vmax.f32 %v4571, 0.0
    %v4588 = vmax.f32 %v4572, 0.0
    %v4589 = vmax.f32 %v4573, 0.0
    %v4590 = vmax.f32 %v4574, 0.0
    %v4591 = vmax.f32 %v4575, 0.0
    %v4592 = vmax.f32 %v4576, 0.0
    %v4593 = vmax.f32 %v4577, 0.0
    %v4594 = vmax.f32 %v4578, 0.0
    %v4595 = vmax.f32 %v4579, 0.0
    %v4596 = vmax.f32 %v4580, 0.0
    %v4597 = vmax.f32 %v4581, 0.0
    %4598 = vst [vmem:[#allocation6] sm:$0xff] %v4582
    %4599 = vst [vmem:[#allocation6 + $0x8] sm:$0xff] %v4583
    %4600 = vst [vmem:[#allocation6 + $0x10] sm:$0xff] %v4584
    %4601 = vst [vmem:[#allocation6 + $0x18] sm:$0xff] %v4585
    %4602 = vst [vmem:[#allocation6 + $0x20] sm:$0xff] %v4586
    %4603 = vst [vmem:[#allocation6 + $0x28] sm:$0xff] %v4587
    %4604 = vst [vmem:[#allocation6 + $0x30] sm:$0xff] %v4588
    %4605 = vst [vmem:[#allocation6 + $0x38] sm:$0xff] %v4589
    %4606 = vst [vmem:[#allocation6 + $0x40] sm:$0xff] %v4590
    %4607 = vst [vmem:[#allocation6 + $0x48] sm:$0xff] %v4591
    %4608 = vst [vmem:[#allocation6 + $0x50] sm:$0xff] %v4592
    %4609 = vst [vmem:[#allocation6 + $0x58] sm:$0xff] %v4593
    %4610 = vst [vmem:[#allocation6 + $0x60] sm:$0xff] %v4594
    %4611 = vst [vmem:[#allocation6 + $0x68] sm:$0xff] %v4595
    %4612 = vst [vmem:[#allocation6 + $0x70] sm:$0xff] %v4596
    %4613 = vst [vmem:[#allocation6 + $0x78] sm:$0xff] %v4597
    // Predicated region
    $region30: #{tpu_custom_call.1} parent=1 // pred_check
      _
    $region31: #{tpu_custom_call.1} parent=1 // pred_check_branch
      %4615 = sbr.rel (0) target = $region33
    $region32: #{tpu_custom_call.1} parent=1 // pred_region
      %s4617 = ssub.s32 2048, 2048
      %4618 = vsyncadd [#allocation5], %s4617
      %s4619 = sshll.u32 [#allocation6], 4
      %s4620 = int_to_ptr.vmem [resolvable:$true] %s4619
      %4625 = dma.vmem_to_hbm [thread:$0]  %s4620, 2048, %s6, [#allocation5], 512, 512, 32
    $region33: #{tpu_custom_call.1} parent=1 // pred_fallthru
      _
    // Predicated region
    $region34: #{tpu_custom_call.1} parent=1 // pred_check
      _
    $region35: #{tpu_custom_call.1} parent=1 // pred_check_branch
      %4627 = sbr.rel (0) target = $region37
    $region36: #{tpu_custom_call.1} parent=1 // pred_region
      %4628 = dma.done [#allocation5], 2048
    $region37: #{tpu_custom_call.1} parent=1 // pred_fallthru
      _
    %4629 = vsyncpa [#allocation4], 1
    %4630 = vsyncpa [#allocation5], 1

</llo_original>
